<compile_context>
chip_gen: v7x
topology: tpu7x:2x2x1
jax: 0.10.0
libtpu: 0.0.40
codegen_flags: <defaults>
</compile_context>

<pallas_src>
import math
import functools

import jax
import jax.numpy as jnp
from jax.experimental import pallas as pl
from jax.experimental.pallas import tpu as pltpu


# Model hyper-parameters (TransformerSeg_v0 defaults)
D_MODEL = 128
D_FF = 64
NUM_LAYERS = 4
IN_FEATURES = 4
OUT_FEATURES = 3
DEC_HIDDEN = 64
LN_EPS = 1e-6

# Lane-dense padding for the decoder (hidden and output dims)
DEC_PAD = 128   # padded decoder hidden dim (zero cols/rows, exact semantics)
OUT_PAD = 128   # padded decoder output dim (only cols 0..2 are real)


# ---------------------------------------------------------------------------
# Fused forward kernel (everything VMEM-resident, single invocation)
# ---------------------------------------------------------------------------

def _ln_normalize(x, eps, d):
    # Annotated-Transformer LayerNorm core: unbiased std (n-1), eps on std.
    # The affine (gamma/beta) is folded into the following linear at pack time.
    mean = jnp.mean(x, axis=-1, keepdims=True)
    xc = x - mean
    var = jnp.sum(xc * xc, axis=-1, keepdims=True) * (1.0 / (d - 1))
    std = jnp.sqrt(var)
    return xc / (std + eps)


def _fused_forward_kernel(
    x_ref, bias_ref,
    emb_w_ref, emb_b_ref,
    wqkv_ref, bqkv_ref, wo_ref, bo_ref,
    w1_ref, b1_ref, w2_ref, b2_ref,
    dec_w1_ref, dec_b1_ref, dec_w2_ref, dec_b2_ref,
    o_ref,
    *, num_layers, in_features, d_model, eps):
    mm = jnp.bfloat16   # MXU input dtype; accumulation stays f32
    f32 = jnp.float32

    # ---- LinearEmbedding as 4 VPU FMAs (sqrt(d_model) scale pre-folded) ----
    x = x_ref[...]                                            # (N, in_features) f32
    h = emb_b_ref[...] + x[:, 0:1] * emb_w_ref[0:1, :]
    for f in range(1, in_features):                           # unrolled (4)
        h = h + x[:, f:f + 1] * emb_w_ref[f:f + 1, :]

    # Precomputed additive attention bias: 0 where (same sequence & key valid),
    # -1e9 otherwise.  Encodes the padding mask AND the block-diagonal.
    attn_bias = bias_ref[...]                                 # (N, N) f32

    for l in range(num_layers):                               # unrolled (L=4)
        # -------- self-attention sublayer (pre-norm residual) --------
        xn = _ln_normalize(h, eps, d_model)                   # LN affine folded in wqkv
        qkv = jnp.dot(xn.astype(mm), wqkv_ref[l],
                      preferred_element_type=f32) + bqkv_ref[l]
        q = qkv[:, :d_model].astype(mm)                       # attn_scale folded in
        k = qkv[:, d_model:2 * d_model].astype(mm)
        v = qkv[:, 2 * d_model:].astype(mm)

        # block-diagonal attention over all N rows: (N,128)@(128,N) on the MXU
        scores = jax.lax.dot_general(
            q, k, dimension_numbers=(((1,), (1,)), ((), ())),
            preferred_element_type=f32)                       # (N, N) f32
        scores = scores + attn_bias
        scores = scores - jnp.max(scores, axis=-1, keepdims=True)
        p = jnp.exp(scores)
        p = p * pl.reciprocal(jnp.sum(p, axis=-1, keepdims=True), approx=True)
        a = jnp.dot(p.astype(mm), v, preferred_element_type=f32)   # (N, 128)

        # output projection fused with the residual add (dropout(0.01) = id)
        h = h + jnp.dot(a.astype(mm), wo_ref[l],
                        preferred_element_type=f32) + bo_ref[l]

        # -------- position-wise FFN sublayer (pre-norm residual) --------
        xn = _ln_normalize(h, eps, d_model)                   # LN affine folded in w1
        ff = jnp.dot(xn.astype(mm), w1_ref[l],
                     preferred_element_type=f32) + b1_ref[l]
        ff = jnp.maximum(ff, 0.0)                 # 64-wide intermediate stays in vregs
        h = h + jnp.dot(ff.astype(mm), w2_ref[l],
                        preferred_element_type=f32) + b2_ref[l]

    # ---- encoder final LayerNorm (affine folded into dec_w1/dec_b1) ----
    h = _ln_normalize(h, eps, d_model)

    # ---- MLP_Decoder: Linear -> ReLU -> Linear (hidden/output lane-padded) ----
    dh = jnp.dot(h.astype(mm), dec_w1_ref[...],
                 preferred_element_type=f32) + dec_b1_ref[...]
    dh = jnp.maximum(dh, 0.0)
    y = jnp.dot(dh.astype(mm), dec_w2_ref[...],
                preferred_element_type=f32) + dec_b2_ref[...]
    o_ref[...] = y.astype(o_ref.dtype)


# ---------------------------------------------------------------------------
# Parameter initialization (deterministic, synthetic) + packing for the kernel
# ---------------------------------------------------------------------------

def init_params(key, d_model=D_MODEL, d_ff=D_FF, num_layers=NUM_LAYERS,
                in_features=IN_FEATURES, out_features=OUT_FEATURES,
                dec_hidden=DEC_HIDDEN):
    def w(key, shape, s=0.02):
        return (s * jax.random.normal(key, shape)).astype(jnp.float32)

    keys = iter(jax.random.split(key, 8 + 16 * num_layers))
    p = {
        "emb_w": w(next(keys), (in_features, d_model)),
        "emb_b": jnp.zeros((d_model,), jnp.float32),
        "norm_g": jnp.ones((d_model,), jnp.float32),
        "norm_b": jnp.zeros((d_model,), jnp.float32),
        "dec_w1": w(next(keys), (d_model, dec_hidden)),
        "dec_b1": jnp.zeros((dec_hidden,), jnp.float32),
        "dec_w2": w(next(keys), (dec_hidden, out_features)),
        "dec_b2": jnp.zeros((out_features,), jnp.float32),
        "layers": [],
    }
    for _ in range(num_layers):
        lp = {
            "ln1_g": jnp.ones((d_model,), jnp.float32),
            "ln1_b": jnp.zeros((d_model,), jnp.float32),
            "wq": w(next(keys), (d_model, d_model)), "bq": jnp.zeros((d_model,), jnp.float32),
            "wk": w(next(keys), (d_model, d_model)), "bk": jnp.zeros((d_model,), jnp.float32),
            "wv": w(next(keys), (d_model, d_model)), "bv": jnp.zeros((d_model,), jnp.float32),
            "wo": w(next(keys), (d_model, d_model)), "bo": jnp.zeros((d_model,), jnp.float32),
            "ln2_g": jnp.ones((d_model,), jnp.float32),
            "ln2_b": jnp.zeros((d_model,), jnp.float32),
            "w1": w(next(keys), (d_model, d_ff)), "b1": jnp.zeros((d_ff,), jnp.float32),
            "w2": w(next(keys), (d_ff, d_model)), "b2": jnp.zeros((d_model,), jnp.float32),
        }
        p["layers"].append(lp)
    return p


def pack_params(params):
    """Stack per-layer params, fuse wq|wk|wv, fold the sqrt(d_model) embedding
    scale, the attention scale, and every LayerNorm affine into the adjacent
    linears, pad the decoder to lane-dense shapes, and cast MXU weights to
    bf16 (biases stay f32).  Done once, reused per call."""
    d_model = params["emb_w"].shape[1]
    emb_scale = math.sqrt(d_model)
    attn_scale = 1.0 / math.sqrt(d_model)
    f32, bf16 = jnp.float32, jnp.bfloat16
    L = params["layers"]

    packed = {
        # embedding stays f32: it is applied as VPU FMAs, not on the MXU
        "emb_w": (params["emb_w"] * emb_scale).astype(f32),
        "emb_b": (params["emb_b"] * emb_scale).reshape(1, d_model).astype(f32),
    }

    wqkv_l, bqkv_l, wo_l, bo_l, w1_l, b1_l, w2_l, b2_l = ([] for _ in range(8))
    for lp in L:
        # fuse Q|K|V, with attn_scale folded into the Q columns
        wqkv = jnp.concatenate([lp["wq"] * attn_scale, lp["wk"], lp["wv"]], axis=1)
        bqkv = jnp.concatenate([lp["bq"] * attn_scale, lp["bk"], lp["bv"]])
        # fold ln1 affine: y@W + b = z@(diag(g)W) + (beta@W + b)
        wqkv_l.append(lp["ln1_g"][:, None] * wqkv)
        bqkv_l.append(lp["ln1_b"] @ wqkv + bqkv)
        wo_l.append(lp["wo"])
        bo_l.append(lp["bo"])
        # fold ln2 affine into the first FFN linear
        w1_l.append(lp["ln2_g"][:, None] * lp["w1"])
        b1_l.append(lp["ln2_b"] @ lp["w1"] + lp["b1"])
        w2_l.append(lp["w2"])
        b2_l.append(lp["b2"])

    packed.update({
        "wqkv": jnp.stack(wqkv_l).astype(bf16),                 # (L, 128, 384)
        "bqkv": jnp.stack(bqkv_l)[:, None, :].astype(f32),      # (L, 1, 384)
        "wo": jnp.stack(wo_l).astype(bf16),                     # (L, 128, 128)
        "bo": jnp.stack(bo_l)[:, None, :].astype(f32),
        "w1": jnp.stack(w1_l).astype(bf16),                     # (L, 128, 64)
        "b1": jnp.stack(b1_l)[:, None, :].astype(f32),
        "w2": jnp.stack(w2_l).astype(bf16),                     # (L, 64, 128)
        "b2": jnp.stack(b2_l)[:, None, :].astype(f32),
    })

    # decoder: fold final-norm affine into dec_w1/dec_b1, pad hidden 64->128
    # (zero cols / zero rows -> exact) and output 3->128 (lane-dense store).
    dec_w1_f = params["norm_g"][:, None] * params["dec_w1"]              # (128, 64)
    dec_b1_f = params["norm_b"] @ params["dec_w1"] + params["dec_b1"]    # (64,)
    dec_w1_p = jnp.zeros((d_model, DEC_PAD), f32).at[:, :DEC_HIDDEN].set(dec_w1_f)
    dec_b1_p = jnp.zeros((1, DEC_PAD), f32).at[0, :DEC_HIDDEN].set(dec_b1_f)
    dec_w2_p = jnp.zeros((DEC_PAD, OUT_PAD), f32).at[:DEC_HIDDEN, :OUT_FEATURES].set(
        params["dec_w2"])
    dec_b2_p = jnp.zeros((1, OUT_PAD), f32).at[0, :OUT_FEATURES].set(params["dec_b2"])
    packed.update({
        "dec_w1": dec_w1_p.astype(bf16), "dec_b1": dec_b1_p,
        "dec_w2": dec_w2_p.astype(bf16), "dec_b2": dec_b2_p,
    })
    return packed


# ---------------------------------------------------------------------------
# Forward wrapper: one fused pallas_call
# ---------------------------------------------------------------------------

def transformer_seg_forward(packed, x, mask):
    B, S, F = x.shape
    N = B * S
    d_model = D_MODEL

    x2 = x.reshape(N, F).astype(jnp.float32)

    # Block-diagonal additive attention bias over all N = B*S rows:
    #   0     where query & key belong to the same sequence and key is valid
    #   -1e9  otherwise (cross-batch or masked key)
    key_valid = mask[:, 0, :].reshape(N) != 0
    rows = jnp.arange(N) // S
    same_seq = rows[:, None] == rows[None, :]
    attn_bias = jnp.where(same_seq & key_valid[None, :], 0.0, -1e9).astype(jnp.float32)

    args = (x2, attn_bias,
            packed["emb_w"], packed["emb_b"],
            packed["wqkv"], packed["bqkv"], packed["wo"], packed["bo"],
            packed["w1"], packed["b1"], packed["w2"], packed["b2"],
            packed["dec_w1"], packed["dec_b1"], packed["dec_w2"], packed["dec_b2"])

    # Advisory cost estimate for XLA scheduling around the fused custom call.
    flops = 2 * N * F * d_model                               # embedding FMAs
    flops += NUM_LAYERS * (2 * N * d_model * 3 * d_model      # fused QKV
                           + 2 * 2 * N * N * d_model          # QK^T + PV
                           + 2 * N * d_model * d_model        # output proj
                           + 2 * 2 * N * d_model * D_FF)      # FFN
    flops += 2 * N * d_model * DEC_PAD + 2 * N * DEC_PAD * OUT_PAD
    transcendentals = NUM_LAYERS * N * N                      # softmax exp
    bytes_accessed = sum(int(a.size) * int(a.dtype.itemsize) for a in args) \
        + N * OUT_PAD * 4
    cost = pl.CostEstimate(flops=int(flops),
                           transcendentals=int(transcendentals),
                           bytes_accessed=int(bytes_accessed))

    kernel = functools.partial(
        _fused_forward_kernel,
        num_layers=NUM_LAYERS, in_features=F, d_model=d_model, eps=LN_EPS)

    vmem_spec = pl.BlockSpec(memory_space=pltpu.MemorySpace.VMEM)
    # TODO(synk): for large B*S add a row grid with dimension_semantics=("parallel",)
    # and constant-index weight BlockSpecs so v7x's 2nd TensorCore is used and
    # weights are DMA'd once; at B*S=16 a single invocation is strictly faster.
    out = pl.pallas_call(
        kernel,
        out_shape=jax.ShapeDtypeStruct((N, OUT_PAD), jnp.float32),
        in_specs=[vmem_spec] * len(args),
        out_specs=vmem_spec,
        cost_estimate=cost,
    )(*args)

    return out[:, :OUT_FEATURES].reshape(B, S, OUT_FEATURES)


# ---------------------------------------------------------------------------

if __name__ == "__main__":
    B, S = 2, 8

    key = jax.random.PRNGKey(0)
    k_param, k_x = jax.random.split(key)

    params = init_params(k_param)
    packed = pack_params(params)

    x = jax.random.normal(k_x, (B, S, IN_FEATURES), dtype=jnp.float32)
    mask = jnp.ones((B, 1, S), dtype=jnp.float32)   # all positions attendable

    forward = jax.jit(transformer_seg_forward)
    y = forward(packed, x, mask)
    y = jax.block_until_ready(y)

    assert y.shape == (B, S, OUT_FEATURES), y.shape
    assert jnp.all(jnp.isfinite(y))
    print("KERNEL_OK")
</pallas_src>

<mosaic_0001>
module attributes {stable_mosaic.version = 11 : i64} {
  func.func @_fused_forward_kernel(%arg0: memref<16x4xf32, #tpu.memory_space<vmem>>, %arg1: memref<16x16xf32, #tpu.memory_space<vmem>>, %arg2: memref<4x128xf32, #tpu.memory_space<vmem>>, %arg3: memref<1x128xf32, #tpu.memory_space<vmem>>, %arg4: memref<4x128x384xbf16, #tpu.memory_space<vmem>>, %arg5: memref<4x1x384xf32, #tpu.memory_space<vmem>>, %arg6: memref<4x128x128xbf16, #tpu.memory_space<vmem>>, %arg7: memref<4x1x128xf32, #tpu.memory_space<vmem>>, %arg8: memref<4x128x64xbf16, #tpu.memory_space<vmem>>, %arg9: memref<4x1x64xf32, #tpu.memory_space<vmem>>, %arg10: memref<4x64x128xbf16, #tpu.memory_space<vmem>>, %arg11: memref<4x1x128xf32, #tpu.memory_space<vmem>>, %arg12: memref<128x128xbf16, #tpu.memory_space<vmem>>, %arg13: memref<1x128xf32, #tpu.memory_space<vmem>>, %arg14: memref<128x128xbf16, #tpu.memory_space<vmem>>, %arg15: memref<1x128xf32, #tpu.memory_space<vmem>>, %arg16: memref<16x128xf32, #tpu.memory_space<vmem>>) attributes {dimension_semantics = [], scalar_prefetch = 0 : i64, scratch_operands = 0 : i64, tpu.core_type = #tpu.core_type<tc>} {
    %c0 = arith.constant 0 : index
    %c0_0 = arith.constant 0 : index
    %0 = vector.load %arg0[%c0, %c0_0] : memref<16x4xf32, #tpu.memory_space<vmem>>, vector<16x4xf32>
    %c0_1 = arith.constant 0 : index
    %c0_2 = arith.constant 0 : index
    %1 = vector.load %arg3[%c0_1, %c0_2] : memref<1x128xf32, #tpu.memory_space<vmem>>, vector<1x128xf32>
    %2 = vector.extract_strided_slice %0 {offsets = [0, 0], sizes = [16, 1], strides = [1, 1]} : vector<16x4xf32> to vector<16x1xf32>
    %c0_3 = arith.constant 0 : index
    %c0_4 = arith.constant 0 : index
    %3 = vector.load %arg2[%c0_3, %c0_4] : memref<4x128xf32, #tpu.memory_space<vmem>>, vector<1x128xf32>
    %4 = vector.broadcast %2 : vector<16x1xf32> to vector<16x128xf32>
    %5 = vector.broadcast %3 : vector<1x128xf32> to vector<16x128xf32>
    %6 = arith.mulf %4, %5 : vector<16x128xf32>
    %7 = vector.broadcast %1 : vector<1x128xf32> to vector<16x128xf32>
    %8 = arith.addf %7, %6 : vector<16x128xf32>
    %9 = vector.extract_strided_slice %0 {offsets = [0, 1], sizes = [16, 1], strides = [1, 1]} : vector<16x4xf32> to vector<16x1xf32>
    %c1 = arith.constant 1 : index
    %c0_5 = arith.constant 0 : index
    %10 = vector.load %arg2[%c1, %c0_5] : memref<4x128xf32, #tpu.memory_space<vmem>>, vector<1x128xf32>
    %11 = vector.broadcast %9 : vector<16x1xf32> to vector<16x128xf32>
    %12 = vector.broadcast %10 : vector<1x128xf32> to vector<16x128xf32>
    %13 = arith.mulf %11, %12 : vector<16x128xf32>
    %14 = arith.addf %8, %13 : vector<16x128xf32>
    %15 = vector.extract_strided_slice %0 {offsets = [0, 2], sizes = [16, 1], strides = [1, 1]} : vector<16x4xf32> to vector<16x1xf32>
    %c2 = arith.constant 2 : index
    %c0_6 = arith.constant 0 : index
    %16 = vector.load %arg2[%c2, %c0_6] : memref<4x128xf32, #tpu.memory_space<vmem>>, vector<1x128xf32>
    %17 = vector.broadcast %15 : vector<16x1xf32> to vector<16x128xf32>
    %18 = vector.broadcast %16 : vector<1x128xf32> to vector<16x128xf32>
    %19 = arith.mulf %17, %18 : vector<16x128xf32>
    %20 = arith.addf %14, %19 : vector<16x128xf32>
    %21 = vector.extract_strided_slice %0 {offsets = [0, 3], sizes = [16, 1], strides = [1, 1]} : vector<16x4xf32> to vector<16x1xf32>
    %c3 = arith.constant 3 : index
    %c0_7 = arith.constant 0 : index
    %22 = vector.load %arg2[%c3, %c0_7] : memref<4x128xf32, #tpu.memory_space<vmem>>, vector<1x128xf32>
    %23 = vector.broadcast %21 : vector<16x1xf32> to vector<16x128xf32>
    %24 = vector.broadcast %22 : vector<1x128xf32> to vector<16x128xf32>
    %25 = arith.mulf %23, %24 : vector<16x128xf32>
    %26 = arith.addf %20, %25 : vector<16x128xf32>
    %c0_8 = arith.constant 0 : index
    %c0_9 = arith.constant 0 : index
    %27 = vector.load %arg1[%c0_8, %c0_9] : memref<16x16xf32, #tpu.memory_space<vmem>>, vector<16x16xf32>
    %cst = arith.constant dense<0.000000e+00> : vector<16xf32>
    %28 = vector.multi_reduction <add>, %26, %cst [1] : vector<16x128xf32> to vector<16xf32>
    %29 = vector.shape_cast %28 : vector<16xf32> to vector<16x1xf32>
    %cst_10 = arith.constant 1.280000e+02 : f32
    %30 = vector.broadcast %cst_10 : f32 to vector<16x1xf32>
    %31 = arith.divf %29, %30 : vector<16x1xf32>
    %32 = vector.broadcast %31 : vector<16x1xf32> to vector<16x128xf32>
    %33 = arith.subf %26, %32 : vector<16x128xf32>
    %34 = arith.mulf %33, %33 : vector<16x128xf32>
    %cst_11 = arith.constant dense<0.000000e+00> : vector<16xf32>
    %35 = vector.multi_reduction <add>, %34, %cst_11 [1] : vector<16x128xf32> to vector<16xf32>
    %36 = vector.shape_cast %35 : vector<16xf32> to vector<16x1xf32>
    %cst_12 = arith.constant 0.00787401571 : f32
    %37 = vector.broadcast %cst_12 : f32 to vector<16x1xf32>
    %38 = arith.mulf %36, %37 : vector<16x1xf32>
    %39 = math.sqrt %38 : vector<16x1xf32>
    %cst_13 = arith.constant 9.99999997E-7 : f32
    %40 = vector.broadcast %cst_13 : f32 to vector<16x1xf32>
    %41 = arith.addf %39, %40 : vector<16x1xf32>
    %42 = vector.broadcast %41 : vector<16x1xf32> to vector<16x128xf32>
    %43 = arith.divf %33, %42 : vector<16x128xf32>
    %44 = arith.truncf %43 : vector<16x128xf32> to vector<16x128xbf16>
    %c0_14 = arith.constant 0 : index
    %c0_15 = arith.constant 0 : index
    %c0_16 = arith.constant 0 : index
    %45 = vector.load %arg4[%c0_14, %c0_15, %c0_16] : memref<4x128x384xbf16, #tpu.memory_space<vmem>>, vector<1x128x384xbf16>
    %46 = vector.shape_cast %45 : vector<1x128x384xbf16> to vector<128x384xbf16>
    %cst_17 = arith.constant dense<0.000000e+00> : vector<16x384xf32>
    %47 = tpu.matmul %44, %46, %cst_17 {dimension_numbers = #tpu.dot_dimension_numbers<[1], [0], [0], [1], [0, 0, 1, 1], [], []>} : vector<16x128xbf16>, vector<128x384xbf16>, vector<16x384xf32> -> vector<16x384xf32>
    %c0_18 = arith.constant 0 : index
    %c0_19 = arith.constant 0 : index
    %c0_20 = arith.constant 0 : index
    %48 = vector.load %arg5[%c0_18, %c0_19, %c0_20] : memref<4x1x384xf32, #tpu.memory_space<vmem>>, vector<1x1x384xf32>
    %49 = vector.shape_cast %48 : vector<1x1x384xf32> to vector<1x384xf32>
    %50 = vector.broadcast %49 : vector<1x384xf32> to vector<16x384xf32>
    %51 = arith.addf %47, %50 : vector<16x384xf32>
    %52 = vector.extract_strided_slice %51 {offsets = [0, 0], sizes = [16, 128], strides = [1, 1]} : vector<16x384xf32> to vector<16x128xf32>
    %53 = arith.truncf %52 : vector<16x128xf32> to vector<16x128xbf16>
    %54 = vector.extract_strided_slice %51 {offsets = [0, 128], sizes = [16, 128], strides = [1, 1]} : vector<16x384xf32> to vector<16x128xf32>
    %55 = arith.truncf %54 : vector<16x128xf32> to vector<16x128xbf16>
    %56 = vector.extract_strided_slice %51 {offsets = [0, 256], sizes = [16, 128], strides = [1, 1]} : vector<16x384xf32> to vector<16x128xf32>
    %57 = arith.truncf %56 : vector<16x128xf32> to vector<16x128xbf16>
    %cst_21 = arith.constant dense<0.000000e+00> : vector<16x16xf32>
    %58 = tpu.matmul %53, %55, %cst_21 {dimension_numbers = #tpu.dot_dimension_numbers<[1], [1], [0], [0], [0, 0, 1, 0], [], []>} : vector<16x128xbf16>, vector<16x128xbf16>, vector<16x16xf32> -> vector<16x16xf32>
    %59 = arith.addf %58, %27 : vector<16x16xf32>
    %cst_22 = arith.constant dense<0xFF800000> : vector<16xf32>
    %60 = vector.multi_reduction <maximumf>, %59, %cst_22 [1] : vector<16x16xf32> to vector<16xf32>
    %61 = vector.shape_cast %60 : vector<16xf32> to vector<16x1xf32>
    %62 = vector.broadcast %61 : vector<16x1xf32> to vector<16x16xf32>
    %63 = arith.subf %59, %62 : vector<16x16xf32>
    %64 = math.exp %63 : vector<16x16xf32>
    %cst_23 = arith.constant dense<0.000000e+00> : vector<16xf32>
    %65 = vector.multi_reduction <add>, %64, %cst_23 [1] : vector<16x16xf32> to vector<16xf32>
    %66 = vector.shape_cast %65 : vector<16xf32> to vector<16x1xf32>
    %67 = tpu.reciprocal %66 {approx = true} : vector<16x1xf32> -> vector<16x1xf32>
    %68 = vector.broadcast %67 : vector<16x1xf32> to vector<16x16xf32>
    %69 = arith.mulf %64, %68 : vector<16x16xf32>
    %70 = arith.truncf %69 : vector<16x16xf32> to vector<16x16xbf16>
    %cst_24 = arith.constant dense<0.000000e+00> : vector<16x128xf32>
    %71 = tpu.matmul %70, %57, %cst_24 {dimension_numbers = #tpu.dot_dimension_numbers<[1], [0], [0], [1], [0, 0, 1, 1], [], []>} : vector<16x16xbf16>, vector<16x128xbf16>, vector<16x128xf32> -> vector<16x128xf32>
    %72 = arith.truncf %71 : vector<16x128xf32> to vector<16x128xbf16>
    %c0_25 = arith.constant 0 : index
    %c0_26 = arith.constant 0 : index
    %c0_27 = arith.constant 0 : index
    %73 = vector.load %arg6[%c0_25, %c0_26, %c0_27] : memref<4x128x128xbf16, #tpu.memory_space<vmem>>, vector<1x128x128xbf16>
    %74 = vector.shape_cast %73 : vector<1x128x128xbf16> to vector<128x128xbf16>
    %cst_28 = arith.constant dense<0.000000e+00> : vector<16x128xf32>
    %75 = tpu.matmul %72, %74, %cst_28 {dimension_numbers = #tpu.dot_dimension_numbers<[1], [0], [0], [1], [0, 0, 1, 1], [], []>} : vector<16x128xbf16>, vector<128x128xbf16>, vector<16x128xf32> -> vector<16x128xf32>
    %76 = arith.addf %26, %75 : vector<16x128xf32>
    %c0_29 = arith.constant 0 : index
    %c0_30 = arith.constant 0 : index
    %c0_31 = arith.constant 0 : index
    %77 = vector.load %arg7[%c0_29, %c0_30, %c0_31] : memref<4x1x128xf32, #tpu.memory_space<vmem>>, vector<1x1x128xf32>
    %78 = vector.shape_cast %77 : vector<1x1x128xf32> to vector<1x128xf32>
    %79 = vector.broadcast %78 : vector<1x128xf32> to vector<16x128xf32>
    %80 = arith.addf %76, %79 : vector<16x128xf32>
    %cst_32 = arith.constant dense<0.000000e+00> : vector<16xf32>
    %81 = vector.multi_reduction <add>, %80, %cst_32 [1] : vector<16x128xf32> to vector<16xf32>
    %82 = vector.shape_cast %81 : vector<16xf32> to vector<16x1xf32>
    %cst_33 = arith.constant 1.280000e+02 : f32
    %83 = vector.broadcast %cst_33 : f32 to vector<16x1xf32>
    %84 = arith.divf %82, %83 : vector<16x1xf32>
    %85 = vector.broadcast %84 : vector<16x1xf32> to vector<16x128xf32>
    %86 = arith.subf %80, %85 : vector<16x128xf32>
    %87 = arith.mulf %86, %86 : vector<16x128xf32>
    %cst_34 = arith.constant dense<0.000000e+00> : vector<16xf32>
    %88 = vector.multi_reduction <add>, %87, %cst_34 [1] : vector<16x128xf32> to vector<16xf32>
    %89 = vector.shape_cast %88 : vector<16xf32> to vector<16x1xf32>
    %cst_35 = arith.constant 0.00787401571 : f32
    %90 = vector.broadcast %cst_35 : f32 to vector<16x1xf32>
    %91 = arith.mulf %89, %90 : vector<16x1xf32>
    %92 = math.sqrt %91 : vector<16x1xf32>
    %cst_36 = arith.constant 9.99999997E-7 : f32
    %93 = vector.broadcast %cst_36 : f32 to vector<16x1xf32>
    %94 = arith.addf %92, %93 : vector<16x1xf32>
    %95 = vector.broadcast %94 : vector<16x1xf32> to vector<16x128xf32>
    %96 = arith.divf %86, %95 : vector<16x128xf32>
    %97 = arith.truncf %96 : vector<16x128xf32> to vector<16x128xbf16>
    %c0_37 = arith.constant 0 : index
    %c0_38 = arith.constant 0 : index
    %c0_39 = arith.constant 0 : index
    %98 = vector.load %arg8[%c0_37, %c0_38, %c0_39] : memref<4x128x64xbf16, #tpu.memory_space<vmem>>, vector<1x128x64xbf16>
    %99 = vector.shape_cast %98 : vector<1x128x64xbf16> to vector<128x64xbf16>
    %cst_40 = arith.constant dense<0.000000e+00> : vector<16x64xf32>
    %100 = tpu.matmul %97, %99, %cst_40 {dimension_numbers = #tpu.dot_dimension_numbers<[1], [0], [0], [1], [0, 0, 1, 1], [], []>} : vector<16x128xbf16>, vector<128x64xbf16>, vector<16x64xf32> -> vector<16x64xf32>
    %c0_41 = arith.constant 0 : index
    %c0_42 = arith.constant 0 : index
    %c0_43 = arith.constant 0 : index
    %101 = vector.load %arg9[%c0_41, %c0_42, %c0_43] : memref<4x1x64xf32, #tpu.memory_space<vmem>>, vector<1x1x64xf32>
    %102 = vector.shape_cast %101 : vector<1x1x64xf32> to vector<1x64xf32>
    %103 = vector.broadcast %102 : vector<1x64xf32> to vector<16x64xf32>
    %104 = arith.addf %100, %103 : vector<16x64xf32>
    %cst_44 = arith.constant 0.000000e+00 : f32
    %105 = vector.broadcast %cst_44 : f32 to vector<16x64xf32>
    %106 = arith.maximumf %104, %105 : vector<16x64xf32>
    %107 = arith.truncf %106 : vector<16x64xf32> to vector<16x64xbf16>
    %c0_45 = arith.constant 0 : index
    %c0_46 = arith.constant 0 : index
    %c0_47 = arith.constant 0 : index
    %108 = vector.load %arg10[%c0_45, %c0_46, %c0_47] : memref<4x64x128xbf16, #tpu.memory_space<vmem>>, vector<1x64x128xbf16>
    %109 = vector.shape_cast %108 : vector<1x64x128xbf16> to vector<64x128xbf16>
    %cst_48 = arith.constant dense<0.000000e+00> : vector<16x128xf32>
    %110 = tpu.matmul %107, %109, %cst_48 {dimension_numbers = #tpu.dot_dimension_numbers<[1], [0], [0], [1], [0, 0, 1, 1], [], []>} : vector<16x64xbf16>, vector<64x128xbf16>, vector<16x128xf32> -> vector<16x128xf32>
    %111 = arith.addf %80, %110 : vector<16x128xf32>
    %c0_49 = arith.constant 0 : index
    %c0_50 = arith.constant 0 : index
    %c0_51 = arith.constant 0 : index
    %112 = vector.load %arg11[%c0_49, %c0_50, %c0_51] : memref<4x1x128xf32, #tpu.memory_space<vmem>>, vector<1x1x128xf32>
    %113 = vector.shape_cast %112 : vector<1x1x128xf32> to vector<1x128xf32>
    %114 = vector.broadcast %113 : vector<1x128xf32> to vector<16x128xf32>
    %115 = arith.addf %111, %114 : vector<16x128xf32>
    %cst_52 = arith.constant dense<0.000000e+00> : vector<16xf32>
    %116 = vector.multi_reduction <add>, %115, %cst_52 [1] : vector<16x128xf32> to vector<16xf32>
    %117 = vector.shape_cast %116 : vector<16xf32> to vector<16x1xf32>
    %cst_53 = arith.constant 1.280000e+02 : f32
    %118 = vector.broadcast %cst_53 : f32 to vector<16x1xf32>
    %119 = arith.divf %117, %118 : vector<16x1xf32>
    %120 = vector.broadcast %119 : vector<16x1xf32> to vector<16x128xf32>
    %121 = arith.subf %115, %120 : vector<16x128xf32>
    %122 = arith.mulf %121, %121 : vector<16x128xf32>
    %cst_54 = arith.constant dense<0.000000e+00> : vector<16xf32>
    %123 = vector.multi_reduction <add>, %122, %cst_54 [1] : vector<16x128xf32> to vector<16xf32>
    %124 = vector.shape_cast %123 : vector<16xf32> to vector<16x1xf32>
    %cst_55 = arith.constant 0.00787401571 : f32
    %125 = vector.broadcast %cst_55 : f32 to vector<16x1xf32>
    %126 = arith.mulf %124, %125 : vector<16x1xf32>
    %127 = math.sqrt %126 : vector<16x1xf32>
    %cst_56 = arith.constant 9.99999997E-7 : f32
    %128 = vector.broadcast %cst_56 : f32 to vector<16x1xf32>
    %129 = arith.addf %127, %128 : vector<16x1xf32>
    %130 = vector.broadcast %129 : vector<16x1xf32> to vector<16x128xf32>
    %131 = arith.divf %121, %130 : vector<16x128xf32>
    %132 = arith.truncf %131 : vector<16x128xf32> to vector<16x128xbf16>
    %c1_57 = arith.constant 1 : index
    %c0_58 = arith.constant 0 : index
    %c0_59 = arith.constant 0 : index
    %133 = vector.load %arg4[%c1_57, %c0_58, %c0_59] : memref<4x128x384xbf16, #tpu.memory_space<vmem>>, vector<1x128x384xbf16>
    %134 = vector.shape_cast %133 : vector<1x128x384xbf16> to vector<128x384xbf16>
    %cst_60 = arith.constant dense<0.000000e+00> : vector<16x384xf32>
    %135 = tpu.matmul %132, %134, %cst_60 {dimension_numbers = #tpu.dot_dimension_numbers<[1], [0], [0], [1], [0, 0, 1, 1], [], []>} : vector<16x128xbf16>, vector<128x384xbf16>, vector<16x384xf32> -> vector<16x384xf32>
    %c1_61 = arith.constant 1 : index
    %c0_62 = arith.constant 0 : index
    %c0_63 = arith.constant 0 : index
    %136 = vector.load %arg5[%c1_61, %c0_62, %c0_63] : memref<4x1x384xf32, #tpu.memory_space<vmem>>, vector<1x1x384xf32>
    %137 = vector.shape_cast %136 : vector<1x1x384xf32> to vector<1x384xf32>
    %138 = vector.broadcast %137 : vector<1x384xf32> to vector<16x384xf32>
    %139 = arith.addf %135, %138 : vector<16x384xf32>
    %140 = vector.extract_strided_slice %139 {offsets = [0, 0], sizes = [16, 128], strides = [1, 1]} : vector<16x384xf32> to vector<16x128xf32>
    %141 = arith.truncf %140 : vector<16x128xf32> to vector<16x128xbf16>
    %142 = vector.extract_strided_slice %139 {offsets = [0, 128], sizes = [16, 128], strides = [1, 1]} : vector<16x384xf32> to vector<16x128xf32>
    %143 = arith.truncf %142 : vector<16x128xf32> to vector<16x128xbf16>
    %144 = vector.extract_strided_slice %139 {offsets = [0, 256], sizes = [16, 128], strides = [1, 1]} : vector<16x384xf32> to vector<16x128xf32>
    %145 = arith.truncf %144 : vector<16x128xf32> to vector<16x128xbf16>
    %cst_64 = arith.constant dense<0.000000e+00> : vector<16x16xf32>
    %146 = tpu.matmul %141, %143, %cst_64 {dimension_numbers = #tpu.dot_dimension_numbers<[1], [1], [0], [0], [0, 0, 1, 0], [], []>} : vector<16x128xbf16>, vector<16x128xbf16>, vector<16x16xf32> -> vector<16x16xf32>
    %147 = arith.addf %146, %27 : vector<16x16xf32>
    %cst_65 = arith.constant dense<0xFF800000> : vector<16xf32>
    %148 = vector.multi_reduction <maximumf>, %147, %cst_65 [1] : vector<16x16xf32> to vector<16xf32>
    %149 = vector.shape_cast %148 : vector<16xf32> to vector<16x1xf32>
    %150 = vector.broadcast %149 : vector<16x1xf32> to vector<16x16xf32>
    %151 = arith.subf %147, %150 : vector<16x16xf32>
    %152 = math.exp %151 : vector<16x16xf32>
    %cst_66 = arith.constant dense<0.000000e+00> : vector<16xf32>
    %153 = vector.multi_reduction <add>, %152, %cst_66 [1] : vector<16x16xf32> to vector<16xf32>
    %154 = vector.shape_cast %153 : vector<16xf32> to vector<16x1xf32>
    %155 = tpu.reciprocal %154 {approx = true} : vector<16x1xf32> -> vector<16x1xf32>
    %156 = vector.broadcast %155 : vector<16x1xf32> to vector<16x16xf32>
    %157 = arith.mulf %152, %156 : vector<16x16xf32>
    %158 = arith.truncf %157 : vector<16x16xf32> to vector<16x16xbf16>
    %cst_67 = arith.constant dense<0.000000e+00> : vector<16x128xf32>
    %159 = tpu.matmul %158, %145, %cst_67 {dimension_numbers = #tpu.dot_dimension_numbers<[1], [0], [0], [1], [0, 0, 1, 1], [], []>} : vector<16x16xbf16>, vector<16x128xbf16>, vector<16x128xf32> -> vector<16x128xf32>
    %160 = arith.truncf %159 : vector<16x128xf32> to vector<16x128xbf16>
    %c1_68 = arith.constant 1 : index
    %c0_69 = arith.constant 0 : index
    %c0_70 = arith.constant 0 : index
    %161 = vector.load %arg6[%c1_68, %c0_69, %c0_70] : memref<4x128x128xbf16, #tpu.memory_space<vmem>>, vector<1x128x128xbf16>
    %162 = vector.shape_cast %161 : vector<1x128x128xbf16> to vector<128x128xbf16>
    %cst_71 = arith.constant dense<0.000000e+00> : vector<16x128xf32>
    %163 = tpu.matmul %160, %162, %cst_71 {dimension_numbers = #tpu.dot_dimension_numbers<[1], [0], [0], [1], [0, 0, 1, 1], [], []>} : vector<16x128xbf16>, vector<128x128xbf16>, vector<16x128xf32> -> vector<16x128xf32>
    %164 = arith.addf %115, %163 : vector<16x128xf32>
    %c1_72 = arith.constant 1 : index
    %c0_73 = arith.constant 0 : index
    %c0_74 = arith.constant 0 : index
    %165 = vector.load %arg7[%c1_72, %c0_73, %c0_74] : memref<4x1x128xf32, #tpu.memory_space<vmem>>, vector<1x1x128xf32>
    %166 = vector.shape_cast %165 : vector<1x1x128xf32> to vector<1x128xf32>
    %167 = vector.broadcast %166 : vector<1x128xf32> to vector<16x128xf32>
    %168 = arith.addf %164, %167 : vector<16x128xf32>
    %cst_75 = arith.constant dense<0.000000e+00> : vector<16xf32>
    %169 = vector.multi_reduction <add>, %168, %cst_75 [1] : vector<16x128xf32> to vector<16xf32>
    %170 = vector.shape_cast %169 : vector<16xf32> to vector<16x1xf32>
    %cst_76 = arith.constant 1.280000e+02 : f32
    %171 = vector.broadcast %cst_76 : f32 to vector<16x1xf32>
    %172 = arith.divf %170, %171 : vector<16x1xf32>
    %173 = vector.broadcast %172 : vector<16x1xf32> to vector<16x128xf32>
    %174 = arith.subf %168, %173 : vector<16x128xf32>
    %175 = arith.mulf %174, %174 : vector<16x128xf32>
    %cst_77 = arith.constant dense<0.000000e+00> : vector<16xf32>
    %176 = vector.multi_reduction <add>, %175, %cst_77 [1] : vector<16x128xf32> to vector<16xf32>
    %177 = vector.shape_cast %176 : vector<16xf32> to vector<16x1xf32>
    %cst_78 = arith.constant 0.00787401571 : f32
    %178 = vector.broadcast %cst_78 : f32 to vector<16x1xf32>
    %179 = arith.mulf %177, %178 : vector<16x1xf32>
    %180 = math.sqrt %179 : vector<16x1xf32>
    %cst_79 = arith.constant 9.99999997E-7 : f32
    %181 = vector.broadcast %cst_79 : f32 to vector<16x1xf32>
    %182 = arith.addf %180, %181 : vector<16x1xf32>
    %183 = vector.broadcast %182 : vector<16x1xf32> to vector<16x128xf32>
    %184 = arith.divf %174, %183 : vector<16x128xf32>
    %185 = arith.truncf %184 : vector<16x128xf32> to vector<16x128xbf16>
    %c1_80 = arith.constant 1 : index
    %c0_81 = arith.constant 0 : index
    %c0_82 = arith.constant 0 : index
    %186 = vector.load %arg8[%c1_80, %c0_81, %c0_82] : memref<4x128x64xbf16, #tpu.memory_space<vmem>>, vector<1x128x64xbf16>
    %187 = vector.shape_cast %186 : vector<1x128x64xbf16> to vector<128x64xbf16>
    %cst_83 = arith.constant dense<0.000000e+00> : vector<16x64xf32>
    %188 = tpu.matmul %185, %187, %cst_83 {dimension_numbers = #tpu.dot_dimension_numbers<[1], [0], [0], [1], [0, 0, 1, 1], [], []>} : vector<16x128xbf16>, vector<128x64xbf16>, vector<16x64xf32> -> vector<16x64xf32>
    %c1_84 = arith.constant 1 : index
    %c0_85 = arith.constant 0 : index
    %c0_86 = arith.constant 0 : index
    %189 = vector.load %arg9[%c1_84, %c0_85, %c0_86] : memref<4x1x64xf32, #tpu.memory_space<vmem>>, vector<1x1x64xf32>
    %190 = vector.shape_cast %189 : vector<1x1x64xf32> to vector<1x64xf32>
    %191 = vector.broadcast %190 : vector<1x64xf32> to vector<16x64xf32>
    %192 = arith.addf %188, %191 : vector<16x64xf32>
    %cst_87 = arith.constant 0.000000e+00 : f32
    %193 = vector.broadcast %cst_87 : f32 to vector<16x64xf32>
    %194 = arith.maximumf %192, %193 : vector<16x64xf32>
    %195 = arith.truncf %194 : vector<16x64xf32> to vector<16x64xbf16>
    %c1_88 = arith.constant 1 : index
    %c0_89 = arith.constant 0 : index
    %c0_90 = arith.constant 0 : index
    %196 = vector.load %arg10[%c1_88, %c0_89, %c0_90] : memref<4x64x128xbf16, #tpu.memory_space<vmem>>, vector<1x64x128xbf16>
    %197 = vector.shape_cast %196 : vector<1x64x128xbf16> to vector<64x128xbf16>
    %cst_91 = arith.constant dense<0.000000e+00> : vector<16x128xf32>
    %198 = tpu.matmul %195, %197, %cst_91 {dimension_numbers = #tpu.dot_dimension_numbers<[1], [0], [0], [1], [0, 0, 1, 1], [], []>} : vector<16x64xbf16>, vector<64x128xbf16>, vector<16x128xf32> -> vector<16x128xf32>
    %199 = arith.addf %168, %198 : vector<16x128xf32>
    %c1_92 = arith.constant 1 : index
    %c0_93 = arith.constant 0 : index
    %c0_94 = arith.constant 0 : index
    %200 = vector.load %arg11[%c1_92, %c0_93, %c0_94] : memref<4x1x128xf32, #tpu.memory_space<vmem>>, vector<1x1x128xf32>
    %201 = vector.shape_cast %200 : vector<1x1x128xf32> to vector<1x128xf32>
    %202 = vector.broadcast %201 : vector<1x128xf32> to vector<16x128xf32>
    %203 = arith.addf %199, %202 : vector<16x128xf32>
    %cst_95 = arith.constant dense<0.000000e+00> : vector<16xf32>
    %204 = vector.multi_reduction <add>, %203, %cst_95 [1] : vector<16x128xf32> to vector<16xf32>
    %205 = vector.shape_cast %204 : vector<16xf32> to vector<16x1xf32>
    %cst_96 = arith.constant 1.280000e+02 : f32
    %206 = vector.broadcast %cst_96 : f32 to vector<16x1xf32>
    %207 = arith.divf %205, %206 : vector<16x1xf32>
    %208 = vector.broadcast %207 : vector<16x1xf32> to vector<16x128xf32>
    %209 = arith.subf %203, %208 : vector<16x128xf32>
    %210 = arith.mulf %209, %209 : vector<16x128xf32>
    %cst_97 = arith.constant dense<0.000000e+00> : vector<16xf32>
    %211 = vector.multi_reduction <add>, %210, %cst_97 [1] : vector<16x128xf32> to vector<16xf32>
    %212 = vector.shape_cast %211 : vector<16xf32> to vector<16x1xf32>
    %cst_98 = arith.constant 0.00787401571 : f32
    %213 = vector.broadcast %cst_98 : f32 to vector<16x1xf32>
    %214 = arith.mulf %212, %213 : vector<16x1xf32>
    %215 = math.sqrt %214 : vector<16x1xf32>
    %cst_99 = arith.constant 9.99999997E-7 : f32
    %216 = vector.broadcast %cst_99 : f32 to vector<16x1xf32>
    %217 = arith.addf %215, %216 : vector<16x1xf32>
    %218 = vector.broadcast %217 : vector<16x1xf32> to vector<16x128xf32>
    %219 = arith.divf %209, %218 : vector<16x128xf32>
    %220 = arith.truncf %219 : vector<16x128xf32> to vector<16x128xbf16>
    %c2_100 = arith.constant 2 : index
    %c0_101 = arith.constant 0 : index
    %c0_102 = arith.constant 0 : index
    %221 = vector.load %arg4[%c2_100, %c0_101, %c0_102] : memref<4x128x384xbf16, #tpu.memory_space<vmem>>, vector<1x128x384xbf16>
    %222 = vector.shape_cast %221 : vector<1x128x384xbf16> to vector<128x384xbf16>
    %cst_103 = arith.constant dense<0.000000e+00> : vector<16x384xf32>
    %223 = tpu.matmul %220, %222, %cst_103 {dimension_numbers = #tpu.dot_dimension_numbers<[1], [0], [0], [1], [0, 0, 1, 1], [], []>} : vector<16x128xbf16>, vector<128x384xbf16>, vector<16x384xf32> -> vector<16x384xf32>
    %c2_104 = arith.constant 2 : index
    %c0_105 = arith.constant 0 : index
    %c0_106 = arith.constant 0 : index
    %224 = vector.load %arg5[%c2_104, %c0_105, %c0_106] : memref<4x1x384xf32, #tpu.memory_space<vmem>>, vector<1x1x384xf32>
    %225 = vector.shape_cast %224 : vector<1x1x384xf32> to vector<1x384xf32>
    %226 = vector.broadcast %225 : vector<1x384xf32> to vector<16x384xf32>
    %227 = arith.addf %223, %226 : vector<16x384xf32>
    %228 = vector.extract_strided_slice %227 {offsets = [0, 0], sizes = [16, 128], strides = [1, 1]} : vector<16x384xf32> to vector<16x128xf32>
    %229 = arith.truncf %228 : vector<16x128xf32> to vector<16x128xbf16>
    %230 = vector.extract_strided_slice %227 {offsets = [0, 128], sizes = [16, 128], strides = [1, 1]} : vector<16x384xf32> to vector<16x128xf32>
    %231 = arith.truncf %230 : vector<16x128xf32> to vector<16x128xbf16>
    %232 = vector.extract_strided_slice %227 {offsets = [0, 256], sizes = [16, 128], strides = [1, 1]} : vector<16x384xf32> to vector<16x128xf32>
    %233 = arith.truncf %232 : vector<16x128xf32> to vector<16x128xbf16>
    %cst_107 = arith.constant dense<0.000000e+00> : vector<16x16xf32>
    %234 = tpu.matmul %229, %231, %cst_107 {dimension_numbers = #tpu.dot_dimension_numbers<[1], [1], [0], [0], [0, 0, 1, 0], [], []>} : vector<16x128xbf16>, vector<16x128xbf16>, vector<16x16xf32> -> vector<16x16xf32>
    %235 = arith.addf %234, %27 : vector<16x16xf32>
    %cst_108 = arith.constant dense<0xFF800000> : vector<16xf32>
    %236 = vector.multi_reduction <maximumf>, %235, %cst_108 [1] : vector<16x16xf32> to vector<16xf32>
    %237 = vector.shape_cast %236 : vector<16xf32> to vector<16x1xf32>
    %238 = vector.broadcast %237 : vector<16x1xf32> to vector<16x16xf32>
    %239 = arith.subf %235, %238 : vector<16x16xf32>
    %240 = math.exp %239 : vector<16x16xf32>
    %cst_109 = arith.constant dense<0.000000e+00> : vector<16xf32>
    %241 = vector.multi_reduction <add>, %240, %cst_109 [1] : vector<16x16xf32> to vector<16xf32>
    %242 = vector.shape_cast %241 : vector<16xf32> to vector<16x1xf32>
    %243 = tpu.reciprocal %242 {approx = true} : vector<16x1xf32> -> vector<16x1xf32>
    %244 = vector.broadcast %243 : vector<16x1xf32> to vector<16x16xf32>
    %245 = arith.mulf %240, %244 : vector<16x16xf32>
    %246 = arith.truncf %245 : vector<16x16xf32> to vector<16x16xbf16>
    %cst_110 = arith.constant dense<0.000000e+00> : vector<16x128xf32>
    %247 = tpu.matmul %246, %233, %cst_110 {dimension_numbers = #tpu.dot_dimension_numbers<[1], [0], [0], [1], [0, 0, 1, 1], [], []>} : vector<16x16xbf16>, vector<16x128xbf16>, vector<16x128xf32> -> vector<16x128xf32>
    %248 = arith.truncf %247 : vector<16x128xf32> to vector<16x128xbf16>
    %c2_111 = arith.constant 2 : index
    %c0_112 = arith.constant 0 : index
    %c0_113 = arith.constant 0 : index
    %249 = vector.load %arg6[%c2_111, %c0_112, %c0_113] : memref<4x128x128xbf16, #tpu.memory_space<vmem>>, vector<1x128x128xbf16>
    %250 = vector.shape_cast %249 : vector<1x128x128xbf16> to vector<128x128xbf16>
    %cst_114 = arith.constant dense<0.000000e+00> : vector<16x128xf32>
    %251 = tpu.matmul %248, %250, %cst_114 {dimension_numbers = #tpu.dot_dimension_numbers<[1], [0], [0], [1], [0, 0, 1, 1], [], []>} : vector<16x128xbf16>, vector<128x128xbf16>, vector<16x128xf32> -> vector<16x128xf32>
    %252 = arith.addf %203, %251 : vector<16x128xf32>
    %c2_115 = arith.constant 2 : index
    %c0_116 = arith.constant 0 : index
    %c0_117 = arith.constant 0 : index
    %253 = vector.load %arg7[%c2_115, %c0_116, %c0_117] : memref<4x1x128xf32, #tpu.memory_space<vmem>>, vector<1x1x128xf32>
    %254 = vector.shape_cast %253 : vector<1x1x128xf32> to vector<1x128xf32>
    %255 = vector.broadcast %254 : vector<1x128xf32> to vector<16x128xf32>
    %256 = arith.addf %252, %255 : vector<16x128xf32>
    %cst_118 = arith.constant dense<0.000000e+00> : vector<16xf32>
    %257 = vector.multi_reduction <add>, %256, %cst_118 [1] : vector<16x128xf32> to vector<16xf32>
    %258 = vector.shape_cast %257 : vector<16xf32> to vector<16x1xf32>
    %cst_119 = arith.constant 1.280000e+02 : f32
    %259 = vector.broadcast %cst_119 : f32 to vector<16x1xf32>
    %260 = arith.divf %258, %259 : vector<16x1xf32>
    %261 = vector.broadcast %260 : vector<16x1xf32> to vector<16x128xf32>
    %262 = arith.subf %256, %261 : vector<16x128xf32>
    %263 = arith.mulf %262, %262 : vector<16x128xf32>
    %cst_120 = arith.constant dense<0.000000e+00> : vector<16xf32>
    %264 = vector.multi_reduction <add>, %263, %cst_120 [1] : vector<16x128xf32> to vector<16xf32>
    %265 = vector.shape_cast %264 : vector<16xf32> to vector<16x1xf32>
    %cst_121 = arith.constant 0.00787401571 : f32
    %266 = vector.broadcast %cst_121 : f32 to vector<16x1xf32>
    %267 = arith.mulf %265, %266 : vector<16x1xf32>
    %268 = math.sqrt %267 : vector<16x1xf32>
    %cst_122 = arith.constant 9.99999997E-7 : f32
    %269 = vector.broadcast %cst_122 : f32 to vector<16x1xf32>
    %270 = arith.addf %268, %269 : vector<16x1xf32>
    %271 = vector.broadcast %270 : vector<16x1xf32> to vector<16x128xf32>
    %272 = arith.divf %262, %271 : vector<16x128xf32>
    %273 = arith.truncf %272 : vector<16x128xf32> to vector<16x128xbf16>
    %c2_123 = arith.constant 2 : index
    %c0_124 = arith.constant 0 : index
    %c0_125 = arith.constant 0 : index
    %274 = vector.load %arg8[%c2_123, %c0_124, %c0_125] : memref<4x128x64xbf16, #tpu.memory_space<vmem>>, vector<1x128x64xbf16>
    %275 = vector.shape_cast %274 : vector<1x128x64xbf16> to vector<128x64xbf16>
    %cst_126 = arith.constant dense<0.000000e+00> : vector<16x64xf32>
    %276 = tpu.matmul %273, %275, %cst_126 {dimension_numbers = #tpu.dot_dimension_numbers<[1], [0], [0], [1], [0, 0, 1, 1], [], []>} : vector<16x128xbf16>, vector<128x64xbf16>, vector<16x64xf32> -> vector<16x64xf32>
    %c2_127 = arith.constant 2 : index
    %c0_128 = arith.constant 0 : index
    %c0_129 = arith.constant 0 : index
    %277 = vector.load %arg9[%c2_127, %c0_128, %c0_129] : memref<4x1x64xf32, #tpu.memory_space<vmem>>, vector<1x1x64xf32>
    %278 = vector.shape_cast %277 : vector<1x1x64xf32> to vector<1x64xf32>
    %279 = vector.broadcast %278 : vector<1x64xf32> to vector<16x64xf32>
    %280 = arith.addf %276, %279 : vector<16x64xf32>
    %cst_130 = arith.constant 0.000000e+00 : f32
    %281 = vector.broadcast %cst_130 : f32 to vector<16x64xf32>
    %282 = arith.maximumf %280, %281 : vector<16x64xf32>
    %283 = arith.truncf %282 : vector<16x64xf32> to vector<16x64xbf16>
    %c2_131 = arith.constant 2 : index
    %c0_132 = arith.constant 0 : index
    %c0_133 = arith.constant 0 : index
    %284 = vector.load %arg10[%c2_131, %c0_132, %c0_133] : memref<4x64x128xbf16, #tpu.memory_space<vmem>>, vector<1x64x128xbf16>
    %285 = vector.shape_cast %284 : vector<1x64x128xbf16> to vector<64x128xbf16>
    %cst_134 = arith.constant dense<0.000000e+00> : vector<16x128xf32>
    %286 = tpu.matmul %283, %285, %cst_134 {dimension_numbers = #tpu.dot_dimension_numbers<[1], [0], [0], [1], [0, 0, 1, 1], [], []>} : vector<16x64xbf16>, vector<64x128xbf16>, vector<16x128xf32> -> vector<16x128xf32>
    %287 = arith.addf %256, %286 : vector<16x128xf32>
    %c2_135 = arith.constant 2 : index
    %c0_136 = arith.constant 0 : index
    %c0_137 = arith.constant 0 : index
    %288 = vector.load %arg11[%c2_135, %c0_136, %c0_137] : memref<4x1x128xf32, #tpu.memory_space<vmem>>, vector<1x1x128xf32>
    %289 = vector.shape_cast %288 : vector<1x1x128xf32> to vector<1x128xf32>
    %290 = vector.broadcast %289 : vector<1x128xf32> to vector<16x128xf32>
    %291 = arith.addf %287, %290 : vector<16x128xf32>
    %cst_138 = arith.constant dense<0.000000e+00> : vector<16xf32>
    %292 = vector.multi_reduction <add>, %291, %cst_138 [1] : vector<16x128xf32> to vector<16xf32>
    %293 = vector.shape_cast %292 : vector<16xf32> to vector<16x1xf32>
    %cst_139 = arith.constant 1.280000e+02 : f32
    %294 = vector.broadcast %cst_139 : f32 to vector<16x1xf32>
    %295 = arith.divf %293, %294 : vector<16x1xf32>
    %296 = vector.broadcast %295 : vector<16x1xf32> to vector<16x128xf32>
    %297 = arith.subf %291, %296 : vector<16x128xf32>
    %298 = arith.mulf %297, %297 : vector<16x128xf32>
    %cst_140 = arith.constant dense<0.000000e+00> : vector<16xf32>
    %299 = vector.multi_reduction <add>, %298, %cst_140 [1] : vector<16x128xf32> to vector<16xf32>
    %300 = vector.shape_cast %299 : vector<16xf32> to vector<16x1xf32>
    %cst_141 = arith.constant 0.00787401571 : f32
    %301 = vector.broadcast %cst_141 : f32 to vector<16x1xf32>
    %302 = arith.mulf %300, %301 : vector<16x1xf32>
    %303 = math.sqrt %302 : vector<16x1xf32>
    %cst_142 = arith.constant 9.99999997E-7 : f32
    %304 = vector.broadcast %cst_142 : f32 to vector<16x1xf32>
    %305 = arith.addf %303, %304 : vector<16x1xf32>
    %306 = vector.broadcast %305 : vector<16x1xf32> to vector<16x128xf32>
    %307 = arith.divf %297, %306 : vector<16x128xf32>
    %308 = arith.truncf %307 : vector<16x128xf32> to vector<16x128xbf16>
    %c3_143 = arith.constant 3 : index
    %c0_144 = arith.constant 0 : index
    %c0_145 = arith.constant 0 : index
    %309 = vector.load %arg4[%c3_143, %c0_144, %c0_145] : memref<4x128x384xbf16, #tpu.memory_space<vmem>>, vector<1x128x384xbf16>
    %310 = vector.shape_cast %309 : vector<1x128x384xbf16> to vector<128x384xbf16>
    %cst_146 = arith.constant dense<0.000000e+00> : vector<16x384xf32>
    %311 = tpu.matmul %308, %310, %cst_146 {dimension_numbers = #tpu.dot_dimension_numbers<[1], [0], [0], [1], [0, 0, 1, 1], [], []>} : vector<16x128xbf16>, vector<128x384xbf16>, vector<16x384xf32> -> vector<16x384xf32>
    %c3_147 = arith.constant 3 : index
    %c0_148 = arith.constant 0 : index
    %c0_149 = arith.constant 0 : index
    %312 = vector.load %arg5[%c3_147, %c0_148, %c0_149] : memref<4x1x384xf32, #tpu.memory_space<vmem>>, vector<1x1x384xf32>
    %313 = vector.shape_cast %312 : vector<1x1x384xf32> to vector<1x384xf32>
    %314 = vector.broadcast %313 : vector<1x384xf32> to vector<16x384xf32>
    %315 = arith.addf %311, %314 : vector<16x384xf32>
    %316 = vector.extract_strided_slice %315 {offsets = [0, 0], sizes = [16, 128], strides = [1, 1]} : vector<16x384xf32> to vector<16x128xf32>
    %317 = arith.truncf %316 : vector<16x128xf32> to vector<16x128xbf16>
    %318 = vector.extract_strided_slice %315 {offsets = [0, 128], sizes = [16, 128], strides = [1, 1]} : vector<16x384xf32> to vector<16x128xf32>
    %319 = arith.truncf %318 : vector<16x128xf32> to vector<16x128xbf16>
    %320 = vector.extract_strided_slice %315 {offsets = [0, 256], sizes = [16, 128], strides = [1, 1]} : vector<16x384xf32> to vector<16x128xf32>
    %321 = arith.truncf %320 : vector<16x128xf32> to vector<16x128xbf16>
    %cst_150 = arith.constant dense<0.000000e+00> : vector<16x16xf32>
    %322 = tpu.matmul %317, %319, %cst_150 {dimension_numbers = #tpu.dot_dimension_numbers<[1], [1], [0], [0], [0, 0, 1, 0], [], []>} : vector<16x128xbf16>, vector<16x128xbf16>, vector<16x16xf32> -> vector<16x16xf32>
    %323 = arith.addf %322, %27 : vector<16x16xf32>
    %cst_151 = arith.constant dense<0xFF800000> : vector<16xf32>
    %324 = vector.multi_reduction <maximumf>, %323, %cst_151 [1] : vector<16x16xf32> to vector<16xf32>
    %325 = vector.shape_cast %324 : vector<16xf32> to vector<16x1xf32>
    %326 = vector.broadcast %325 : vector<16x1xf32> to vector<16x16xf32>
    %327 = arith.subf %323, %326 : vector<16x16xf32>
    %328 = math.exp %327 : vector<16x16xf32>
    %cst_152 = arith.constant dense<0.000000e+00> : vector<16xf32>
    %329 = vector.multi_reduction <add>, %328, %cst_152 [1] : vector<16x16xf32> to vector<16xf32>
    %330 = vector.shape_cast %329 : vector<16xf32> to vector<16x1xf32>
    %331 = tpu.reciprocal %330 {approx = true} : vector<16x1xf32> -> vector<16x1xf32>
    %332 = vector.broadcast %331 : vector<16x1xf32> to vector<16x16xf32>
    %333 = arith.mulf %328, %332 : vector<16x16xf32>
    %334 = arith.truncf %333 : vector<16x16xf32> to vector<16x16xbf16>
    %cst_153 = arith.constant dense<0.000000e+00> : vector<16x128xf32>
    %335 = tpu.matmul %334, %321, %cst_153 {dimension_numbers = #tpu.dot_dimension_numbers<[1], [0], [0], [1], [0, 0, 1, 1], [], []>} : vector<16x16xbf16>, vector<16x128xbf16>, vector<16x128xf32> -> vector<16x128xf32>
    %336 = arith.truncf %335 : vector<16x128xf32> to vector<16x128xbf16>
    %c3_154 = arith.constant 3 : index
    %c0_155 = arith.constant 0 : index
    %c0_156 = arith.constant 0 : index
    %337 = vector.load %arg6[%c3_154, %c0_155, %c0_156] : memref<4x128x128xbf16, #tpu.memory_space<vmem>>, vector<1x128x128xbf16>
    %338 = vector.shape_cast %337 : vector<1x128x128xbf16> to vector<128x128xbf16>
    %cst_157 = arith.constant dense<0.000000e+00> : vector<16x128xf32>
    %339 = tpu.matmul %336, %338, %cst_157 {dimension_numbers = #tpu.dot_dimension_numbers<[1], [0], [0], [1], [0, 0, 1, 1], [], []>} : vector<16x128xbf16>, vector<128x128xbf16>, vector<16x128xf32> -> vector<16x128xf32>
    %340 = arith.addf %291, %339 : vector<16x128xf32>
    %c3_158 = arith.constant 3 : index
    %c0_159 = arith.constant 0 : index
    %c0_160 = arith.constant 0 : index
    %341 = vector.load %arg7[%c3_158, %c0_159, %c0_160] : memref<4x1x128xf32, #tpu.memory_space<vmem>>, vector<1x1x128xf32>
    %342 = vector.shape_cast %341 : vector<1x1x128xf32> to vector<1x128xf32>
    %343 = vector.broadcast %342 : vector<1x128xf32> to vector<16x128xf32>
    %344 = arith.addf %340, %343 : vector<16x128xf32>
    %cst_161 = arith.constant dense<0.000000e+00> : vector<16xf32>
    %345 = vector.multi_reduction <add>, %344, %cst_161 [1] : vector<16x128xf32> to vector<16xf32>
    %346 = vector.shape_cast %345 : vector<16xf32> to vector<16x1xf32>
    %cst_162 = arith.constant 1.280000e+02 : f32
    %347 = vector.broadcast %cst_162 : f32 to vector<16x1xf32>
    %348 = arith.divf %346, %347 : vector<16x1xf32>
    %349 = vector.broadcast %348 : vector<16x1xf32> to vector<16x128xf32>
    %350 = arith.subf %344, %349 : vector<16x128xf32>
    %351 = arith.mulf %350, %350 : vector<16x128xf32>
    %cst_163 = arith.constant dense<0.000000e+00> : vector<16xf32>
    %352 = vector.multi_reduction <add>, %351, %cst_163 [1] : vector<16x128xf32> to vector<16xf32>
    %353 = vector.shape_cast %352 : vector<16xf32> to vector<16x1xf32>
    %cst_164 = arith.constant 0.00787401571 : f32
    %354 = vector.broadcast %cst_164 : f32 to vector<16x1xf32>
    %355 = arith.mulf %353, %354 : vector<16x1xf32>
    %356 = math.sqrt %355 : vector<16x1xf32>
    %cst_165 = arith.constant 9.99999997E-7 : f32
    %357 = vector.broadcast %cst_165 : f32 to vector<16x1xf32>
    %358 = arith.addf %356, %357 : vector<16x1xf32>
    %359 = vector.broadcast %358 : vector<16x1xf32> to vector<16x128xf32>
    %360 = arith.divf %350, %359 : vector<16x128xf32>
    %361 = arith.truncf %360 : vector<16x128xf32> to vector<16x128xbf16>
    %c3_166 = arith.constant 3 : index
    %c0_167 = arith.constant 0 : index
    %c0_168 = arith.constant 0 : index
    %362 = vector.load %arg8[%c3_166, %c0_167, %c0_168] : memref<4x128x64xbf16, #tpu.memory_space<vmem>>, vector<1x128x64xbf16>
    %363 = vector.shape_cast %362 : vector<1x128x64xbf16> to vector<128x64xbf16>
    %cst_169 = arith.constant dense<0.000000e+00> : vector<16x64xf32>
    %364 = tpu.matmul %361, %363, %cst_169 {dimension_numbers = #tpu.dot_dimension_numbers<[1], [0], [0], [1], [0, 0, 1, 1], [], []>} : vector<16x128xbf16>, vector<128x64xbf16>, vector<16x64xf32> -> vector<16x64xf32>
    %c3_170 = arith.constant 3 : index
    %c0_171 = arith.constant 0 : index
    %c0_172 = arith.constant 0 : index
    %365 = vector.load %arg9[%c3_170, %c0_171, %c0_172] : memref<4x1x64xf32, #tpu.memory_space<vmem>>, vector<1x1x64xf32>
    %366 = vector.shape_cast %365 : vector<1x1x64xf32> to vector<1x64xf32>
    %367 = vector.broadcast %366 : vector<1x64xf32> to vector<16x64xf32>
    %368 = arith.addf %364, %367 : vector<16x64xf32>
    %cst_173 = arith.constant 0.000000e+00 : f32
    %369 = vector.broadcast %cst_173 : f32 to vector<16x64xf32>
    %370 = arith.maximumf %368, %369 : vector<16x64xf32>
    %371 = arith.truncf %370 : vector<16x64xf32> to vector<16x64xbf16>
    %c3_174 = arith.constant 3 : index
    %c0_175 = arith.constant 0 : index
    %c0_176 = arith.constant 0 : index
    %372 = vector.load %arg10[%c3_174, %c0_175, %c0_176] : memref<4x64x128xbf16, #tpu.memory_space<vmem>>, vector<1x64x128xbf16>
    %373 = vector.shape_cast %372 : vector<1x64x128xbf16> to vector<64x128xbf16>
    %cst_177 = arith.constant dense<0.000000e+00> : vector<16x128xf32>
    %374 = tpu.matmul %371, %373, %cst_177 {dimension_numbers = #tpu.dot_dimension_numbers<[1], [0], [0], [1], [0, 0, 1, 1], [], []>} : vector<16x64xbf16>, vector<64x128xbf16>, vector<16x128xf32> -> vector<16x128xf32>
    %375 = arith.addf %344, %374 : vector<16x128xf32>
    %c3_178 = arith.constant 3 : index
    %c0_179 = arith.constant 0 : index
    %c0_180 = arith.constant 0 : index
    %376 = vector.load %arg11[%c3_178, %c0_179, %c0_180] : memref<4x1x128xf32, #tpu.memory_space<vmem>>, vector<1x1x128xf32>
    %377 = vector.shape_cast %376 : vector<1x1x128xf32> to vector<1x128xf32>
    %378 = vector.broadcast %377 : vector<1x128xf32> to vector<16x128xf32>
    %379 = arith.addf %375, %378 : vector<16x128xf32>
    %cst_181 = arith.constant dense<0.000000e+00> : vector<16xf32>
    %380 = vector.multi_reduction <add>, %379, %cst_181 [1] : vector<16x128xf32> to vector<16xf32>
    %381 = vector.shape_cast %380 : vector<16xf32> to vector<16x1xf32>
    %cst_182 = arith.constant 1.280000e+02 : f32
    %382 = vector.broadcast %cst_182 : f32 to vector<16x1xf32>
    %383 = arith.divf %381, %382 : vector<16x1xf32>
    %384 = vector.broadcast %383 : vector<16x1xf32> to vector<16x128xf32>
    %385 = arith.subf %379, %384 : vector<16x128xf32>
    %386 = arith.mulf %385, %385 : vector<16x128xf32>
    %cst_183 = arith.constant dense<0.000000e+00> : vector<16xf32>
    %387 = vector.multi_reduction <add>, %386, %cst_183 [1] : vector<16x128xf32> to vector<16xf32>
    %388 = vector.shape_cast %387 : vector<16xf32> to vector<16x1xf32>
    %cst_184 = arith.constant 0.00787401571 : f32
    %389 = vector.broadcast %cst_184 : f32 to vector<16x1xf32>
    %390 = arith.mulf %388, %389 : vector<16x1xf32>
    %391 = math.sqrt %390 : vector<16x1xf32>
    %cst_185 = arith.constant 9.99999997E-7 : f32
    %392 = vector.broadcast %cst_185 : f32 to vector<16x1xf32>
    %393 = arith.addf %391, %392 : vector<16x1xf32>
    %394 = vector.broadcast %393 : vector<16x1xf32> to vector<16x128xf32>
    %395 = arith.divf %385, %394 : vector<16x128xf32>
    %396 = arith.truncf %395 : vector<16x128xf32> to vector<16x128xbf16>
    %c0_186 = arith.constant 0 : index
    %c0_187 = arith.constant 0 : index
    %397 = vector.load %arg12[%c0_186, %c0_187] : memref<128x128xbf16, #tpu.memory_space<vmem>>, vector<128x128xbf16>
    %cst_188 = arith.constant dense<0.000000e+00> : vector<16x128xf32>
    %398 = tpu.matmul %396, %397, %cst_188 {dimension_numbers = #tpu.dot_dimension_numbers<[1], [0], [0], [1], [0, 0, 1, 1], [], []>} : vector<16x128xbf16>, vector<128x128xbf16>, vector<16x128xf32> -> vector<16x128xf32>
    %c0_189 = arith.constant 0 : index
    %c0_190 = arith.constant 0 : index
    %399 = vector.load %arg13[%c0_189, %c0_190] : memref<1x128xf32, #tpu.memory_space<vmem>>, vector<1x128xf32>
    %400 = vector.broadcast %399 : vector<1x128xf32> to vector<16x128xf32>
    %401 = arith.addf %398, %400 : vector<16x128xf32>
    %cst_191 = arith.constant 0.000000e+00 : f32
    %402 = vector.broadcast %cst_191 : f32 to vector<16x128xf32>
    %403 = arith.maximumf %401, %402 : vector<16x128xf32>
    %404 = arith.truncf %403 : vector<16x128xf32> to vector<16x128xbf16>
    %c0_192 = arith.constant 0 : index
    %c0_193 = arith.constant 0 : index
    %405 = vector.load %arg14[%c0_192, %c0_193] : memref<128x128xbf16, #tpu.memory_space<vmem>>, vector<128x128xbf16>
    %cst_194 = arith.constant dense<0.000000e+00> : vector<16x128xf32>
    %406 = tpu.matmul %404, %405, %cst_194 {dimension_numbers = #tpu.dot_dimension_numbers<[1], [0], [0], [1], [0, 0, 1, 1], [], []>} : vector<16x128xbf16>, vector<128x128xbf16>, vector<16x128xf32> -> vector<16x128xf32>
    %c0_195 = arith.constant 0 : index
    %c0_196 = arith.constant 0 : index
    %407 = vector.load %arg15[%c0_195, %c0_196] : memref<1x128xf32, #tpu.memory_space<vmem>>, vector<1x128xf32>
    %408 = vector.broadcast %407 : vector<1x128xf32> to vector<16x128xf32>
    %409 = arith.addf %406, %408 : vector<16x128xf32>
    %c0_197 = arith.constant 0 : index
    %c0_198 = arith.constant 0 : index
    %410 = vector.load %arg16[%c0_197, %c0_198] : memref<16x128xf32, #tpu.memory_space<vmem>>, vector<16x128xf32>
    tpu.vector_store %arg16[%c0_197, %c0_198], %409 {strides = array<i32>} : memref<16x128xf32, #tpu.memory_space<vmem>>, vector<16x128xf32>,
    return
  }
}

</mosaic_0001>

<llo_original>
// kernel: transformer_seg_forward.1
$region0: #{transformer_seg_forward.1}
  #allocation0 [shape = 'u32[]', space=smem, size = 0x4, offset = 0x4, fixed_abs, tag = 'smem constant byte address 0x4 - core index']
  #allocation1 [shape = 'u32[144,128]{1,0:T(1,128)}', space=vmem, size = 0x12000, scoped, tag = 'internal scratch']
  %s0 = inlined_call_operand.vmem [shape: f32[16,4], index: 0, kind: input, shape index: {}]
  %s1 = inlined_call_operand.vmem [shape: f32[16,16], index: 1, kind: input, shape index: {}]
  %s2 = inlined_call_operand.vmem [shape: f32[4,128], index: 2, kind: input, shape index: {}]
  %s3 = inlined_call_operand.vmem [shape: f32[1,128], index: 3, kind: input, shape index: {}]
  %s4 = inlined_call_operand.hbm [shape: bf16[4,128,384], index: 4, kind: input, shape index: {}]
  %s5 = inlined_call_operand.vmem [shape: f32[4,1,384], index: 5, kind: input, shape index: {}]
  %s6 = inlined_call_operand.vmem [shape: bf16[4,128,128], index: 6, kind: input, shape index: {}]
  %s7 = inlined_call_operand.vmem [shape: f32[4,1,128], index: 7, kind: input, shape index: {}]
  %s8 = inlined_call_operand.vmem [shape: bf16[4,128,64], index: 8, kind: input, shape index: {}]
  %s9 = inlined_call_operand.vmem [shape: f32[4,1,64], index: 9, kind: input, shape index: {}]
  %s10 = inlined_call_operand.vmem [shape: bf16[4,64,128], index: 10, kind: input, shape index: {}]
  %s11 = inlined_call_operand.vmem [shape: f32[4,1,128], index: 11, kind: input, shape index: {}]
  %s12 = inlined_call_operand.vmem [shape: bf16[128,128], index: 12, kind: input, shape index: {}]
  %s13 = inlined_call_operand.vmem [shape: f32[1,128], index: 13, kind: input, shape index: {}]
  %s14 = inlined_call_operand.hbm [shape: bf16[128,128], index: 14, kind: input, shape index: {}]
  %s15 = inlined_call_operand.vmem [shape: f32[1,128], index: 15, kind: input, shape index: {}]
  %s16 = inlined_call_operand.vmem [shape: f32[16,128], index: 16, kind: output, shape index: {}]
  %s17 = sld [smem:[#allocation0]]
  $region82: #{transformer_seg_forward.1} parent=0
    _
  %s19 = ssub.s32 1, %s17
  %s20 = scalar_select 0, %s19, %s17
  $region1: #{transformer_seg_forward.1} parent=0
    #allocation2 [shape = 'u8[393216]{0}', space=vmem, size = 0x60000, scoped, tag = 'input window, operand 4, single buffered']
    #allocation3 [shape = 's32[1]{0}', space=sflag, size = 0x4, scoped, tag = 'scoped memory for transformer_seg_forward.1']
    #allocation4 [shape = 'u8[32768]{0}', space=vmem, size = 0x8000, scoped, tag = 'input window, operand 14, single buffered']
    #allocation5 [shape = 's32[1]{0}', space=sflag, size = 0x4, scoped, tag = 'scoped memory for transformer_seg_forward.1']
    %21 = vsyncpa [#allocation3], 0
    %22 = vsyncpa [#allocation5], 0
    // Predicated region
    $region2: #{transformer_seg_forward.1} parent=1 // pred_check
      _
    $region3: #{transformer_seg_forward.1} parent=1 // pred_check_branch
      %24 = sbr.rel (0) target = $region5
    $region4: #{transformer_seg_forward.1} parent=1 // pred_region
      _
    $region5: #{transformer_seg_forward.1} parent=1 // pred_fallthru
      _
    // Predicated region
    $region6: #{transformer_seg_forward.1} parent=1 // pred_check
      _
    $region7: #{transformer_seg_forward.1} parent=1 // pred_check_branch
      %26 = sbr.rel (0) target = $region9
    $region8: #{transformer_seg_forward.1} parent=1 // pred_region
      _
    $region9: #{transformer_seg_forward.1} parent=1 // pred_fallthru
      _
    // Predicated region
    $region10: #{transformer_seg_forward.1} parent=1 // pred_check
      _
    $region11: #{transformer_seg_forward.1} parent=1 // pred_check_branch
      %28 = sbr.rel (0) target = $region13
    $region12: #{transformer_seg_forward.1} parent=1 // pred_region
      _
    $region13: #{transformer_seg_forward.1} parent=1 // pred_fallthru
      _
    // Predicated region
    $region14: #{transformer_seg_forward.1} parent=1 // pred_check
      _
    $region15: #{transformer_seg_forward.1} parent=1 // pred_check_branch
      %30 = sbr.rel (0) target = $region17
    $region16: #{transformer_seg_forward.1} parent=1 // pred_region
      _
    $region17: #{transformer_seg_forward.1} parent=1 // pred_fallthru
      _
    // Predicated region
    $region18: #{transformer_seg_forward.1} parent=1 // pred_check
      _
    $region19: #{transformer_seg_forward.1} parent=1 // pred_check_branch
      %32 = sbr.rel (0) target = $region21
    $region20: #{transformer_seg_forward.1} parent=1 // pred_region
      %s34 = ssub.s32 12288, 12288
      %35 = vsyncadd [#allocation3], %s34
      %s36 = sshll.u32 [#allocation2], 4
      %s37 = int_to_ptr.vmem [resolvable:$true] %s36
      %42 = dma.hbm_to_vmem [thread:$0]  %s4, 12288, %s37, [#allocation3], 192, 192, 12
    $region21: #{transformer_seg_forward.1} parent=1 // pred_fallthru
      _
    // Predicated region
    $region22: #{transformer_seg_forward.1} parent=1 // pred_check
      _
    $region23: #{transformer_seg_forward.1} parent=1 // pred_check_branch
      %44 = sbr.rel (0) target = $region25
    $region24: #{transformer_seg_forward.1} parent=1 // pred_region
      _
    $region25: #{transformer_seg_forward.1} parent=1 // pred_fallthru
      _
    // Predicated region
    $region26: #{transformer_seg_forward.1} parent=1 // pred_check
      _
    $region27: #{transformer_seg_forward.1} parent=1 // pred_check_branch
      %46 = sbr.rel (0) target = $region29
    $region28: #{transformer_seg_forward.1} parent=1 // pred_region
      _
    $region29: #{transformer_seg_forward.1} parent=1 // pred_fallthru
      _
    // Predicated region
    $region30: #{transformer_seg_forward.1} parent=1 // pred_check
      _
    $region31: #{transformer_seg_forward.1} parent=1 // pred_check_branch
      %48 = sbr.rel (0) target = $region33
    $region32: #{transformer_seg_forward.1} parent=1 // pred_region
      _
    $region33: #{transformer_seg_forward.1} parent=1 // pred_fallthru
      _
    // Predicated region
    $region34: #{transformer_seg_forward.1} parent=1 // pred_check
      _
    $region35: #{transformer_seg_forward.1} parent=1 // pred_check_branch
      %50 = sbr.rel (0) target = $region37
    $region36: #{transformer_seg_forward.1} parent=1 // pred_region
      _
    $region37: #{transformer_seg_forward.1} parent=1 // pred_fallthru
      _
    // Predicated region
    $region38: #{transformer_seg_forward.1} parent=1 // pred_check
      _
    $region39: #{transformer_seg_forward.1} parent=1 // pred_check_branch
      %52 = sbr.rel (0) target = $region41
    $region40: #{transformer_seg_forward.1} parent=1 // pred_region
      _
    $region41: #{transformer_seg_forward.1} parent=1 // pred_fallthru
      _
    // Predicated region
    $region42: #{transformer_seg_forward.1} parent=1 // pred_check
      _
    $region43: #{transformer_seg_forward.1} parent=1 // pred_check_branch
      %54 = sbr.rel (0) target = $region45
    $region44: #{transformer_seg_forward.1} parent=1 // pred_region
      _
    $region45: #{transformer_seg_forward.1} parent=1 // pred_fallthru
      _
    // Predicated region
    $region46: #{transformer_seg_forward.1} parent=1 // pred_check
      _
    $region47: #{transformer_seg_forward.1} parent=1 // pred_check_branch
      %56 = sbr.rel (0) target = $region49
    $region48: #{transformer_seg_forward.1} parent=1 // pred_region
      _
    $region49: #{transformer_seg_forward.1} parent=1 // pred_fallthru
      _
    // Predicated region
    $region50: #{transformer_seg_forward.1} parent=1 // pred_check
      _
    $region51: #{transformer_seg_forward.1} parent=1 // pred_check_branch
      %58 = sbr.rel (0) target = $region53
    $region52: #{transformer_seg_forward.1} parent=1 // pred_region
      _
    $region53: #{transformer_seg_forward.1} parent=1 // pred_fallthru
      _
    // Predicated region
    $region54: #{transformer_seg_forward.1} parent=1 // pred_check
      _
    $region55: #{transformer_seg_forward.1} parent=1 // pred_check_branch
      %60 = sbr.rel (0) target = $region57
    $region56: #{transformer_seg_forward.1} parent=1 // pred_region
      _
    $region57: #{transformer_seg_forward.1} parent=1 // pred_fallthru
      _
    // Predicated region
    $region58: #{transformer_seg_forward.1} parent=1 // pred_check
      _
    $region59: #{transformer_seg_forward.1} parent=1 // pred_check_branch
      %62 = sbr.rel (0) target = $region61
    $region60: #{transformer_seg_forward.1} parent=1 // pred_region
      %s64 = ssub.s32 1024, 1024
      %65 = vsyncadd [#allocation5], %s64
      %s66 = sshll.u32 [#allocation4], 4
      %s67 = int_to_ptr.vmem [resolvable:$true] %s66
      %72 = dma.hbm_to_vmem [thread:$0]  %s14, 1024, %s67, [#allocation5], 64, 64, 4
    $region61: #{transformer_seg_forward.1} parent=1 // pred_fallthru
      _
    // Predicated region
    $region62: #{transformer_seg_forward.1} parent=1 // pred_check
      _
    $region63: #{transformer_seg_forward.1} parent=1 // pred_check_branch
      %74 = sbr.rel (0) target = $region65
    $region64: #{transformer_seg_forward.1} parent=1 // pred_region
      _
    $region65: #{transformer_seg_forward.1} parent=1 // pred_fallthru
      _
    // Predicated region
    $region66: #{transformer_seg_forward.1} parent=1 // pred_check
      _
    $region67: #{transformer_seg_forward.1} parent=1 // pred_check_branch
      %76 = sbr.rel (0) target = $region69
    $region68: #{transformer_seg_forward.1} parent=1 // pred_region
      %77 = dma.done [#allocation3], 12288
    $region69: #{transformer_seg_forward.1} parent=1 // pred_fallthru
      _
    // Predicated region
    $region70: #{transformer_seg_forward.1} parent=1 // pred_check
      _
    $region71: #{transformer_seg_forward.1} parent=1 // pred_check_branch
      %79 = sbr.rel (0) target = $region73
    $region72: #{transformer_seg_forward.1} parent=1 // pred_region
      %80 = dma.done [#allocation5], 1024
    $region73: #{transformer_seg_forward.1} parent=1 // pred_fallthru
      _
    %v82 = vld [vmem:[%s0] sm:$0xff]
    %v83 = vld [vmem:[%s0 + $0x8] sm:$0xff]
    %v84 = vld [vmem:[%s3] sm:$0x1]
    %v85 = vld [vmem:[%s2] sm:$0x1]
    %87 = vset.pattern.permute.xlu0 0
    %88 = vperm.xlu0 %87, %v82
    %v89 = vpop.permute.xlu0 %88
    %92 = vset.pattern.permute.xlu0 0
    %93 = vperm.xlu0 %92, %v83
    %v94 = vpop.permute.xlu0 %93
    %v96 = vlaneseq
    %v97 = vshrl.u32 %v96, 7
    %v98 = vsub.s32 0, %v97
    %v99 = vrot.slane %v85, %v98
    %v100 = vmul.f32 %v89, %v99
    %v101 = vmul.f32 %v94, %v99
    %v103 = vlaneseq
    %v104 = vshrl.u32 %v103, 7
    %v105 = vsub.s32 0, %v104
    %v106 = vrot.slane %v84, %v105
    %v108 = vadd.f32 %v106, %v100
    %v109 = vadd.f32 %v106, %v101
    %v110 = vld [vmem:[%s2 + $0x1] sm:$0x1]
    %111 = vset.pattern.permute.xlu0 1
    %112 = vperm.xlu0 %111, %v82
    %v113 = vpop.permute.xlu0 %112
    %115 = vset.pattern.permute.xlu0 1
    %116 = vperm.xlu0 %115, %v83
    %v117 = vpop.permute.xlu0 %116
    %v119 = vlaneseq
    %v120 = vshrl.u32 %v119, 7
    %v121 = vsub.s32 0, %v120
    %v122 = vrot.slane %v110, %v121
    %v123 = vmul.f32 %v113, %v122
    %v124 = vmul.f32 %v117, %v122
    %v125 = vadd.f32 %v108, %v123
    %v126 = vadd.f32 %v109, %v124
    %v127 = vld [vmem:[%s2 + $0x2] sm:$0x1]
    %128 = vset.pattern.permute.xlu0 2
    %129 = vperm.xlu0 %128, %v82
    %v130 = vpop.permute.xlu0 %129
    %132 = vset.pattern.permute.xlu0 2
    %133 = vperm.xlu0 %132, %v83
    %v134 = vpop.permute.xlu0 %133
    %v136 = vlaneseq
    %v137 = vshrl.u32 %v136, 7
    %v138 = vsub.s32 0, %v137
    %v139 = vrot.slane %v127, %v138
    %v140 = vmul.f32 %v130, %v139
    %v141 = vmul.f32 %v134, %v139
    %v142 = vadd.f32 %v125, %v140
    %v143 = vadd.f32 %v126, %v141
    %v144 = vld [vmem:[%s2 + $0x3] sm:$0x1]
    %145 = vset.pattern.permute.xlu0 3
    %146 = vperm.xlu0 %145, %v82
    %v147 = vpop.permute.xlu0 %146
    %149 = vset.pattern.permute.xlu0 3
    %150 = vperm.xlu0 %149, %v83
    %v151 = vpop.permute.xlu0 %150
    %v153 = vlaneseq
    %v154 = vshrl.u32 %v153, 7
    %v155 = vsub.s32 0, %v154
    %v156 = vrot.slane %v144, %v155
    %v157 = vmul.f32 %v147, %v156
    %v158 = vmul.f32 %v151, %v156
    %v159 = vadd.f32 %v142, %v157
    %v160 = vadd.f32 %v143, %v158
    %v161 = vld [vmem:[%s1] sm:$0xff]
    %v162 = vld [vmem:[%s1 + $0x8] sm:$0xff]
    %163 = vadd.xlane.f32.xlu0 %v159
    %v164 = vpop.xlane.xlu0 %163
    %165 = vadd.xlane.f32.xlu0 %v160
    %v166 = vpop.xlane.xlu0 %165
    %v167 = vrcp.pop 128.0
    %v168 = vmul.f32 %v164, %v167
    %v169 = vmul.f32 %v166, %v167
    %v170 = vsub.f32 %v159, %v168
    %v171 = vsub.f32 %v160, %v169
    %v172 = vmul.f32 %v170, %v170
    %v173 = vmul.f32 %v171, %v171
    %174 = vadd.xlane.f32.xlu0 %v172
    %v175 = vpop.xlane.xlu0 %174
    %176 = vadd.xlane.f32.xlu0 %v173
    %v177 = vpop.xlane.xlu0 %176
    %v178 = vmul.f32 %v175, 0.007874016
    %v179 = vmul.f32 %v177, 0.007874016
    %v180 = vrsqrt.pop %v178
    %v181 = vmul.f32 %v178, %v180
    %vm182 = vcmp.eq.f32.partialorder %v178, inf
    %v183 = vsel %vm182, %v178, %v181
    %vm184 = vcmp.eq.f32.partialorder %v178, 0.0
    %v185 = vand.u32 %v178, 2147483648
    %v186 = vsel %vm184, %v185, %v183
    %v187 = vrsqrt.pop %v179
    %v188 = vmul.f32 %v179, %v187
    %vm189 = vcmp.eq.f32.partialorder %v179, inf
    %v190 = vsel %vm189, %v179, %v188
    %vm191 = vcmp.eq.f32.partialorder %v179, 0.0
    %v192 = vand.u32 %v179, 2147483648
    %v193 = vsel %vm191, %v192, %v190
    %v194 = vadd.f32 %v186, 1e-06
    %v195 = vadd.f32 %v193, 1e-06
    %v196 = vrcp.pop %v194
    %v197 = vmul.f32 %v170, %v196
    %v198 = vrcp.pop %v195
    %v199 = vmul.f32 %v171, %v198
    %v200 = vpack.c.bf16 %v199, %v197
    %v201 = vld [vmem:[#allocation2] sm:$0xff]
    %v202 = vld [vmem:[#allocation2 + $0x8] sm:$0xf]
    %v203 = vld [vmem:[#allocation2 + $0xc] sm:$0xff]
    %v204 = vld [vmem:[#allocation2 + $0x14] sm:$0xf]
    %v205 = vld [vmem:[#allocation2 + $0x18] sm:$0xff]
    %v206 = vld [vmem:[#allocation2 + $0x20] sm:$0xf]
    %v207 = vld [vmem:[#allocation2 + $0x24] sm:$0xff]
    %v208 = vld [vmem:[#allocation2 + $0x2c] sm:$0xf]
    %v209 = vld [vmem:[#allocation2 + $0x30] sm:$0xff]
    %v210 = vld [vmem:[#allocation2 + $0x38] sm:$0xf]
    %v211 = vld [vmem:[#allocation2 + $0x3c] sm:$0xff]
    %v212 = vld [vmem:[#allocation2 + $0x44] sm:$0xf]
    %v213 = vld [vmem:[#allocation2 + $0x48] sm:$0xff]
    %v214 = vld [vmem:[#allocation2 + $0x50] sm:$0xf]
    %v215 = vld [vmem:[#allocation2 + $0x54] sm:$0xff]
    %v216 = vld [vmem:[#allocation2 + $0x5c] sm:$0xf]
    %v217 = vld [vmem:[#allocation2 + $0x60] sm:$0xff]
    %v218 = vld [vmem:[#allocation2 + $0x68] sm:$0xf]
    %v219 = vld [vmem:[#allocation2 + $0x6c] sm:$0xff]
    %v220 = vld [vmem:[#allocation2 + $0x74] sm:$0xf]
    %v221 = vld [vmem:[#allocation2 + $0x78] sm:$0xff]
    %v222 = vld [vmem:[#allocation2 + $0x80] sm:$0xf]
    %v223 = vld [vmem:[#allocation2 + $0x84] sm:$0xff]
    %v224 = vld [vmem:[#allocation2 + $0x8c] sm:$0xf]
    %v225 = vld [vmem:[#allocation2 + $0x90] sm:$0xff]
    %v226 = vld [vmem:[#allocation2 + $0x98] sm:$0xf]
    %v227 = vld [vmem:[#allocation2 + $0x9c] sm:$0xff]
    %v228 = vld [vmem:[#allocation2 + $0xa4] sm:$0xf]
    %v229 = vld [vmem:[#allocation2 + $0xa8] sm:$0xff]
    %v230 = vld [vmem:[#allocation2 + $0xb0] sm:$0xf]
    %v231 = vld [vmem:[#allocation2 + $0xb4] sm:$0xff]
    %v232 = vld [vmem:[#allocation2 + $0xbc] sm:$0xf]
    %v233 = vld [vmem:[%s5] sm:$0x7]
    %v235 = vlaneseq
    %v236 = vshrl.u32 %v235, 7
    %v237 = vsub.s32 0, %v236
    %v238 = vrot.slane %v233, %v237
    %v239 = vlaneseq
    %v240 = vshrl.u32 %v239, 7
    %v241 = vsub.s32 1, %v240
    %v242 = vrot.slane %v233, %v241
    %v243 = vlaneseq
    %v244 = vshrl.u32 %v243, 7
    %v245 = vsub.s32 2, %v244
    %v246 = vrot.slane %v233, %v245
    %v282 = vunpack.c.l.b16 %v201
    %v283 = vunpack.c.h.b16 %v201
    %v284 = vunpack.c.l.b16 %v202
    %v285 = vunpack.c.l.b16 %v203
    %v286 = vunpack.c.h.b16 %v203
    %v287 = vunpack.c.l.b16 %v204
    %v288 = vunpack.c.l.b16 %v205
    %v289 = vunpack.c.h.b16 %v205
    %v290 = vunpack.c.l.b16 %v206
    %v291 = vunpack.c.l.b16 %v207
    %v292 = vunpack.c.h.b16 %v207
    %v293 = vunpack.c.l.b16 %v208
    %v294 = vunpack.c.l.b16 %v209
    %v295 = vunpack.c.h.b16 %v209
    %v296 = vunpack.c.l.b16 %v210
    %v297 = vunpack.c.l.b16 %v211
    %v298 = vunpack.c.h.b16 %v211
    %v299 = vunpack.c.l.b16 %v212
    %v300 = vunpack.c.l.b16 %v213
    %v301 = vunpack.c.h.b16 %v213
    %v302 = vunpack.c.l.b16 %v214
    %v303 = vunpack.c.l.b16 %v215
    %v304 = vunpack.c.h.b16 %v215
    %v305 = vunpack.c.l.b16 %v216
    %v306 = vunpack.c.l.b16 %v217
    %v307 = vunpack.c.h.b16 %v217
    %v308 = vunpack.c.l.b16 %v218
    %v309 = vunpack.c.l.b16 %v219
    %v310 = vunpack.c.h.b16 %v219
    %v311 = vunpack.c.l.b16 %v220
    %v312 = vunpack.c.l.b16 %v221
    %v313 = vunpack.c.h.b16 %v221
    %v314 = vunpack.c.l.b16 %v222
    %v315 = vunpack.c.l.b16 %v223
    %v316 = vunpack.c.h.b16 %v223
    %v317 = vunpack.c.l.b16 %v224
    %v318 = vunpack.c.l.b16 %v225
    %v319 = vunpack.c.h.b16 %v225
    %v320 = vunpack.c.l.b16 %v226
    %v321 = vunpack.c.l.b16 %v227
    %v322 = vunpack.c.h.b16 %v227
    %v323 = vunpack.c.l.b16 %v228
    %v324 = vunpack.c.l.b16 %v229
    %v325 = vunpack.c.h.b16 %v229
    %v326 = vunpack.c.l.b16 %v230
    %v327 = vunpack.c.l.b16 %v231
    %v328 = vunpack.c.h.b16 %v231
    %v329 = vunpack.c.l.b16 %v232
    %v330 = vpack.c.b16 %v285, %v282
    %v331 = vpack.c.b16 %v286, %v283
    %v332 = vpack.c.b16 %v287, %v284
    %v333 = vpack.c.b16 %v291, %v288
    %v334 = vpack.c.b16 %v292, %v289
    %v335 = vpack.c.b16 %v293, %v290
    %v336 = vpack.c.b16 %v297, %v294
    %v337 = vpack.c.b16 %v298, %v295
    %v338 = vpack.c.b16 %v299, %v296
    %v339 = vpack.c.b16 %v303, %v300
    %v340 = vpack.c.b16 %v304, %v301
    %v341 = vpack.c.b16 %v305, %v302
    %v342 = vpack.c.b16 %v309, %v306
    %v343 = vpack.c.b16 %v310, %v307
    %v344 = vpack.c.b16 %v311, %v308
    %v345 = vpack.c.b16 %v315, %v312
    %v346 = vpack.c.b16 %v316, %v313
    %v347 = vpack.c.b16 %v317, %v314
    %v348 = vpack.c.b16 %v321, %v318
    %v349 = vpack.c.b16 %v322, %v319
    %v350 = vpack.c.b16 %v323, %v320
    %v351 = vpack.c.b16 %v327, %v324
    %v352 = vpack.c.b16 %v328, %v325
    %v353 = vpack.c.b16 %v329, %v326
    %378 = vmatprep.subr.bf16.mxu0 %v331
    %379 = vmatpush1.bf16.msra.mxu0 %v330
    %380 = vmatprep.subr.bf16.mxu0 %v334
    %381 = vmatpush1.bf16.msra.mxu0 %v333
    %382 = vmatprep.subr.bf16.mxu0 %v337
    %383 = vmatpush1.bf16.msra.mxu0 %v336
    %384 = vmatprep.subr.bf16.mxu0 %v340
    %385 = vmatpush1.bf16.msra.mxu0 %v339
    %386 = vmatprep.subr.bf16.mxu0 %v343
    %387 = vmatpush1.bf16.msra.mxu0 %v342
    %388 = vmatprep.subr.bf16.mxu0 %v346
    %389 = vmatpush1.bf16.msra.mxu0 %v345
    %390 = vmatprep.subr.bf16.mxu0 %v349
    %391 = vmatpush1.bf16.msra.mxu0 %v348
    %392 = vmatprep.subr.bf16.mxu0 %v352
    %393 = vmatpush1.bf16.msra.mxu0 %v351
    %394 = vmatprep.subr.bf16.mxu0 0
    %395 = vmatpush1.bf16.msra.mxu0 0
    %396 = vmatprep.subr.bf16.mxu0 0
    %397 = vmatpush1.bf16.msra.mxu0 0
    %398 = vmatprep.subr.bf16.mxu0 0
    %399 = vmatpush1.bf16.msra.mxu0 0
    %400 = vmatprep.subr.bf16.mxu0 0
    %401 = vmatpush1.bf16.msra.mxu0 0
    %402 = vmatprep.subr.bf16.mxu0 0
    %403 = vmatpush1.bf16.msra.mxu0 0
    %404 = vmatprep.subr.bf16.mxu0 0
    %405 = vmatpush1.bf16.msra.mxu0 0
    %406 = vmatprep.subr.bf16.mxu0 0
    %407 = vmatpush1.bf16.msra.mxu0 0
    %408 = vmatprep.subr.bf16.mxu0 0
    %409 = vmatpush1.bf16.msra.mxu0 0
    %410 = vmatprep.mubr.bf16.mxu0 0
    %411 = vmatmul.mubr.bf16.gmra.mrb[0].mxu0 %v200
    %v412 = vpop.f32.mrb[0].mxu0
    %v413 = vadd.f32 %v238, %v412
    %v414 = vpop.f32.mrb[0].mxu0
    %v415 = vadd.f32 %v242, %v414
    %v416 = vpop.f32.mrb[0].mxu0
    %v417 = vadd.f32 %v238, %v416
    %v418 = vpop.f32.mrb[0].mxu0
    %v419 = vadd.f32 %v242, %v418
    %420 = vdwg.mxu0
    %421 = vmatprep.subr.bf16.mxu0 0
    %422 = vmatpush1.bf16.msra.mxu0 %v332
    %423 = vmatprep.subr.bf16.mxu0 0
    %424 = vmatpush1.bf16.msra.mxu0 %v335
    %425 = vmatprep.subr.bf16.mxu0 0
    %426 = vmatpush1.bf16.msra.mxu0 %v338
    %427 = vmatprep.subr.bf16.mxu0 0
    %428 = vmatpush1.bf16.msra.mxu0 %v341
    %429 = vmatprep.subr.bf16.mxu0 0
    %430 = vmatpush1.bf16.msra.mxu0 %v344
    %431 = vmatprep.subr.bf16.mxu0 0
    %432 = vmatpush1.bf16.msra.mxu0 %v347
    %433 = vmatprep.subr.bf16.mxu0 0
    %434 = vmatpush1.bf16.msra.mxu0 %v350
    %435 = vmatprep.subr.bf16.mxu0 0
    %436 = vmatpush1.bf16.msra.mxu0 %v353
    %437 = vmatprep.subr.bf16.mxu0 0
    %438 = vmatpush1.bf16.msra.mxu0 0
    %439 = vmatprep.subr.bf16.mxu0 0
    %440 = vmatpush1.bf16.msra.mxu0 0
    %441 = vmatprep.subr.bf16.mxu0 0
    %442 = vmatpush1.bf16.msra.mxu0 0
    %443 = vmatprep.subr.bf16.mxu0 0
    %444 = vmatpush1.bf16.msra.mxu0 0
    %445 = vmatprep.subr.bf16.mxu0 0
    %446 = vmatpush1.bf16.msra.mxu0 0
    %447 = vmatprep.subr.bf16.mxu0 0
    %448 = vmatpush1.bf16.msra.mxu0 0
    %449 = vmatprep.subr.bf16.mxu0 0
    %450 = vmatpush1.bf16.msra.mxu0 0
    %451 = vmatprep.subr.bf16.mxu0 0
    %452 = vmatpush1.bf16.msra.mxu0 0
    %453 = vmatprep.mubr.bf16.mxu0 0
    %454 = vmatmul.mubr.bf16.gmra.mrb[0].mxu0 %v200
    %v455 = vpop.f32.mrb[0].mxu0
    %v456 = vadd.f32 %v246, %v455
    %v457 = vpop.f32.mrb[0].mxu0
    %v458 = vpop.f32.mrb[0].mxu0
    %v459 = vadd.f32 %v246, %v458
    %v460 = vpop.f32.mrb[0].mxu0
    %461 = vdwg.mxu0
    %v462 = vpack.c.bf16 %v417, %v413
    %v463 = vpack.c.bf16 %v419, %v415
    %v464 = vpack.c.bf16 %v459, %v456
    %465 = vmatprep.subr.bf16.mxu0 0
    %466 = vmatpush1.bf16.xpose.msra.mxu0 %v463
    %467 = vmatprep.subr.bf16.mxu0 0
    %468 = vmatpush1.bf16.xpose.msra.mxu0 0
    %469 = vmatprep.subr.bf16.mxu0 0
    %470 = vmatpush1.bf16.xpose.msra.mxu0 0
    %471 = vmatprep.subr.bf16.mxu0 0
    %472 = vmatpush1.bf16.xpose.msra.mxu0 0
    %473 = vmatprep.subr.bf16.mxu0 0
    %474 = vmatpush1.bf16.xpose.msra.mxu0 0
    %475 = vmatprep.subr.bf16.mxu0 0
    %476 = vmatpush1.bf16.xpose.msra.mxu0 0
    %477 = vmatprep.subr.bf16.mxu0 0
    %478 = vmatpush1.bf16.xpose.msra.mxu0 0
    %479 = vmatprep.subr.bf16.mxu0 0
    %480 = vmatpush1.bf16.xpose.msra.mxu0 0
    %481 = vmatprep.subr.bf16.mxu0 0
    %482 = vmatpush1.bf16.xpose.msra.mxu0 0
    %483 = vmatprep.subr.bf16.mxu0 0
    %484 = vmatpush1.bf16.xpose.msra.mxu0 0
    %485 = vmatprep.subr.bf16.mxu0 0
    %486 = vmatpush1.bf16.xpose.msra.mxu0 0
    %487 = vmatprep.subr.bf16.mxu0 0
    %488 = vmatpush1.bf16.xpose.msra.mxu0 0
    %489 = vmatprep.subr.bf16.mxu0 0
    %490 = vmatpush1.bf16.xpose.msra.mxu0 0
    %491 = vmatprep.subr.bf16.mxu0 0
    %492 = vmatpush1.bf16.xpose.msra.mxu0 0
    %493 = vmatprep.subr.bf16.mxu0 0
    %494 = vmatpush1.bf16.xpose.msra.mxu0 0
    %495 = vmatprep.subr.bf16.mxu0 0
    %496 = vmatpush1.bf16.xpose.msra.mxu0 0
    %497 = vmatprep.mubr.bf16.mxu0 0
    %498 = vmatmul.mubr.bf16.gmra.mrb[0].mxu0 %v462
    %v499 = vpop.f32.mrb[0].mxu0
    %v500 = vadd.f32 %v161, %v499
    %v501 = vpop.f32.mrb[0].mxu0
    %v502 = vpop.f32.mrb[0].mxu0
    %v503 = vadd.f32 %v162, %v502
    %v504 = vpop.f32.mrb[0].mxu0
    %505 = vdwg.mxu0
    %vm506 = vcmask 130048
    %v507 = vsel %vm506, %v500, -inf
    %508 = vmax.xlane.f32.xlu0 %v507
    %v509 = vpop.xlane.xlu0 %508
    %v510 = vsel %vm506, %v503, -inf
    %511 = vmax.xlane.f32.xlu0 %v510
    %v512 = vpop.xlane.xlu0 %511
    %v513 = vsub.f32 %v500, %v509
    %v514 = vsub.f32 %v503, %v512
    %v515 = vmul.f32 %v513, 1.442695
    %v516 = vpow.pop %v515
    %v517 = vmul.f32 %v514, 1.442695
    %v518 = vpow.pop %v517
    %v519 = vsel %vm506, %v516, 0.0
    %520 = vadd.xlane.f32.xlu0 %v519
    %v521 = vpop.xlane.xlu0 %520
    %v522 = vsel %vm506, %v518, 0.0
    %523 = vadd.xlane.f32.xlu0 %v522
    %v524 = vpop.xlane.xlu0 %523
    %v525 = vrcp.pop %v521
    %v526 = vrcp.pop %v524
    %v527 = vmul.f32 %v516, %v525
    %v528 = vmul.f32 %v518, %v526
    %v529 = vpack.c.bf16 %v528, %v527
    %v531 = vsel %vm506, %v529, 0
    %533 = vmatprep.subr.bf16.mxu0 0
    %534 = vmatpush1.bf16.msra.mxu0 %v464
    %535 = vmatprep.subr.bf16.mxu0 0
    %536 = vmatpush1.bf16.msra.mxu0 0
    %537 = vmatprep.subr.bf16.mxu0 0
    %538 = vmatpush1.bf16.msra.mxu0 0
    %539 = vmatprep.subr.bf16.mxu0 0
    %540 = vmatpush1.bf16.msra.mxu0 0
    %541 = vmatprep.subr.bf16.mxu0 0
    %542 = vmatpush1.bf16.msra.mxu0 0
    %543 = vmatprep.subr.bf16.mxu0 0
    %544 = vmatpush1.bf16.msra.mxu0 0
    %545 = vmatprep.subr.bf16.mxu0 0
    %546 = vmatpush1.bf16.msra.mxu0 0
    %547 = vmatprep.subr.bf16.mxu0 0
    %548 = vmatpush1.bf16.msra.mxu0 0
    %549 = vmatprep.subr.bf16.mxu0 0
    %550 = vmatpush1.bf16.msra.mxu0 0
    %551 = vmatprep.subr.bf16.mxu0 0
    %552 = vmatpush1.bf16.msra.mxu0 0
    %553 = vmatprep.subr.bf16.mxu0 0
    %554 = vmatpush1.bf16.msra.mxu0 0
    %555 = vmatprep.subr.bf16.mxu0 0
    %556 = vmatpush1.bf16.msra.mxu0 0
    %557 = vmatprep.subr.bf16.mxu0 0
    %558 = vmatpush1.bf16.msra.mxu0 0
    %559 = vmatprep.subr.bf16.mxu0 0
    %560 = vmatpush1.bf16.msra.mxu0 0
    %561 = vmatprep.subr.bf16.mxu0 0
    %562 = vmatpush1.bf16.msra.mxu0 0
    %563 = vmatprep.subr.bf16.mxu0 0
    %564 = vmatpush1.bf16.msra.mxu0 0
    %565 = vmatprep.mubr.bf16.mxu0 0
    %566 = vmatmul.mubr.bf16.gmra.mrb[0].mxu0 %v531
    %v567 = vpop.f32.mrb[0].mxu0
    %v568 = vadd.f32 0.0, %v567
    %v569 = vpop.f32.mrb[0].mxu0
    %v570 = vpop.f32.mrb[0].mxu0
    %v571 = vadd.f32 0.0, %v570
    %v572 = vpop.f32.mrb[0].mxu0
    %573 = vdwg.mxu0
    %v574 = vpack.c.bf16 %v571, %v568
    %v575 = vld [vmem:[%s6] sm:$0xf]
    %v576 = vld [vmem:[%s6 + $0x4] sm:$0xf]
    %v577 = vld [vmem:[%s6 + $0x8] sm:$0xf]
    %v578 = vld [vmem:[%s6 + $0xc] sm:$0xf]
    %v579 = vld [vmem:[%s6 + $0x10] sm:$0xf]
    %v580 = vld [vmem:[%s6 + $0x14] sm:$0xf]
    %v581 = vld [vmem:[%s6 + $0x18] sm:$0xf]
    %v582 = vld [vmem:[%s6 + $0x1c] sm:$0xf]
    %v583 = vld [vmem:[%s6 + $0x20] sm:$0xf]
    %v584 = vld [vmem:[%s6 + $0x24] sm:$0xf]
    %v585 = vld [vmem:[%s6 + $0x28] sm:$0xf]
    %v586 = vld [vmem:[%s6 + $0x2c] sm:$0xf]
    %v587 = vld [vmem:[%s6 + $0x30] sm:$0xf]
    %v588 = vld [vmem:[%s6 + $0x34] sm:$0xf]
    %v589 = vld [vmem:[%s6 + $0x38] sm:$0xf]
    %v590 = vld [vmem:[%s6 + $0x3c] sm:$0xf]
    %v607 = vunpack.c.l.b16 %v575
    %v608 = vunpack.c.l.b16 %v576
    %v609 = vunpack.c.l.b16 %v577
    %v610 = vunpack.c.l.b16 %v578
    %v611 = vunpack.c.l.b16 %v579
    %v612 = vunpack.c.l.b16 %v580
    %v613 = vunpack.c.l.b16 %v581
    %v614 = vunpack.c.l.b16 %v582
    %v615 = vunpack.c.l.b16 %v583
    %v616 = vunpack.c.l.b16 %v584
    %v617 = vunpack.c.l.b16 %v585
    %v618 = vunpack.c.l.b16 %v586
    %v619 = vunpack.c.l.b16 %v587
    %v620 = vunpack.c.l.b16 %v588
    %v621 = vunpack.c.l.b16 %v589
    %v622 = vunpack.c.l.b16 %v590
    %v623 = vpack.c.b16 %v608, %v607
    %v624 = vpack.c.b16 %v610, %v609
    %v625 = vpack.c.b16 %v612, %v611
    %v626 = vpack.c.b16 %v614, %v613
    %v627 = vpack.c.b16 %v616, %v615
    %v628 = vpack.c.b16 %v618, %v617
    %v629 = vpack.c.b16 %v620, %v619
    %v630 = vpack.c.b16 %v622, %v621
    %639 = vmatprep.subr.bf16.mxu0 0
    %640 = vmatpush1.bf16.msra.mxu0 %v623
    %641 = vmatprep.subr.bf16.mxu0 0
    %642 = vmatpush1.bf16.msra.mxu0 %v624
    %643 = vmatprep.subr.bf16.mxu0 0
    %644 = vmatpush1.bf16.msra.mxu0 %v625
    %645 = vmatprep.subr.bf16.mxu0 0
    %646 = vmatpush1.bf16.msra.mxu0 %v626
    %647 = vmatprep.subr.bf16.mxu0 0
    %648 = vmatpush1.bf16.msra.mxu0 %v627
    %649 = vmatprep.subr.bf16.mxu0 0
    %650 = vmatpush1.bf16.msra.mxu0 %v628
    %651 = vmatprep.subr.bf16.mxu0 0
    %652 = vmatpush1.bf16.msra.mxu0 %v629
    %653 = vmatprep.subr.bf16.mxu0 0
    %654 = vmatpush1.bf16.msra.mxu0 %v630
    %655 = vmatprep.subr.bf16.mxu0 0
    %656 = vmatpush1.bf16.msra.mxu0 0
    %657 = vmatprep.subr.bf16.mxu0 0
    %658 = vmatpush1.bf16.msra.mxu0 0
    %659 = vmatprep.subr.bf16.mxu0 0
    %660 = vmatpush1.bf16.msra.mxu0 0
    %661 = vmatprep.subr.bf16.mxu0 0
    %662 = vmatpush1.bf16.msra.mxu0 0
    %663 = vmatprep.subr.bf16.mxu0 0
    %664 = vmatpush1.bf16.msra.mxu0 0
    %665 = vmatprep.subr.bf16.mxu0 0
    %666 = vmatpush1.bf16.msra.mxu0 0
    %667 = vmatprep.subr.bf16.mxu0 0
    %668 = vmatpush1.bf16.msra.mxu0 0
    %669 = vmatprep.subr.bf16.mxu0 0
    %670 = vmatpush1.bf16.msra.mxu0 0
    %671 = vmatprep.mubr.bf16.mxu0 0
    %672 = vmatmul.mubr.bf16.gmra.mrb[0].mxu0 %v574
    %v673 = vpop.f32.mrb[0].mxu0
    %v674 = vadd.f32 0.0, %v673
    %v675 = vpop.f32.mrb[0].mxu0
    %v676 = vpop.f32.mrb[0].mxu0
    %v677 = vadd.f32 0.0, %v676
    %v678 = vpop.f32.mrb[0].mxu0
    %679 = vdwg.mxu0
    %v680 = vadd.f32 %v159, %v674
    %v681 = vadd.f32 %v160, %v677
    %v682 = vld [vmem:[%s7] sm:$0x1]
    %v684 = vlaneseq
    %v685 = vshrl.u32 %v684, 7
    %v686 = vsub.s32 0, %v685
    %v687 = vrot.slane %v682, %v686
    %v689 = vadd.f32 %v680, %v687
    %v690 = vadd.f32 %v681, %v687
    %691 = vadd.xlane.f32.xlu0 %v689
    %v692 = vpop.xlane.xlu0 %691
    %693 = vadd.xlane.f32.xlu0 %v690
    %v694 = vpop.xlane.xlu0 %693
    %v695 = vmul.f32 %v692, %v167
    %v696 = vmul.f32 %v694, %v167
    %v697 = vsub.f32 %v689, %v695
    %v698 = vsub.f32 %v690, %v696
    %v699 = vmul.f32 %v697, %v697
    %v700 = vmul.f32 %v698, %v698
    %701 = vadd.xlane.f32.xlu0 %v699
    %v702 = vpop.xlane.xlu0 %701
    %703 = vadd.xlane.f32.xlu0 %v700
    %v704 = vpop.xlane.xlu0 %703
    %v705 = vmul.f32 %v702, 0.007874016
    %v706 = vmul.f32 %v704, 0.007874016
    %v707 = vrsqrt.pop %v705
    %v708 = vmul.f32 %v705, %v707
    %vm709 = vcmp.eq.f32.partialorder %v705, inf
    %v710 = vsel %vm709, %v705, %v708
    %vm711 = vcmp.eq.f32.partialorder %v705, 0.0
    %v712 = vand.u32 %v705, 2147483648
    %v713 = vsel %vm711, %v712, %v710
    %v714 = vrsqrt.pop %v706
    %v715 = vmul.f32 %v706, %v714
    %vm716 = vcmp.eq.f32.partialorder %v706, inf
    %v717 = vsel %vm716, %v706, %v715
    %vm718 = vcmp.eq.f32.partialorder %v706, 0.0
    %v719 = vand.u32 %v706, 2147483648
    %v720 = vsel %vm718, %v719, %v717
    %v721 = vadd.f32 %v713, 1e-06
    %v722 = vadd.f32 %v720, 1e-06
    %v723 = vrcp.pop %v721
    %v724 = vmul.f32 %v697, %v723
    %v725 = vrcp.pop %v722
    %v726 = vmul.f32 %v698, %v725
    %v727 = vpack.c.bf16 %v726, %v724
    %v728 = vld [vmem:[%s8] sm:$0xf]
    %v729 = vld [vmem:[%s8 + $0x4] sm:$0xf]
    %v730 = vld [vmem:[%s8 + $0x8] sm:$0xf]
    %v731 = vld [vmem:[%s8 + $0xc] sm:$0xf]
    %v732 = vld [vmem:[%s8 + $0x10] sm:$0xf]
    %v733 = vld [vmem:[%s8 + $0x14] sm:$0xf]
    %v734 = vld [vmem:[%s8 + $0x18] sm:$0xf]
    %v735 = vld [vmem:[%s8 + $0x1c] sm:$0xf]
    %v736 = vld [vmem:[%s8 + $0x20] sm:$0xf]
    %v737 = vld [vmem:[%s8 + $0x24] sm:$0xf]
    %v738 = vld [vmem:[%s8 + $0x28] sm:$0xf]
    %v739 = vld [vmem:[%s8 + $0x2c] sm:$0xf]
    %v740 = vld [vmem:[%s8 + $0x30] sm:$0xf]
    %v741 = vld [vmem:[%s8 + $0x34] sm:$0xf]
    %v742 = vld [vmem:[%s8 + $0x38] sm:$0xf]
    %v743 = vld [vmem:[%s8 + $0x3c] sm:$0xf]
    %v744 = vld [vmem:[%s9] sm:$0x1]
    %v746 = vlaneseq
    %v747 = vshrl.u32 %v746, 7
    %v748 = vsub.s32 0, %v747
    %v749 = vrot.slane %v744, %v748
    %v767 = vunpack.c.l.b16 %v728
    %v768 = vunpack.c.l.b16 %v729
    %v769 = vunpack.c.l.b16 %v730
    %v770 = vunpack.c.l.b16 %v731
    %v771 = vunpack.c.l.b16 %v732
    %v772 = vunpack.c.l.b16 %v733
    %v773 = vunpack.c.l.b16 %v734
    %v774 = vunpack.c.l.b16 %v735
    %v775 = vunpack.c.l.b16 %v736
    %v776 = vunpack.c.l.b16 %v737
    %v777 = vunpack.c.l.b16 %v738
    %v778 = vunpack.c.l.b16 %v739
    %v779 = vunpack.c.l.b16 %v740
    %v780 = vunpack.c.l.b16 %v741
    %v781 = vunpack.c.l.b16 %v742
    %v782 = vunpack.c.l.b16 %v743
    %v783 = vpack.c.b16 %v768, %v767
    %v784 = vpack.c.b16 %v770, %v769
    %v785 = vpack.c.b16 %v772, %v771
    %v786 = vpack.c.b16 %v774, %v773
    %v787 = vpack.c.b16 %v776, %v775
    %v788 = vpack.c.b16 %v778, %v777
    %v789 = vpack.c.b16 %v780, %v779
    %v790 = vpack.c.b16 %v782, %v781
    %799 = vmatprep.subr.bf16.mxu0 0
    %800 = vmatpush1.bf16.msra.mxu0 %v783
    %801 = vmatprep.subr.bf16.mxu0 0
    %802 = vmatpush1.bf16.msra.mxu0 %v784
    %803 = vmatprep.subr.bf16.mxu0 0
    %804 = vmatpush1.bf16.msra.mxu0 %v785
    %805 = vmatprep.subr.bf16.mxu0 0
    %806 = vmatpush1.bf16.msra.mxu0 %v786
    %807 = vmatprep.subr.bf16.mxu0 0
    %808 = vmatpush1.bf16.msra.mxu0 %v787
    %809 = vmatprep.subr.bf16.mxu0 0
    %810 = vmatpush1.bf16.msra.mxu0 %v788
    %811 = vmatprep.subr.bf16.mxu0 0
    %812 = vmatpush1.bf16.msra.mxu0 %v789
    %813 = vmatprep.subr.bf16.mxu0 0
    %814 = vmatpush1.bf16.msra.mxu0 %v790
    %815 = vmatprep.subr.bf16.mxu0 0
    %816 = vmatpush1.bf16.msra.mxu0 0
    %817 = vmatprep.subr.bf16.mxu0 0
    %818 = vmatpush1.bf16.msra.mxu0 0
    %819 = vmatprep.subr.bf16.mxu0 0
    %820 = vmatpush1.bf16.msra.mxu0 0
    %821 = vmatprep.subr.bf16.mxu0 0
    %822 = vmatpush1.bf16.msra.mxu0 0
    %823 = vmatprep.subr.bf16.mxu0 0
    %824 = vmatpush1.bf16.msra.mxu0 0
    %825 = vmatprep.subr.bf16.mxu0 0
    %826 = vmatpush1.bf16.msra.mxu0 0
    %827 = vmatprep.subr.bf16.mxu0 0
    %828 = vmatpush1.bf16.msra.mxu0 0
    %829 = vmatprep.subr.bf16.mxu0 0
    %830 = vmatpush1.bf16.msra.mxu0 0
    %831 = vmatprep.mubr.bf16.mxu0 0
    %832 = vmatmul.mubr.bf16.gmra.mrb[0].mxu0 %v727
    %v833 = vpop.f32.mrb[0].mxu0
    %v834 = vadd.f32 %v749, %v833
    %v835 = vpop.f32.mrb[0].mxu0
    %v836 = vpop.f32.mrb[0].mxu0
    %v837 = vadd.f32 %v749, %v836
    %v838 = vpop.f32.mrb[0].mxu0
    %839 = vdwg.mxu0
    %v840 = vmax.f32 %v834, 0.0
    %v841 = vmax.f32 %v837, 0.0
    %v842 = vpack.c.bf16 %v841, %v840
    %v843 = vld [vmem:[%s10] sm:$0xf]
    %v844 = vld [vmem:[%s10 + $0x4] sm:$0xf]
    %v845 = vld [vmem:[%s10 + $0x8] sm:$0xf]
    %v846 = vld [vmem:[%s10 + $0xc] sm:$0xf]
    %v847 = vld [vmem:[%s10 + $0x10] sm:$0xf]
    %v848 = vld [vmem:[%s10 + $0x14] sm:$0xf]
    %v849 = vld [vmem:[%s10 + $0x18] sm:$0xf]
    %v850 = vld [vmem:[%s10 + $0x1c] sm:$0xf]
    %v859 = vunpack.c.l.b16 %v843
    %v860 = vunpack.c.l.b16 %v844
    %v861 = vunpack.c.l.b16 %v845
    %v862 = vunpack.c.l.b16 %v846
    %v863 = vunpack.c.l.b16 %v847
    %v864 = vunpack.c.l.b16 %v848
    %v865 = vunpack.c.l.b16 %v849
    %v866 = vunpack.c.l.b16 %v850
    %v867 = vpack.c.b16 %v860, %v859
    %v868 = vpack.c.b16 %v862, %v861
    %v869 = vpack.c.b16 %v864, %v863
    %v870 = vpack.c.b16 %v866, %v865
    %vm875 = vcmask 523264
    %v877 = vsel %vm875, %v842, 0
    %879 = vmatprep.subr.bf16.mxu0 0
    %880 = vmatpush1.bf16.msra.mxu0 %v867
    %881 = vmatprep.subr.bf16.mxu0 0
    %882 = vmatpush1.bf16.msra.mxu0 %v868
    %883 = vmatprep.subr.bf16.mxu0 0
    %884 = vmatpush1.bf16.msra.mxu0 %v869
    %885 = vmatprep.subr.bf16.mxu0 0
    %886 = vmatpush1.bf16.msra.mxu0 %v870
    %887 = vmatprep.subr.bf16.mxu0 0
    %888 = vmatpush1.bf16.msra.mxu0 0
    %889 = vmatprep.subr.bf16.mxu0 0
    %890 = vmatpush1.bf16.msra.mxu0 0
    %891 = vmatprep.subr.bf16.mxu0 0
    %892 = vmatpush1.bf16.msra.mxu0 0
    %893 = vmatprep.subr.bf16.mxu0 0
    %894 = vmatpush1.bf16.msra.mxu0 0
    %895 = vmatprep.subr.bf16.mxu0 0
    %896 = vmatpush1.bf16.msra.mxu0 0
    %897 = vmatprep.subr.bf16.mxu0 0
    %898 = vmatpush1.bf16.msra.mxu0 0
    %899 = vmatprep.subr.bf16.mxu0 0
    %900 = vmatpush1.bf16.msra.mxu0 0
    %901 = vmatprep.subr.bf16.mxu0 0
    %902 = vmatpush1.bf16.msra.mxu0 0
    %903 = vmatprep.subr.bf16.mxu0 0
    %904 = vmatpush1.bf16.msra.mxu0 0
    %905 = vmatprep.subr.bf16.mxu0 0
    %906 = vmatpush1.bf16.msra.mxu0 0
    %907 = vmatprep.subr.bf16.mxu0 0
    %908 = vmatpush1.bf16.msra.mxu0 0
    %909 = vmatprep.subr.bf16.mxu0 0
    %910 = vmatpush1.bf16.msra.mxu0 0
    %911 = vmatprep.mubr.bf16.mxu0 0
    %912 = vmatmul.mubr.bf16.gmra.mrb[0].mxu0 %v877
    %v913 = vpop.f32.mrb[0].mxu0
    %v914 = vadd.f32 0.0, %v913
    %v915 = vpop.f32.mrb[0].mxu0
    %v916 = vpop.f32.mrb[0].mxu0
    %v917 = vadd.f32 0.0, %v916
    %v918 = vpop.f32.mrb[0].mxu0
    %919 = vdwg.mxu0
    %v920 = vadd.f32 %v689, %v914
    %v921 = vadd.f32 %v690, %v917
    %v922 = vld [vmem:[%s11] sm:$0x1]
    %v924 = vlaneseq
    %v925 = vshrl.u32 %v924, 7
    %v926 = vsub.s32 0, %v925
    %v927 = vrot.slane %v922, %v926
    %v929 = vadd.f32 %v920, %v927
    %v930 = vadd.f32 %v921, %v927
    %931 = vadd.xlane.f32.xlu0 %v929
    %v932 = vpop.xlane.xlu0 %931
    %933 = vadd.xlane.f32.xlu0 %v930
    %v934 = vpop.xlane.xlu0 %933
    %v935 = vmul.f32 %v932, %v167
    %v936 = vmul.f32 %v934, %v167
    %v937 = vsub.f32 %v929, %v935
    %v938 = vsub.f32 %v930, %v936
    %v939 = vmul.f32 %v937, %v937
    %v940 = vmul.f32 %v938, %v938
    %941 = vadd.xlane.f32.xlu0 %v939
    %v942 = vpop.xlane.xlu0 %941
    %943 = vadd.xlane.f32.xlu0 %v940
    %v944 = vpop.xlane.xlu0 %943
    %v945 = vmul.f32 %v942, 0.007874016
    %v946 = vmul.f32 %v944, 0.007874016
    %v947 = vrsqrt.pop %v945
    %v948 = vmul.f32 %v945, %v947
    %vm949 = vcmp.eq.f32.partialorder %v945, inf
    %v950 = vsel %vm949, %v945, %v948
    %vm951 = vcmp.eq.f32.partialorder %v945, 0.0
    %v952 = vand.u32 %v945, 2147483648
    %v953 = vsel %vm951, %v952, %v950
    %v954 = vrsqrt.pop %v946
    %v955 = vmul.f32 %v946, %v954
    %vm956 = vcmp.eq.f32.partialorder %v946, inf
    %v957 = vsel %vm956, %v946, %v955
    %vm958 = vcmp.eq.f32.partialorder %v946, 0.0
    %v959 = vand.u32 %v946, 2147483648
    %v960 = vsel %vm958, %v959, %v957
    %v961 = vadd.f32 %v953, 1e-06
    %v962 = vadd.f32 %v960, 1e-06
    %v963 = vrcp.pop %v961
    %v964 = vmul.f32 %v937, %v963
    %v965 = vrcp.pop %v962
    %v966 = vmul.f32 %v938, %v965
    %v967 = vpack.c.bf16 %v966, %v964
    %s968 = scalar_lea.vmem [#allocation2], 192
    %v969 = vld [vmem:[%s968] sm:$0xff]
    %v970 = vld [vmem:[%s968 + $0x8] sm:$0xf]
    %v971 = vld [vmem:[%s968 + $0xc] sm:$0xff]
    %v972 = vld [vmem:[%s968 + $0x14] sm:$0xf]
    %v973 = vld [vmem:[%s968 + $0x18] sm:$0xff]
    %v974 = vld [vmem:[%s968 + $0x20] sm:$0xf]
    %v975 = vld [vmem:[%s968 + $0x24] sm:$0xff]
    %v976 = vld [vmem:[%s968 + $0x2c] sm:$0xf]
    %v977 = vld [vmem:[%s968 + $0x30] sm:$0xff]
    %v978 = vld [vmem:[%s968 + $0x38] sm:$0xf]
    %v979 = vld [vmem:[%s968 + $0x3c] sm:$0xff]
    %v980 = vld [vmem:[%s968 + $0x44] sm:$0xf]
    %v981 = vld [vmem:[%s968 + $0x48] sm:$0xff]
    %v982 = vld [vmem:[%s968 + $0x50] sm:$0xf]
    %v983 = vld [vmem:[%s968 + $0x54] sm:$0xff]
    %v984 = vld [vmem:[%s968 + $0x5c] sm:$0xf]
    %v985 = vld [vmem:[%s968 + $0x60] sm:$0xff]
    %v986 = vld [vmem:[%s968 + $0x68] sm:$0xf]
    %v987 = vld [vmem:[%s968 + $0x6c] sm:$0xff]
    %v988 = vld [vmem:[%s968 + $0x74] sm:$0xf]
    %v989 = vld [vmem:[%s968 + $0x78] sm:$0xff]
    %v990 = vld [vmem:[%s968 + $0x80] sm:$0xf]
    %v991 = vld [vmem:[%s968 + $0x84] sm:$0xff]
    %v992 = vld [vmem:[%s968 + $0x8c] sm:$0xf]
    %v993 = vld [vmem:[%s968 + $0x90] sm:$0xff]
    %v994 = vld [vmem:[%s968 + $0x98] sm:$0xf]
    %v995 = vld [vmem:[%s968 + $0x9c] sm:$0xff]
    %v996 = vld [vmem:[%s968 + $0xa4] sm:$0xf]
    %v997 = vld [vmem:[%s968 + $0xa8] sm:$0xff]
    %v998 = vld [vmem:[%s968 + $0xb0] sm:$0xf]
    %v999 = vld [vmem:[%s968 + $0xb4] sm:$0xff]
    %v1000 = vld [vmem:[%s968 + $0xbc] sm:$0xf]
    %s1001 = scalar_lea.vmem %s5, 3
    %v1002 = vld [vmem:[%s1001] sm:$0x7]
    %v1004 = vlaneseq
    %v1005 = vshrl.u32 %v1004, 7
    %v1006 = vsub.s32 0, %v1005
    %v1007 = vrot.slane %v1002, %v1006
    %v1008 = vlaneseq
    %v1009 = vshrl.u32 %v1008, 7
    %v1010 = vsub.s32 1, %v1009
    %v1011 = vrot.slane %v1002, %v1010
    %v1012 = vlaneseq
    %v1013 = vshrl.u32 %v1012, 7
    %v1014 = vsub.s32 2, %v1013
    %v1015 = vrot.slane %v1002, %v1014
    %v1051 = vunpack.c.l.b16 %v969
    %v1052 = vunpack.c.h.b16 %v969
    %v1053 = vunpack.c.l.b16 %v970
    %v1054 = vunpack.c.l.b16 %v971
    %v1055 = vunpack.c.h.b16 %v971
    %v1056 = vunpack.c.l.b16 %v972
    %v1057 = vunpack.c.l.b16 %v973
    %v1058 = vunpack.c.h.b16 %v973
    %v1059 = vunpack.c.l.b16 %v974
    %v1060 = vunpack.c.l.b16 %v975
    %v1061 = vunpack.c.h.b16 %v975
    %v1062 = vunpack.c.l.b16 %v976
    %v1063 = vunpack.c.l.b16 %v977
    %v1064 = vunpack.c.h.b16 %v977
    %v1065 = vunpack.c.l.b16 %v978
    %v1066 = vunpack.c.l.b16 %v979
    %v1067 = vunpack.c.h.b16 %v979
    %v1068 = vunpack.c.l.b16 %v980
    %v1069 = vunpack.c.l.b16 %v981
    %v1070 = vunpack.c.h.b16 %v981
    %v1071 = vunpack.c.l.b16 %v982
    %v1072 = vunpack.c.l.b16 %v983
    %v1073 = vunpack.c.h.b16 %v983
    %v1074 = vunpack.c.l.b16 %v984
    %v1075 = vunpack.c.l.b16 %v985
    %v1076 = vunpack.c.h.b16 %v985
    %v1077 = vunpack.c.l.b16 %v986
    %v1078 = vunpack.c.l.b16 %v987
    %v1079 = vunpack.c.h.b16 %v987
    %v1080 = vunpack.c.l.b16 %v988
    %v1081 = vunpack.c.l.b16 %v989
    %v1082 = vunpack.c.h.b16 %v989
    %v1083 = vunpack.c.l.b16 %v990
    %v1084 = vunpack.c.l.b16 %v991
    %v1085 = vunpack.c.h.b16 %v991
    %v1086 = vunpack.c.l.b16 %v992
    %v1087 = vunpack.c.l.b16 %v993
    %v1088 = vunpack.c.h.b16 %v993
    %v1089 = vunpack.c.l.b16 %v994
    %v1090 = vunpack.c.l.b16 %v995
    %v1091 = vunpack.c.h.b16 %v995
    %v1092 = vunpack.c.l.b16 %v996
    %v1093 = vunpack.c.l.b16 %v997
    %v1094 = vunpack.c.h.b16 %v997
    %v1095 = vunpack.c.l.b16 %v998
    %v1096 = vunpack.c.l.b16 %v999
    %v1097 = vunpack.c.h.b16 %v999
    %v1098 = vunpack.c.l.b16 %v1000
    %v1099 = vpack.c.b16 %v1054, %v1051
    %v1100 = vpack.c.b16 %v1055, %v1052
    %v1101 = vpack.c.b16 %v1056, %v1053
    %v1102 = vpack.c.b16 %v1060, %v1057
    %v1103 = vpack.c.b16 %v1061, %v1058
    %v1104 = vpack.c.b16 %v1062, %v1059
    %v1105 = vpack.c.b16 %v1066, %v1063
    %v1106 = vpack.c.b16 %v1067, %v1064
    %v1107 = vpack.c.b16 %v1068, %v1065
    %v1108 = vpack.c.b16 %v1072, %v1069
    %v1109 = vpack.c.b16 %v1073, %v1070
    %v1110 = vpack.c.b16 %v1074, %v1071
    %v1111 = vpack.c.b16 %v1078, %v1075
    %v1112 = vpack.c.b16 %v1079, %v1076
    %v1113 = vpack.c.b16 %v1080, %v1077
    %v1114 = vpack.c.b16 %v1084, %v1081
    %v1115 = vpack.c.b16 %v1085, %v1082
    %v1116 = vpack.c.b16 %v1086, %v1083
    %v1117 = vpack.c.b16 %v1090, %v1087
    %v1118 = vpack.c.b16 %v1091, %v1088
    %v1119 = vpack.c.b16 %v1092, %v1089
    %v1120 = vpack.c.b16 %v1096, %v1093
    %v1121 = vpack.c.b16 %v1097, %v1094
    %v1122 = vpack.c.b16 %v1098, %v1095
    %1147 = vmatprep.subr.bf16.mxu0 %v1100
    %1148 = vmatpush1.bf16.msra.mxu0 %v1099
    %1149 = vmatprep.subr.bf16.mxu0 %v1103
    %1150 = vmatpush1.bf16.msra.mxu0 %v1102
    %1151 = vmatprep.subr.bf16.mxu0 %v1106
    %1152 = vmatpush1.bf16.msra.mxu0 %v1105
    %1153 = vmatprep.subr.bf16.mxu0 %v1109
    %1154 = vmatpush1.bf16.msra.mxu0 %v1108
    %1155 = vmatprep.subr.bf16.mxu0 %v1112
    %1156 = vmatpush1.bf16.msra.mxu0 %v1111
    %1157 = vmatprep.subr.bf16.mxu0 %v1115
    %1158 = vmatpush1.bf16.msra.mxu0 %v1114
    %1159 = vmatprep.subr.bf16.mxu0 %v1118
    %1160 = vmatpush1.bf16.msra.mxu0 %v1117
    %1161 = vmatprep.subr.bf16.mxu0 %v1121
    %1162 = vmatpush1.bf16.msra.mxu0 %v1120
    %1163 = vmatprep.subr.bf16.mxu0 0
    %1164 = vmatpush1.bf16.msra.mxu0 0
    %1165 = vmatprep.subr.bf16.mxu0 0
    %1166 = vmatpush1.bf16.msra.mxu0 0
    %1167 = vmatprep.subr.bf16.mxu0 0
    %1168 = vmatpush1.bf16.msra.mxu0 0
    %1169 = vmatprep.subr.bf16.mxu0 0
    %1170 = vmatpush1.bf16.msra.mxu0 0
    %1171 = vmatprep.subr.bf16.mxu0 0
    %1172 = vmatpush1.bf16.msra.mxu0 0
    %1173 = vmatprep.subr.bf16.mxu0 0
    %1174 = vmatpush1.bf16.msra.mxu0 0
    %1175 = vmatprep.subr.bf16.mxu0 0
    %1176 = vmatpush1.bf16.msra.mxu0 0
    %1177 = vmatprep.subr.bf16.mxu0 0
    %1178 = vmatpush1.bf16.msra.mxu0 0
    %1179 = vmatprep.mubr.bf16.mxu0 0
    %1180 = vmatmul.mubr.bf16.gmra.mrb[0].mxu0 %v967
    %v1181 = vpop.f32.mrb[0].mxu0
    %v1182 = vadd.f32 %v1007, %v1181
    %v1183 = vpop.f32.mrb[0].mxu0
    %v1184 = vadd.f32 %v1011, %v1183
    %v1185 = vpop.f32.mrb[0].mxu0
    %v1186 = vadd.f32 %v1007, %v1185
    %v1187 = vpop.f32.mrb[0].mxu0
    %v1188 = vadd.f32 %v1011, %v1187
    %1189 = vdwg.mxu0
    %1190 = vmatprep.subr.bf16.mxu0 0
    %1191 = vmatpush1.bf16.msra.mxu0 %v1101
    %1192 = vmatprep.subr.bf16.mxu0 0
    %1193 = vmatpush1.bf16.msra.mxu0 %v1104
    %1194 = vmatprep.subr.bf16.mxu0 0
    %1195 = vmatpush1.bf16.msra.mxu0 %v1107
    %1196 = vmatprep.subr.bf16.mxu0 0
    %1197 = vmatpush1.bf16.msra.mxu0 %v1110
    %1198 = vmatprep.subr.bf16.mxu0 0
    %1199 = vmatpush1.bf16.msra.mxu0 %v1113
    %1200 = vmatprep.subr.bf16.mxu0 0
    %1201 = vmatpush1.bf16.msra.mxu0 %v1116
    %1202 = vmatprep.subr.bf16.mxu0 0
    %1203 = vmatpush1.bf16.msra.mxu0 %v1119
    %1204 = vmatprep.subr.bf16.mxu0 0
    %1205 = vmatpush1.bf16.msra.mxu0 %v1122
    %1206 = vmatprep.subr.bf16.mxu0 0
    %1207 = vmatpush1.bf16.msra.mxu0 0
    %1208 = vmatprep.subr.bf16.mxu0 0
    %1209 = vmatpush1.bf16.msra.mxu0 0
    %1210 = vmatprep.subr.bf16.mxu0 0
    %1211 = vmatpush1.bf16.msra.mxu0 0
    %1212 = vmatprep.subr.bf16.mxu0 0
    %1213 = vmatpush1.bf16.msra.mxu0 0
    %1214 = vmatprep.subr.bf16.mxu0 0
    %1215 = vmatpush1.bf16.msra.mxu0 0
    %1216 = vmatprep.subr.bf16.mxu0 0
    %1217 = vmatpush1.bf16.msra.mxu0 0
    %1218 = vmatprep.subr.bf16.mxu0 0
    %1219 = vmatpush1.bf16.msra.mxu0 0
    %1220 = vmatprep.subr.bf16.mxu0 0
    %1221 = vmatpush1.bf16.msra.mxu0 0
    %1222 = vmatprep.mubr.bf16.mxu0 0
    %1223 = vmatmul.mubr.bf16.gmra.mrb[0].mxu0 %v967
    %v1224 = vpop.f32.mrb[0].mxu0
    %v1225 = vadd.f32 %v1015, %v1224
    %v1226 = vpop.f32.mrb[0].mxu0
    %v1227 = vpop.f32.mrb[0].mxu0
    %v1228 = vadd.f32 %v1015, %v1227
    %v1229 = vpop.f32.mrb[0].mxu0
    %1230 = vdwg.mxu0
    %v1231 = vpack.c.bf16 %v1186, %v1182
    %v1232 = vpack.c.bf16 %v1188, %v1184
    %v1233 = vpack.c.bf16 %v1228, %v1225
    %1234 = vmatprep.subr.bf16.mxu0 0
    %1235 = vmatpush1.bf16.xpose.msra.mxu0 %v1232
    %1236 = vmatprep.subr.bf16.mxu0 0
    %1237 = vmatpush1.bf16.xpose.msra.mxu0 0
    %1238 = vmatprep.subr.bf16.mxu0 0
    %1239 = vmatpush1.bf16.xpose.msra.mxu0 0
    %1240 = vmatprep.subr.bf16.mxu0 0
    %1241 = vmatpush1.bf16.xpose.msra.mxu0 0
    %1242 = vmatprep.subr.bf16.mxu0 0
    %1243 = vmatpush1.bf16.xpose.msra.mxu0 0
    %1244 = vmatprep.subr.bf16.mxu0 0
    %1245 = vmatpush1.bf16.xpose.msra.mxu0 0
    %1246 = vmatprep.subr.bf16.mxu0 0
    %1247 = vmatpush1.bf16.xpose.msra.mxu0 0
    %1248 = vmatprep.subr.bf16.mxu0 0
    %1249 = vmatpush1.bf16.xpose.msra.mxu0 0
    %1250 = vmatprep.subr.bf16.mxu0 0
    %1251 = vmatpush1.bf16.xpose.msra.mxu0 0
    %1252 = vmatprep.subr.bf16.mxu0 0
    %1253 = vmatpush1.bf16.xpose.msra.mxu0 0
    %1254 = vmatprep.subr.bf16.mxu0 0
    %1255 = vmatpush1.bf16.xpose.msra.mxu0 0
    %1256 = vmatprep.subr.bf16.mxu0 0
    %1257 = vmatpush1.bf16.xpose.msra.mxu0 0
    %1258 = vmatprep.subr.bf16.mxu0 0
    %1259 = vmatpush1.bf16.xpose.msra.mxu0 0
    %1260 = vmatprep.subr.bf16.mxu0 0
    %1261 = vmatpush1.bf16.xpose.msra.mxu0 0
    %1262 = vmatprep.subr.bf16.mxu0 0
    %1263 = vmatpush1.bf16.xpose.msra.mxu0 0
    %1264 = vmatprep.subr.bf16.mxu0 0
    %1265 = vmatpush1.bf16.xpose.msra.mxu0 0
    %1266 = vmatprep.mubr.bf16.mxu0 0
    %1267 = vmatmul.mubr.bf16.gmra.mrb[0].mxu0 %v1231
    %v1268 = vpop.f32.mrb[0].mxu0
    %v1269 = vadd.f32 %v161, %v1268
    %v1270 = vpop.f32.mrb[0].mxu0
    %v1271 = vpop.f32.mrb[0].mxu0
    %v1272 = vadd.f32 %v162, %v1271
    %v1273 = vpop.f32.mrb[0].mxu0
    %1274 = vdwg.mxu0
    %v1275 = vsel %vm506, %v1269, -inf
    %1276 = vmax.xlane.f32.xlu0 %v1275
    %v1277 = vpop.xlane.xlu0 %1276
    %v1278 = vsel %vm506, %v1272, -inf
    %1279 = vmax.xlane.f32.xlu0 %v1278
    %v1280 = vpop.xlane.xlu0 %1279
    %v1281 = vsub.f32 %v1269, %v1277
    %v1282 = vsub.f32 %v1272, %v1280
    %v1283 = vmul.f32 %v1281, 1.442695
    %v1284 = vpow.pop %v1283
    %v1285 = vmul.f32 %v1282, 1.442695
    %v1286 = vpow.pop %v1285
    %v1287 = vsel %vm506, %v1284, 0.0
    %1288 = vadd.xlane.f32.xlu0 %v1287
    %v1289 = vpop.xlane.xlu0 %1288
    %v1290 = vsel %vm506, %v1286, 0.0
    %1291 = vadd.xlane.f32.xlu0 %v1290
    %v1292 = vpop.xlane.xlu0 %1291
    %v1293 = vrcp.pop %v1289
    %v1294 = vrcp.pop %v1292
    %v1295 = vmul.f32 %v1284, %v1293
    %v1296 = vmul.f32 %v1286, %v1294
    %v1297 = vpack.c.bf16 %v1296, %v1295
    %v1299 = vsel %vm506, %v1297, 0
    %1301 = vmatprep.subr.bf16.mxu0 0
    %1302 = vmatpush1.bf16.msra.mxu0 %v1233
    %1303 = vmatprep.subr.bf16.mxu0 0
    %1304 = vmatpush1.bf16.msra.mxu0 0
    %1305 = vmatprep.subr.bf16.mxu0 0
    %1306 = vmatpush1.bf16.msra.mxu0 0
    %1307 = vmatprep.subr.bf16.mxu0 0
    %1308 = vmatpush1.bf16.msra.mxu0 0
    %1309 = vmatprep.subr.bf16.mxu0 0
    %1310 = vmatpush1.bf16.msra.mxu0 0
    %1311 = vmatprep.subr.bf16.mxu0 0
    %1312 = vmatpush1.bf16.msra.mxu0 0
    %1313 = vmatprep.subr.bf16.mxu0 0
    %1314 = vmatpush1.bf16.msra.mxu0 0
    %1315 = vmatprep.subr.bf16.mxu0 0
    %1316 = vmatpush1.bf16.msra.mxu0 0
    %1317 = vmatprep.subr.bf16.mxu0 0
    %1318 = vmatpush1.bf16.msra.mxu0 0
    %1319 = vmatprep.subr.bf16.mxu0 0
    %1320 = vmatpush1.bf16.msra.mxu0 0
    %1321 = vmatprep.subr.bf16.mxu0 0
    %1322 = vmatpush1.bf16.msra.mxu0 0
    %1323 = vmatprep.subr.bf16.mxu0 0
    %1324 = vmatpush1.bf16.msra.mxu0 0
    %1325 = vmatprep.subr.bf16.mxu0 0
    %1326 = vmatpush1.bf16.msra.mxu0 0
    %1327 = vmatprep.subr.bf16.mxu0 0
    %1328 = vmatpush1.bf16.msra.mxu0 0
    %1329 = vmatprep.subr.bf16.mxu0 0
    %1330 = vmatpush1.bf16.msra.mxu0 0
    %1331 = vmatprep.subr.bf16.mxu0 0
    %1332 = vmatpush1.bf16.msra.mxu0 0
    %1333 = vmatprep.mubr.bf16.mxu0 0
    %1334 = vmatmul.mubr.bf16.gmra.mrb[0].mxu0 %v1299
    %v1335 = vpop.f32.mrb[0].mxu0
    %v1336 = vadd.f32 0.0, %v1335
    %v1337 = vpop.f32.mrb[0].mxu0
    %v1338 = vpop.f32.mrb[0].mxu0
    %v1339 = vadd.f32 0.0, %v1338
    %v1340 = vpop.f32.mrb[0].mxu0
    %1341 = vdwg.mxu0
    %v1342 = vpack.c.bf16 %v1339, %v1336
    %s1343 = scalar_lea.vmem %s6, 64
    %v1344 = vld [vmem:[%s1343] sm:$0xf]
    %v1345 = vld [vmem:[%s1343 + $0x4] sm:$0xf]
    %v1346 = vld [vmem:[%s1343 + $0x8] sm:$0xf]
    %v1347 = vld [vmem:[%s1343 + $0xc] sm:$0xf]
    %v1348 = vld [vmem:[%s1343 + $0x10] sm:$0xf]
    %v1349 = vld [vmem:[%s1343 + $0x14] sm:$0xf]
    %v1350 = vld [vmem:[%s1343 + $0x18] sm:$0xf]
    %v1351 = vld [vmem:[%s1343 + $0x1c] sm:$0xf]
    %v1352 = vld [vmem:[%s1343 + $0x20] sm:$0xf]
    %v1353 = vld [vmem:[%s1343 + $0x24] sm:$0xf]
    %v1354 = vld [vmem:[%s1343 + $0x28] sm:$0xf]
    %v1355 = vld [vmem:[%s1343 + $0x2c] sm:$0xf]
    %v1356 = vld [vmem:[%s1343 + $0x30] sm:$0xf]
    %v1357 = vld [vmem:[%s1343 + $0x34] sm:$0xf]
    %v1358 = vld [vmem:[%s1343 + $0x38] sm:$0xf]
    %v1359 = vld [vmem:[%s1343 + $0x3c] sm:$0xf]
    %v1376 = vunpack.c.l.b16 %v1344
    %v1377 = vunpack.c.l.b16 %v1345
    %v1378 = vunpack.c.l.b16 %v1346
    %v1379 = vunpack.c.l.b16 %v1347
    %v1380 = vunpack.c.l.b16 %v1348
    %v1381 = vunpack.c.l.b16 %v1349
    %v1382 = vunpack.c.l.b16 %v1350
    %v1383 = vunpack.c.l.b16 %v1351
    %v1384 = vunpack.c.l.b16 %v1352
    %v1385 = vunpack.c.l.b16 %v1353
    %v1386 = vunpack.c.l.b16 %v1354
    %v1387 = vunpack.c.l.b16 %v1355
    %v1388 = vunpack.c.l.b16 %v1356
    %v1389 = vunpack.c.l.b16 %v1357
    %v1390 = vunpack.c.l.b16 %v1358
    %v1391 = vunpack.c.l.b16 %v1359
    %v1392 = vpack.c.b16 %v1377, %v1376
    %v1393 = vpack.c.b16 %v1379, %v1378
    %v1394 = vpack.c.b16 %v1381, %v1380
    %v1395 = vpack.c.b16 %v1383, %v1382
    %v1396 = vpack.c.b16 %v1385, %v1384
    %v1397 = vpack.c.b16 %v1387, %v1386
    %v1398 = vpack.c.b16 %v1389, %v1388
    %v1399 = vpack.c.b16 %v1391, %v1390
    %1408 = vmatprep.subr.bf16.mxu0 0
    %1409 = vmatpush1.bf16.msra.mxu0 %v1392
    %1410 = vmatprep.subr.bf16.mxu0 0
    %1411 = vmatpush1.bf16.msra.mxu0 %v1393
    %1412 = vmatprep.subr.bf16.mxu0 0
    %1413 = vmatpush1.bf16.msra.mxu0 %v1394
    %1414 = vmatprep.subr.bf16.mxu0 0
    %1415 = vmatpush1.bf16.msra.mxu0 %v1395
    %1416 = vmatprep.subr.bf16.mxu0 0
    %1417 = vmatpush1.bf16.msra.mxu0 %v1396
    %1418 = vmatprep.subr.bf16.mxu0 0
    %1419 = vmatpush1.bf16.msra.mxu0 %v1397
    %1420 = vmatprep.subr.bf16.mxu0 0
    %1421 = vmatpush1.bf16.msra.mxu0 %v1398
    %1422 = vmatprep.subr.bf16.mxu0 0
    %1423 = vmatpush1.bf16.msra.mxu0 %v1399
    %1424 = vmatprep.subr.bf16.mxu0 0
    %1425 = vmatpush1.bf16.msra.mxu0 0
    %1426 = vmatprep.subr.bf16.mxu0 0
    %1427 = vmatpush1.bf16.msra.mxu0 0
    %1428 = vmatprep.subr.bf16.mxu0 0
    %1429 = vmatpush1.bf16.msra.mxu0 0
    %1430 = vmatprep.subr.bf16.mxu0 0
    %1431 = vmatpush1.bf16.msra.mxu0 0
    %1432 = vmatprep.subr.bf16.mxu0 0
    %1433 = vmatpush1.bf16.msra.mxu0 0
    %1434 = vmatprep.subr.bf16.mxu0 0
    %1435 = vmatpush1.bf16.msra.mxu0 0
    %1436 = vmatprep.subr.bf16.mxu0 0
    %1437 = vmatpush1.bf16.msra.mxu0 0
    %1438 = vmatprep.subr.bf16.mxu0 0
    %1439 = vmatpush1.bf16.msra.mxu0 0
    %1440 = vmatprep.mubr.bf16.mxu0 0
    %1441 = vmatmul.mubr.bf16.gmra.mrb[0].mxu0 %v1342
    %v1442 = vpop.f32.mrb[0].mxu0
    %v1443 = vadd.f32 0.0, %v1442
    %v1444 = vpop.f32.mrb[0].mxu0
    %v1445 = vpop.f32.mrb[0].mxu0
    %v1446 = vadd.f32 0.0, %v1445
    %v1447 = vpop.f32.mrb[0].mxu0
    %1448 = vdwg.mxu0
    %v1449 = vadd.f32 %v929, %v1443
    %v1450 = vadd.f32 %v930, %v1446
    %s1451 = scalar_lea.vmem %s7, 1
    %v1452 = vld [vmem:[%s1451] sm:$0x1]
    %v1454 = vlaneseq
    %v1455 = vshrl.u32 %v1454, 7
    %v1456 = vsub.s32 0, %v1455
    %v1457 = vrot.slane %v1452, %v1456
    %v1459 = vadd.f32 %v1449, %v1457
    %v1460 = vadd.f32 %v1450, %v1457
    %1461 = vadd.xlane.f32.xlu0 %v1459
    %v1462 = vpop.xlane.xlu0 %1461
    %1463 = vadd.xlane.f32.xlu0 %v1460
    %v1464 = vpop.xlane.xlu0 %1463
    %v1465 = vmul.f32 %v1462, %v167
    %v1466 = vmul.f32 %v1464, %v167
    %v1467 = vsub.f32 %v1459, %v1465
    %v1468 = vsub.f32 %v1460, %v1466
    %v1469 = vmul.f32 %v1467, %v1467
    %v1470 = vmul.f32 %v1468, %v1468
    %1471 = vadd.xlane.f32.xlu0 %v1469
    %v1472 = vpop.xlane.xlu0 %1471
    %1473 = vadd.xlane.f32.xlu0 %v1470
    %v1474 = vpop.xlane.xlu0 %1473
    %v1475 = vmul.f32 %v1472, 0.007874016
    %v1476 = vmul.f32 %v1474, 0.007874016
    %v1477 = vrsqrt.pop %v1475
    %v1478 = vmul.f32 %v1475, %v1477
    %vm1479 = vcmp.eq.f32.partialorder %v1475, inf
    %v1480 = vsel %vm1479, %v1475, %v1478
    %vm1481 = vcmp.eq.f32.partialorder %v1475, 0.0
    %v1482 = vand.u32 %v1475, 2147483648
    %v1483 = vsel %vm1481, %v1482, %v1480
    %v1484 = vrsqrt.pop %v1476
    %v1485 = vmul.f32 %v1476, %v1484
    %vm1486 = vcmp.eq.f32.partialorder %v1476, inf
    %v1487 = vsel %vm1486, %v1476, %v1485
    %vm1488 = vcmp.eq.f32.partialorder %v1476, 0.0
    %v1489 = vand.u32 %v1476, 2147483648
    %v1490 = vsel %vm1488, %v1489, %v1487
    %v1491 = vadd.f32 %v1483, 1e-06
    %v1492 = vadd.f32 %v1490, 1e-06
    %v1493 = vrcp.pop %v1491
    %v1494 = vmul.f32 %v1467, %v1493
    %v1495 = vrcp.pop %v1492
    %v1496 = vmul.f32 %v1468, %v1495
    %v1497 = vpack.c.bf16 %v1496, %v1494
    %s1498 = scalar_lea.vmem %s8, 64
    %v1499 = vld [vmem:[%s1498] sm:$0xf]
    %v1500 = vld [vmem:[%s1498 + $0x4] sm:$0xf]
    %v1501 = vld [vmem:[%s1498 + $0x8] sm:$0xf]
    %v1502 = vld [vmem:[%s1498 + $0xc] sm:$0xf]
    %v1503 = vld [vmem:[%s1498 + $0x10] sm:$0xf]
    %v1504 = vld [vmem:[%s1498 + $0x14] sm:$0xf]
    %v1505 = vld [vmem:[%s1498 + $0x18] sm:$0xf]
    %v1506 = vld [vmem:[%s1498 + $0x1c] sm:$0xf]
    %v1507 = vld [vmem:[%s1498 + $0x20] sm:$0xf]
    %v1508 = vld [vmem:[%s1498 + $0x24] sm:$0xf]
    %v1509 = vld [vmem:[%s1498 + $0x28] sm:$0xf]
    %v1510 = vld [vmem:[%s1498 + $0x2c] sm:$0xf]
    %v1511 = vld [vmem:[%s1498 + $0x30] sm:$0xf]
    %v1512 = vld [vmem:[%s1498 + $0x34] sm:$0xf]
    %v1513 = vld [vmem:[%s1498 + $0x38] sm:$0xf]
    %v1514 = vld [vmem:[%s1498 + $0x3c] sm:$0xf]
    %s1515 = scalar_lea.vmem %s9, 1
    %v1516 = vld [vmem:[%s1515] sm:$0x1]
    %v1518 = vlaneseq
    %v1519 = vshrl.u32 %v1518, 7
    %v1520 = vsub.s32 0, %v1519
    %v1521 = vrot.slane %v1516, %v1520
    %v1539 = vunpack.c.l.b16 %v1499
    %v1540 = vunpack.c.l.b16 %v1500
    %v1541 = vunpack.c.l.b16 %v1501
    %v1542 = vunpack.c.l.b16 %v1502
    %v1543 = vunpack.c.l.b16 %v1503
    %v1544 = vunpack.c.l.b16 %v1504
    %v1545 = vunpack.c.l.b16 %v1505
    %v1546 = vunpack.c.l.b16 %v1506
    %v1547 = vunpack.c.l.b16 %v1507
    %v1548 = vunpack.c.l.b16 %v1508
    %v1549 = vunpack.c.l.b16 %v1509
    %v1550 = vunpack.c.l.b16 %v1510
    %v1551 = vunpack.c.l.b16 %v1511
    %v1552 = vunpack.c.l.b16 %v1512
    %v1553 = vunpack.c.l.b16 %v1513
    %v1554 = vunpack.c.l.b16 %v1514
    %v1555 = vpack.c.b16 %v1540, %v1539
    %v1556 = vpack.c.b16 %v1542, %v1541
    %v1557 = vpack.c.b16 %v1544, %v1543
    %v1558 = vpack.c.b16 %v1546, %v1545
    %v1559 = vpack.c.b16 %v1548, %v1547
    %v1560 = vpack.c.b16 %v1550, %v1549
    %v1561 = vpack.c.b16 %v1552, %v1551
    %v1562 = vpack.c.b16 %v1554, %v1553
    %1571 = vmatprep.subr.bf16.mxu0 0
    %1572 = vmatpush1.bf16.msra.mxu0 %v1555
    %1573 = vmatprep.subr.bf16.mxu0 0
    %1574 = vmatpush1.bf16.msra.mxu0 %v1556
    %1575 = vmatprep.subr.bf16.mxu0 0
    %1576 = vmatpush1.bf16.msra.mxu0 %v1557
    %1577 = vmatprep.subr.bf16.mxu0 0
    %1578 = vmatpush1.bf16.msra.mxu0 %v1558
    %1579 = vmatprep.subr.bf16.mxu0 0
    %1580 = vmatpush1.bf16.msra.mxu0 %v1559
    %1581 = vmatprep.subr.bf16.mxu0 0
    %1582 = vmatpush1.bf16.msra.mxu0 %v1560
    %1583 = vmatprep.subr.bf16.mxu0 0
    %1584 = vmatpush1.bf16.msra.mxu0 %v1561
    %1585 = vmatprep.subr.bf16.mxu0 0
    %1586 = vmatpush1.bf16.msra.mxu0 %v1562
    %1587 = vmatprep.subr.bf16.mxu0 0
    %1588 = vmatpush1.bf16.msra.mxu0 0
    %1589 = vmatprep.subr.bf16.mxu0 0
    %1590 = vmatpush1.bf16.msra.mxu0 0
    %1591 = vmatprep.subr.bf16.mxu0 0
    %1592 = vmatpush1.bf16.msra.mxu0 0
    %1593 = vmatprep.subr.bf16.mxu0 0
    %1594 = vmatpush1.bf16.msra.mxu0 0
    %1595 = vmatprep.subr.bf16.mxu0 0
    %1596 = vmatpush1.bf16.msra.mxu0 0
    %1597 = vmatprep.subr.bf16.mxu0 0
    %1598 = vmatpush1.bf16.msra.mxu0 0
    %1599 = vmatprep.subr.bf16.mxu0 0
    %1600 = vmatpush1.bf16.msra.mxu0 0
    %1601 = vmatprep.subr.bf16.mxu0 0
    %1602 = vmatpush1.bf16.msra.mxu0 0
    %1603 = vmatprep.mubr.bf16.mxu0 0
    %1604 = vmatmul.mubr.bf16.gmra.mrb[0].mxu0 %v1497
    %v1605 = vpop.f32.mrb[0].mxu0
    %v1606 = vadd.f32 %v1521, %v1605
    %v1607 = vpop.f32.mrb[0].mxu0
    %v1608 = vpop.f32.mrb[0].mxu0
    %v1609 = vadd.f32 %v1521, %v1608
    %v1610 = vpop.f32.mrb[0].mxu0
    %1611 = vdwg.mxu0
    %v1612 = vmax.f32 %v1606, 0.0
    %v1613 = vmax.f32 %v1609, 0.0
    %v1614 = vpack.c.bf16 %v1613, %v1612
    %s1615 = scalar_lea.vmem %s10, 32
    %v1616 = vld [vmem:[%s1615] sm:$0xf]
    %v1617 = vld [vmem:[%s1615 + $0x4] sm:$0xf]
    %v1618 = vld [vmem:[%s1615 + $0x8] sm:$0xf]
    %v1619 = vld [vmem:[%s1615 + $0xc] sm:$0xf]
    %v1620 = vld [vmem:[%s1615 + $0x10] sm:$0xf]
    %v1621 = vld [vmem:[%s1615 + $0x14] sm:$0xf]
    %v1622 = vld [vmem:[%s1615 + $0x18] sm:$0xf]
    %v1623 = vld [vmem:[%s1615 + $0x1c] sm:$0xf]
    %v1632 = vunpack.c.l.b16 %v1616
    %v1633 = vunpack.c.l.b16 %v1617
    %v1634 = vunpack.c.l.b16 %v1618
    %v1635 = vunpack.c.l.b16 %v1619
    %v1636 = vunpack.c.l.b16 %v1620
    %v1637 = vunpack.c.l.b16 %v1621
    %v1638 = vunpack.c.l.b16 %v1622
    %v1639 = vunpack.c.l.b16 %v1623
    %v1640 = vpack.c.b16 %v1633, %v1632
    %v1641 = vpack.c.b16 %v1635, %v1634
    %v1642 = vpack.c.b16 %v1637, %v1636
    %v1643 = vpack.c.b16 %v1639, %v1638
    %v1649 = vsel %vm875, %v1614, 0
    %1651 = vmatprep.subr.bf16.mxu0 0
    %1652 = vmatpush1.bf16.msra.mxu0 %v1640
    %1653 = vmatprep.subr.bf16.mxu0 0
    %1654 = vmatpush1.bf16.msra.mxu0 %v1641
    %1655 = vmatprep.subr.bf16.mxu0 0
    %1656 = vmatpush1.bf16.msra.mxu0 %v1642
    %1657 = vmatprep.subr.bf16.mxu0 0
    %1658 = vmatpush1.bf16.msra.mxu0 %v1643
    %1659 = vmatprep.subr.bf16.mxu0 0
    %1660 = vmatpush1.bf16.msra.mxu0 0
    %1661 = vmatprep.subr.bf16.mxu0 0
    %1662 = vmatpush1.bf16.msra.mxu0 0
    %1663 = vmatprep.subr.bf16.mxu0 0
    %1664 = vmatpush1.bf16.msra.mxu0 0
    %1665 = vmatprep.subr.bf16.mxu0 0
    %1666 = vmatpush1.bf16.msra.mxu0 0
    %1667 = vmatprep.subr.bf16.mxu0 0
    %1668 = vmatpush1.bf16.msra.mxu0 0
    %1669 = vmatprep.subr.bf16.mxu0 0
    %1670 = vmatpush1.bf16.msra.mxu0 0
    %1671 = vmatprep.subr.bf16.mxu0 0
    %1672 = vmatpush1.bf16.msra.mxu0 0
    %1673 = vmatprep.subr.bf16.mxu0 0
    %1674 = vmatpush1.bf16.msra.mxu0 0
    %1675 = vmatprep.subr.bf16.mxu0 0
    %1676 = vmatpush1.bf16.msra.mxu0 0
    %1677 = vmatprep.subr.bf16.mxu0 0
    %1678 = vmatpush1.bf16.msra.mxu0 0
    %1679 = vmatprep.subr.bf16.mxu0 0
    %1680 = vmatpush1.bf16.msra.mxu0 0
    %1681 = vmatprep.subr.bf16.mxu0 0
    %1682 = vmatpush1.bf16.msra.mxu0 0
    %1683 = vmatprep.mubr.bf16.mxu0 0
    %1684 = vmatmul.mubr.bf16.gmra.mrb[0].mxu0 %v1649
    %v1685 = vpop.f32.mrb[0].mxu0
    %v1686 = vadd.f32 0.0, %v1685
    %v1687 = vpop.f32.mrb[0].mxu0
    %v1688 = vpop.f32.mrb[0].mxu0
    %v1689 = vadd.f32 0.0, %v1688
    %v1690 = vpop.f32.mrb[0].mxu0
    %1691 = vdwg.mxu0
    %v1692 = vadd.f32 %v1459, %v1686
    %v1693 = vadd.f32 %v1460, %v1689
    %s1694 = scalar_lea.vmem %s11, 1
    %v1695 = vld [vmem:[%s1694] sm:$0x1]
    %v1697 = vlaneseq
    %v1698 = vshrl.u32 %v1697, 7
    %v1699 = vsub.s32 0, %v1698
    %v1700 = vrot.slane %v1695, %v1699
    %v1702 = vadd.f32 %v1692, %v1700
    %v1703 = vadd.f32 %v1693, %v1700
    %1704 = vadd.xlane.f32.xlu0 %v1702
    %v1705 = vpop.xlane.xlu0 %1704
    %1706 = vadd.xlane.f32.xlu0 %v1703
    %v1707 = vpop.xlane.xlu0 %1706
    %v1708 = vmul.f32 %v1705, %v167
    %v1709 = vmul.f32 %v1707, %v167
    %v1710 = vsub.f32 %v1702, %v1708
    %v1711 = vsub.f32 %v1703, %v1709
    %v1712 = vmul.f32 %v1710, %v1710
    %v1713 = vmul.f32 %v1711, %v1711
    %1714 = vadd.xlane.f32.xlu0 %v1712
    %v1715 = vpop.xlane.xlu0 %1714
    %1716 = vadd.xlane.f32.xlu0 %v1713
    %v1717 = vpop.xlane.xlu0 %1716
    %v1718 = vmul.f32 %v1715, 0.007874016
    %v1719 = vmul.f32 %v1717, 0.007874016
    %v1720 = vrsqrt.pop %v1718
    %v1721 = vmul.f32 %v1718, %v1720
    %vm1722 = vcmp.eq.f32.partialorder %v1718, inf
    %v1723 = vsel %vm1722, %v1718, %v1721
    %vm1724 = vcmp.eq.f32.partialorder %v1718, 0.0
    %v1725 = vand.u32 %v1718, 2147483648
    %v1726 = vsel %vm1724, %v1725, %v1723
    %v1727 = vrsqrt.pop %v1719
    %v1728 = vmul.f32 %v1719, %v1727
    %vm1729 = vcmp.eq.f32.partialorder %v1719, inf
    %v1730 = vsel %vm1729, %v1719, %v1728
    %vm1731 = vcmp.eq.f32.partialorder %v1719, 0.0
    %v1732 = vand.u32 %v1719, 2147483648
    %v1733 = vsel %vm1731, %v1732, %v1730
    %v1734 = vadd.f32 %v1726, 1e-06
    %v1735 = vadd.f32 %v1733, 1e-06
    %v1736 = vrcp.pop %v1734
    %v1737 = vmul.f32 %v1710, %v1736
    %v1738 = vrcp.pop %v1735
    %v1739 = vmul.f32 %v1711, %v1738
    %v1740 = vpack.c.bf16 %v1739, %v1737
    %s1741 = scalar_lea.vmem [#allocation2], 384
    %v1742 = vld [vmem:[%s1741] sm:$0xff]
    %v1743 = vld [vmem:[%s1741 + $0x8] sm:$0xf]
    %v1744 = vld [vmem:[%s1741 + $0xc] sm:$0xff]
    %v1745 = vld [vmem:[%s1741 + $0x14] sm:$0xf]
    %v1746 = vld [vmem:[%s1741 + $0x18] sm:$0xff]
    %v1747 = vld [vmem:[%s1741 + $0x20] sm:$0xf]
    %v1748 = vld [vmem:[%s1741 + $0x24] sm:$0xff]
    %v1749 = vld [vmem:[%s1741 + $0x2c] sm:$0xf]
    %v1750 = vld [vmem:[%s1741 + $0x30] sm:$0xff]
    %v1751 = vld [vmem:[%s1741 + $0x38] sm:$0xf]
    %v1752 = vld [vmem:[%s1741 + $0x3c] sm:$0xff]
    %v1753 = vld [vmem:[%s1741 + $0x44] sm:$0xf]
    %v1754 = vld [vmem:[%s1741 + $0x48] sm:$0xff]
    %v1755 = vld [vmem:[%s1741 + $0x50] sm:$0xf]
    %v1756 = vld [vmem:[%s1741 + $0x54] sm:$0xff]
    %v1757 = vld [vmem:[%s1741 + $0x5c] sm:$0xf]
    %v1758 = vld [vmem:[%s1741 + $0x60] sm:$0xff]
    %v1759 = vld [vmem:[%s1741 + $0x68] sm:$0xf]
    %v1760 = vld [vmem:[%s1741 + $0x6c] sm:$0xff]
    %v1761 = vld [vmem:[%s1741 + $0x74] sm:$0xf]
    %v1762 = vld [vmem:[%s1741 + $0x78] sm:$0xff]
    %v1763 = vld [vmem:[%s1741 + $0x80] sm:$0xf]
    %v1764 = vld [vmem:[%s1741 + $0x84] sm:$0xff]
    %v1765 = vld [vmem:[%s1741 + $0x8c] sm:$0xf]
    %v1766 = vld [vmem:[%s1741 + $0x90] sm:$0xff]
    %v1767 = vld [vmem:[%s1741 + $0x98] sm:$0xf]
    %v1768 = vld [vmem:[%s1741 + $0x9c] sm:$0xff]
    %v1769 = vld [vmem:[%s1741 + $0xa4] sm:$0xf]
    %v1770 = vld [vmem:[%s1741 + $0xa8] sm:$0xff]
    %v1771 = vld [vmem:[%s1741 + $0xb0] sm:$0xf]
    %v1772 = vld [vmem:[%s1741 + $0xb4] sm:$0xff]
    %v1773 = vld [vmem:[%s1741 + $0xbc] sm:$0xf]
    %s1774 = scalar_lea.vmem %s5, 6
    %v1775 = vld [vmem:[%s1774] sm:$0x7]
    %v1777 = vlaneseq
    %v1778 = vshrl.u32 %v1777, 7
    %v1779 = vsub.s32 0, %v1778
    %v1780 = vrot.slane %v1775, %v1779
    %v1781 = vlaneseq
    %v1782 = vshrl.u32 %v1781, 7
    %v1783 = vsub.s32 1, %v1782
    %v1784 = vrot.slane %v1775, %v1783
    %v1785 = vlaneseq
    %v1786 = vshrl.u32 %v1785, 7
    %v1787 = vsub.s32 2, %v1786
    %v1788 = vrot.slane %v1775, %v1787
    %v1824 = vunpack.c.l.b16 %v1742
    %v1825 = vunpack.c.h.b16 %v1742
    %v1826 = vunpack.c.l.b16 %v1743
    %v1827 = vunpack.c.l.b16 %v1744
    %v1828 = vunpack.c.h.b16 %v1744
    %v1829 = vunpack.c.l.b16 %v1745
    %v1830 = vunpack.c.l.b16 %v1746
    %v1831 = vunpack.c.h.b16 %v1746
    %v1832 = vunpack.c.l.b16 %v1747
    %v1833 = vunpack.c.l.b16 %v1748
    %v1834 = vunpack.c.h.b16 %v1748
    %v1835 = vunpack.c.l.b16 %v1749
    %v1836 = vunpack.c.l.b16 %v1750
    %v1837 = vunpack.c.h.b16 %v1750
    %v1838 = vunpack.c.l.b16 %v1751
    %v1839 = vunpack.c.l.b16 %v1752
    %v1840 = vunpack.c.h.b16 %v1752
    %v1841 = vunpack.c.l.b16 %v1753
    %v1842 = vunpack.c.l.b16 %v1754
    %v1843 = vunpack.c.h.b16 %v1754
    %v1844 = vunpack.c.l.b16 %v1755
    %v1845 = vunpack.c.l.b16 %v1756
    %v1846 = vunpack.c.h.b16 %v1756
    %v1847 = vunpack.c.l.b16 %v1757
    %v1848 = vunpack.c.l.b16 %v1758
    %v1849 = vunpack.c.h.b16 %v1758
    %v1850 = vunpack.c.l.b16 %v1759
    %v1851 = vunpack.c.l.b16 %v1760
    %v1852 = vunpack.c.h.b16 %v1760
    %v1853 = vunpack.c.l.b16 %v1761
    %v1854 = vunpack.c.l.b16 %v1762
    %v1855 = vunpack.c.h.b16 %v1762
    %v1856 = vunpack.c.l.b16 %v1763
    %v1857 = vunpack.c.l.b16 %v1764
    %v1858 = vunpack.c.h.b16 %v1764
    %v1859 = vunpack.c.l.b16 %v1765
    %v1860 = vunpack.c.l.b16 %v1766
    %v1861 = vunpack.c.h.b16 %v1766
    %v1862 = vunpack.c.l.b16 %v1767
    %v1863 = vunpack.c.l.b16 %v1768
    %v1864 = vunpack.c.h.b16 %v1768
    %v1865 = vunpack.c.l.b16 %v1769
    %v1866 = vunpack.c.l.b16 %v1770
    %v1867 = vunpack.c.h.b16 %v1770
    %v1868 = vunpack.c.l.b16 %v1771
    %v1869 = vunpack.c.l.b16 %v1772
    %v1870 = vunpack.c.h.b16 %v1772
    %v1871 = vunpack.c.l.b16 %v1773
    %v1872 = vpack.c.b16 %v1827, %v1824
    %v1873 = vpack.c.b16 %v1828, %v1825
    %v1874 = vpack.c.b16 %v1829, %v1826
    %v1875 = vpack.c.b16 %v1833, %v1830
    %v1876 = vpack.c.b16 %v1834, %v1831
    %v1877 = vpack.c.b16 %v1835, %v1832
    %v1878 = vpack.c.b16 %v1839, %v1836
    %v1879 = vpack.c.b16 %v1840, %v1837
    %v1880 = vpack.c.b16 %v1841, %v1838
    %v1881 = vpack.c.b16 %v1845, %v1842
    %v1882 = vpack.c.b16 %v1846, %v1843
    %v1883 = vpack.c.b16 %v1847, %v1844
    %v1884 = vpack.c.b16 %v1851, %v1848
    %v1885 = vpack.c.b16 %v1852, %v1849
    %v1886 = vpack.c.b16 %v1853, %v1850
    %v1887 = vpack.c.b16 %v1857, %v1854
    %v1888 = vpack.c.b16 %v1858, %v1855
    %v1889 = vpack.c.b16 %v1859, %v1856
    %v1890 = vpack.c.b16 %v1863, %v1860
    %v1891 = vpack.c.b16 %v1864, %v1861
    %v1892 = vpack.c.b16 %v1865, %v1862
    %v1893 = vpack.c.b16 %v1869, %v1866
    %v1894 = vpack.c.b16 %v1870, %v1867
    %v1895 = vpack.c.b16 %v1871, %v1868
    %1920 = vmatprep.subr.bf16.mxu0 %v1873
    %1921 = vmatpush1.bf16.msra.mxu0 %v1872
    %1922 = vmatprep.subr.bf16.mxu0 %v1876
    %1923 = vmatpush1.bf16.msra.mxu0 %v1875
    %1924 = vmatprep.subr.bf16.mxu0 %v1879
    %1925 = vmatpush1.bf16.msra.mxu0 %v1878
    %1926 = vmatprep.subr.bf16.mxu0 %v1882
    %1927 = vmatpush1.bf16.msra.mxu0 %v1881
    %1928 = vmatprep.subr.bf16.mxu0 %v1885
    %1929 = vmatpush1.bf16.msra.mxu0 %v1884
    %1930 = vmatprep.subr.bf16.mxu0 %v1888
    %1931 = vmatpush1.bf16.msra.mxu0 %v1887
    %1932 = vmatprep.subr.bf16.mxu0 %v1891
    %1933 = vmatpush1.bf16.msra.mxu0 %v1890
    %1934 = vmatprep.subr.bf16.mxu0 %v1894
    %1935 = vmatpush1.bf16.msra.mxu0 %v1893
    %1936 = vmatprep.subr.bf16.mxu0 0
    %1937 = vmatpush1.bf16.msra.mxu0 0
    %1938 = vmatprep.subr.bf16.mxu0 0
    %1939 = vmatpush1.bf16.msra.mxu0 0
    %1940 = vmatprep.subr.bf16.mxu0 0
    %1941 = vmatpush1.bf16.msra.mxu0 0
    %1942 = vmatprep.subr.bf16.mxu0 0
    %1943 = vmatpush1.bf16.msra.mxu0 0
    %1944 = vmatprep.subr.bf16.mxu0 0
    %1945 = vmatpush1.bf16.msra.mxu0 0
    %1946 = vmatprep.subr.bf16.mxu0 0
    %1947 = vmatpush1.bf16.msra.mxu0 0
    %1948 = vmatprep.subr.bf16.mxu0 0
    %1949 = vmatpush1.bf16.msra.mxu0 0
    %1950 = vmatprep.subr.bf16.mxu0 0
    %1951 = vmatpush1.bf16.msra.mxu0 0
    %1952 = vmatprep.mubr.bf16.mxu0 0
    %1953 = vmatmul.mubr.bf16.gmra.mrb[0].mxu0 %v1740
    %v1954 = vpop.f32.mrb[0].mxu0
    %v1955 = vadd.f32 %v1780, %v1954
    %v1956 = vpop.f32.mrb[0].mxu0
    %v1957 = vadd.f32 %v1784, %v1956
    %v1958 = vpop.f32.mrb[0].mxu0
    %v1959 = vadd.f32 %v1780, %v1958
    %v1960 = vpop.f32.mrb[0].mxu0
    %v1961 = vadd.f32 %v1784, %v1960
    %1962 = vdwg.mxu0
    %1963 = vmatprep.subr.bf16.mxu0 0
    %1964 = vmatpush1.bf16.msra.mxu0 %v1874
    %1965 = vmatprep.subr.bf16.mxu0 0
    %1966 = vmatpush1.bf16.msra.mxu0 %v1877
    %1967 = vmatprep.subr.bf16.mxu0 0
    %1968 = vmatpush1.bf16.msra.mxu0 %v1880
    %1969 = vmatprep.subr.bf16.mxu0 0
    %1970 = vmatpush1.bf16.msra.mxu0 %v1883
    %1971 = vmatprep.subr.bf16.mxu0 0
    %1972 = vmatpush1.bf16.msra.mxu0 %v1886
    %1973 = vmatprep.subr.bf16.mxu0 0
    %1974 = vmatpush1.bf16.msra.mxu0 %v1889
    %1975 = vmatprep.subr.bf16.mxu0 0
    %1976 = vmatpush1.bf16.msra.mxu0 %v1892
    %1977 = vmatprep.subr.bf16.mxu0 0
    %1978 = vmatpush1.bf16.msra.mxu0 %v1895
    %1979 = vmatprep.subr.bf16.mxu0 0
    %1980 = vmatpush1.bf16.msra.mxu0 0
    %1981 = vmatprep.subr.bf16.mxu0 0
    %1982 = vmatpush1.bf16.msra.mxu0 0
    %1983 = vmatprep.subr.bf16.mxu0 0
    %1984 = vmatpush1.bf16.msra.mxu0 0
    %1985 = vmatprep.subr.bf16.mxu0 0
    %1986 = vmatpush1.bf16.msra.mxu0 0
    %1987 = vmatprep.subr.bf16.mxu0 0
    %1988 = vmatpush1.bf16.msra.mxu0 0
    %1989 = vmatprep.subr.bf16.mxu0 0
    %1990 = vmatpush1.bf16.msra.mxu0 0
    %1991 = vmatprep.subr.bf16.mxu0 0
    %1992 = vmatpush1.bf16.msra.mxu0 0
    %1993 = vmatprep.subr.bf16.mxu0 0
    %1994 = vmatpush1.bf16.msra.mxu0 0
    %1995 = vmatprep.mubr.bf16.mxu0 0
    %1996 = vmatmul.mubr.bf16.gmra.mrb[0].mxu0 %v1740
    %v1997 = vpop.f32.mrb[0].mxu0
    %v1998 = vadd.f32 %v1788, %v1997
    %v1999 = vpop.f32.mrb[0].mxu0
    %v2000 = vpop.f32.mrb[0].mxu0
    %v2001 = vadd.f32 %v1788, %v2000
    %v2002 = vpop.f32.mrb[0].mxu0
    %2003 = vdwg.mxu0
    %v2004 = vpack.c.bf16 %v1959, %v1955
    %v2005 = vpack.c.bf16 %v1961, %v1957
    %v2006 = vpack.c.bf16 %v2001, %v1998
    %2007 = vmatprep.subr.bf16.mxu0 0
    %2008 = vmatpush1.bf16.xpose.msra.mxu0 %v2005
    %2009 = vmatprep.subr.bf16.mxu0 0
    %2010 = vmatpush1.bf16.xpose.msra.mxu0 0
    %2011 = vmatprep.subr.bf16.mxu0 0
    %2012 = vmatpush1.bf16.xpose.msra.mxu0 0
    %2013 = vmatprep.subr.bf16.mxu0 0
    %2014 = vmatpush1.bf16.xpose.msra.mxu0 0
    %2015 = vmatprep.subr.bf16.mxu0 0
    %2016 = vmatpush1.bf16.xpose.msra.mxu0 0
    %2017 = vmatprep.subr.bf16.mxu0 0
    %2018 = vmatpush1.bf16.xpose.msra.mxu0 0
    %2019 = vmatprep.subr.bf16.mxu0 0
    %2020 = vmatpush1.bf16.xpose.msra.mxu0 0
    %2021 = vmatprep.subr.bf16.mxu0 0
    %2022 = vmatpush1.bf16.xpose.msra.mxu0 0
    %2023 = vmatprep.subr.bf16.mxu0 0
    %2024 = vmatpush1.bf16.xpose.msra.mxu0 0
    %2025 = vmatprep.subr.bf16.mxu0 0
    %2026 = vmatpush1.bf16.xpose.msra.mxu0 0
    %2027 = vmatprep.subr.bf16.mxu0 0
    %2028 = vmatpush1.bf16.xpose.msra.mxu0 0
    %2029 = vmatprep.subr.bf16.mxu0 0
    %2030 = vmatpush1.bf16.xpose.msra.mxu0 0
    %2031 = vmatprep.subr.bf16.mxu0 0
    %2032 = vmatpush1.bf16.xpose.msra.mxu0 0
    %2033 = vmatprep.subr.bf16.mxu0 0
    %2034 = vmatpush1.bf16.xpose.msra.mxu0 0
    %2035 = vmatprep.subr.bf16.mxu0 0
    %2036 = vmatpush1.bf16.xpose.msra.mxu0 0
    %2037 = vmatprep.subr.bf16.mxu0 0
    %2038 = vmatpush1.bf16.xpose.msra.mxu0 0
    %2039 = vmatprep.mubr.bf16.mxu0 0
    %2040 = vmatmul.mubr.bf16.gmra.mrb[0].mxu0 %v2004
    %v2041 = vpop.f32.mrb[0].mxu0
    %v2042 = vadd.f32 %v161, %v2041
    %v2043 = vpop.f32.mrb[0].mxu0
    %v2044 = vpop.f32.mrb[0].mxu0
    %v2045 = vadd.f32 %v162, %v2044
    %v2046 = vpop.f32.mrb[0].mxu0
    %2047 = vdwg.mxu0
    %v2048 = vsel %vm506, %v2042, -inf
    %2049 = vmax.xlane.f32.xlu0 %v2048
    %v2050 = vpop.xlane.xlu0 %2049
    %v2051 = vsel %vm506, %v2045, -inf
    %2052 = vmax.xlane.f32.xlu0 %v2051
    %v2053 = vpop.xlane.xlu0 %2052
    %v2054 = vsub.f32 %v2042, %v2050
    %v2055 = vsub.f32 %v2045, %v2053
    %v2056 = vmul.f32 %v2054, 1.442695
    %v2057 = vpow.pop %v2056
    %v2058 = vmul.f32 %v2055, 1.442695
    %v2059 = vpow.pop %v2058
    %v2060 = vsel %vm506, %v2057, 0.0
    %2061 = vadd.xlane.f32.xlu0 %v2060
    %v2062 = vpop.xlane.xlu0 %2061
    %v2063 = vsel %vm506, %v2059, 0.0
    %2064 = vadd.xlane.f32.xlu0 %v2063
    %v2065 = vpop.xlane.xlu0 %2064
    %v2066 = vrcp.pop %v2062
    %v2067 = vrcp.pop %v2065
    %v2068 = vmul.f32 %v2057, %v2066
    %v2069 = vmul.f32 %v2059, %v2067
    %v2070 = vpack.c.bf16 %v2069, %v2068
    %v2072 = vsel %vm506, %v2070, 0
    %2074 = vmatprep.subr.bf16.mxu0 0
    %2075 = vmatpush1.bf16.msra.mxu0 %v2006
    %2076 = vmatprep.subr.bf16.mxu0 0
    %2077 = vmatpush1.bf16.msra.mxu0 0
    %2078 = vmatprep.subr.bf16.mxu0 0
    %2079 = vmatpush1.bf16.msra.mxu0 0
    %2080 = vmatprep.subr.bf16.mxu0 0
    %2081 = vmatpush1.bf16.msra.mxu0 0
    %2082 = vmatprep.subr.bf16.mxu0 0
    %2083 = vmatpush1.bf16.msra.mxu0 0
    %2084 = vmatprep.subr.bf16.mxu0 0
    %2085 = vmatpush1.bf16.msra.mxu0 0
    %2086 = vmatprep.subr.bf16.mxu0 0
    %2087 = vmatpush1.bf16.msra.mxu0 0
    %2088 = vmatprep.subr.bf16.mxu0 0
    %2089 = vmatpush1.bf16.msra.mxu0 0
    %2090 = vmatprep.subr.bf16.mxu0 0
    %2091 = vmatpush1.bf16.msra.mxu0 0
    %2092 = vmatprep.subr.bf16.mxu0 0
    %2093 = vmatpush1.bf16.msra.mxu0 0
    %2094 = vmatprep.subr.bf16.mxu0 0
    %2095 = vmatpush1.bf16.msra.mxu0 0
    %2096 = vmatprep.subr.bf16.mxu0 0
    %2097 = vmatpush1.bf16.msra.mxu0 0
    %2098 = vmatprep.subr.bf16.mxu0 0
    %2099 = vmatpush1.bf16.msra.mxu0 0
    %2100 = vmatprep.subr.bf16.mxu0 0
    %2101 = vmatpush1.bf16.msra.mxu0 0
    %2102 = vmatprep.subr.bf16.mxu0 0
    %2103 = vmatpush1.bf16.msra.mxu0 0
    %2104 = vmatprep.subr.bf16.mxu0 0
    %2105 = vmatpush1.bf16.msra.mxu0 0
    %2106 = vmatprep.mubr.bf16.mxu0 0
    %2107 = vmatmul.mubr.bf16.gmra.mrb[0].mxu0 %v2072
    %v2108 = vpop.f32.mrb[0].mxu0
    %v2109 = vadd.f32 0.0, %v2108
    %v2110 = vpop.f32.mrb[0].mxu0
    %v2111 = vpop.f32.mrb[0].mxu0
    %v2112 = vadd.f32 0.0, %v2111
    %v2113 = vpop.f32.mrb[0].mxu0
    %2114 = vdwg.mxu0
    %v2115 = vpack.c.bf16 %v2112, %v2109
    %s2116 = scalar_lea.vmem %s6, 128
    %v2117 = vld [vmem:[%s2116] sm:$0xf]
    %v2118 = vld [vmem:[%s2116 + $0x4] sm:$0xf]
    %v2119 = vld [vmem:[%s2116 + $0x8] sm:$0xf]
    %v2120 = vld [vmem:[%s2116 + $0xc] sm:$0xf]
    %v2121 = vld [vmem:[%s2116 + $0x10] sm:$0xf]
    %v2122 = vld [vmem:[%s2116 + $0x14] sm:$0xf]
    %v2123 = vld [vmem:[%s2116 + $0x18] sm:$0xf]
    %v2124 = vld [vmem:[%s2116 + $0x1c] sm:$0xf]
    %v2125 = vld [vmem:[%s2116 + $0x20] sm:$0xf]
    %v2126 = vld [vmem:[%s2116 + $0x24] sm:$0xf]
    %v2127 = vld [vmem:[%s2116 + $0x28] sm:$0xf]
    %v2128 = vld [vmem:[%s2116 + $0x2c] sm:$0xf]
    %v2129 = vld [vmem:[%s2116 + $0x30] sm:$0xf]
    %v2130 = vld [vmem:[%s2116 + $0x34] sm:$0xf]
    %v2131 = vld [vmem:[%s2116 + $0x38] sm:$0xf]
    %v2132 = vld [vmem:[%s2116 + $0x3c] sm:$0xf]
    %v2149 = vunpack.c.l.b16 %v2117
    %v2150 = vunpack.c.l.b16 %v2118
    %v2151 = vunpack.c.l.b16 %v2119
    %v2152 = vunpack.c.l.b16 %v2120
    %v2153 = vunpack.c.l.b16 %v2121
    %v2154 = vunpack.c.l.b16 %v2122
    %v2155 = vunpack.c.l.b16 %v2123
    %v2156 = vunpack.c.l.b16 %v2124
    %v2157 = vunpack.c.l.b16 %v2125
    %v2158 = vunpack.c.l.b16 %v2126
    %v2159 = vunpack.c.l.b16 %v2127
    %v2160 = vunpack.c.l.b16 %v2128
    %v2161 = vunpack.c.l.b16 %v2129
    %v2162 = vunpack.c.l.b16 %v2130
    %v2163 = vunpack.c.l.b16 %v2131
    %v2164 = vunpack.c.l.b16 %v2132
    %v2165 = vpack.c.b16 %v2150, %v2149
    %v2166 = vpack.c.b16 %v2152, %v2151
    %v2167 = vpack.c.b16 %v2154, %v2153
    %v2168 = vpack.c.b16 %v2156, %v2155
    %v2169 = vpack.c.b16 %v2158, %v2157
    %v2170 = vpack.c.b16 %v2160, %v2159
    %v2171 = vpack.c.b16 %v2162, %v2161
    %v2172 = vpack.c.b16 %v2164, %v2163
    %2181 = vmatprep.subr.bf16.mxu0 0
    %2182 = vmatpush1.bf16.msra.mxu0 %v2165
    %2183 = vmatprep.subr.bf16.mxu0 0
    %2184 = vmatpush1.bf16.msra.mxu0 %v2166
    %2185 = vmatprep.subr.bf16.mxu0 0
    %2186 = vmatpush1.bf16.msra.mxu0 %v2167
    %2187 = vmatprep.subr.bf16.mxu0 0
    %2188 = vmatpush1.bf16.msra.mxu0 %v2168
    %2189 = vmatprep.subr.bf16.mxu0 0
    %2190 = vmatpush1.bf16.msra.mxu0 %v2169
    %2191 = vmatprep.subr.bf16.mxu0 0
    %2192 = vmatpush1.bf16.msra.mxu0 %v2170
    %2193 = vmatprep.subr.bf16.mxu0 0
    %2194 = vmatpush1.bf16.msra.mxu0 %v2171
    %2195 = vmatprep.subr.bf16.mxu0 0
    %2196 = vmatpush1.bf16.msra.mxu0 %v2172
    %2197 = vmatprep.subr.bf16.mxu0 0
    %2198 = vmatpush1.bf16.msra.mxu0 0
    %2199 = vmatprep.subr.bf16.mxu0 0
    %2200 = vmatpush1.bf16.msra.mxu0 0
    %2201 = vmatprep.subr.bf16.mxu0 0
    %2202 = vmatpush1.bf16.msra.mxu0 0
    %2203 = vmatprep.subr.bf16.mxu0 0
    %2204 = vmatpush1.bf16.msra.mxu0 0
    %2205 = vmatprep.subr.bf16.mxu0 0
    %2206 = vmatpush1.bf16.msra.mxu0 0
    %2207 = vmatprep.subr.bf16.mxu0 0
    %2208 = vmatpush1.bf16.msra.mxu0 0
    %2209 = vmatprep.subr.bf16.mxu0 0
    %2210 = vmatpush1.bf16.msra.mxu0 0
    %2211 = vmatprep.subr.bf16.mxu0 0
    %2212 = vmatpush1.bf16.msra.mxu0 0
    %2213 = vmatprep.mubr.bf16.mxu0 0
    %2214 = vmatmul.mubr.bf16.gmra.mrb[0].mxu0 %v2115
    %v2215 = vpop.f32.mrb[0].mxu0
    %v2216 = vadd.f32 0.0, %v2215
    %v2217 = vpop.f32.mrb[0].mxu0
    %v2218 = vpop.f32.mrb[0].mxu0
    %v2219 = vadd.f32 0.0, %v2218
    %v2220 = vpop.f32.mrb[0].mxu0
    %2221 = vdwg.mxu0
    %v2222 = vadd.f32 %v1702, %v2216
    %v2223 = vadd.f32 %v1703, %v2219
    %s2224 = scalar_lea.vmem %s7, 2
    %v2225 = vld [vmem:[%s2224] sm:$0x1]
    %v2227 = vlaneseq
    %v2228 = vshrl.u32 %v2227, 7
    %v2229 = vsub.s32 0, %v2228
    %v2230 = vrot.slane %v2225, %v2229
    %v2232 = vadd.f32 %v2222, %v2230
    %v2233 = vadd.f32 %v2223, %v2230
    %2234 = vadd.xlane.f32.xlu0 %v2232
    %v2235 = vpop.xlane.xlu0 %2234
    %2236 = vadd.xlane.f32.xlu0 %v2233
    %v2237 = vpop.xlane.xlu0 %2236
    %v2238 = vmul.f32 %v2235, %v167
    %v2239 = vmul.f32 %v2237, %v167
    %v2240 = vsub.f32 %v2232, %v2238
    %v2241 = vsub.f32 %v2233, %v2239
    %v2242 = vmul.f32 %v2240, %v2240
    %v2243 = vmul.f32 %v2241, %v2241
    %2244 = vadd.xlane.f32.xlu0 %v2242
    %v2245 = vpop.xlane.xlu0 %2244
    %2246 = vadd.xlane.f32.xlu0 %v2243
    %v2247 = vpop.xlane.xlu0 %2246
    %v2248 = vmul.f32 %v2245, 0.007874016
    %v2249 = vmul.f32 %v2247, 0.007874016
    %v2250 = vrsqrt.pop %v2248
    %v2251 = vmul.f32 %v2248, %v2250
    %vm2252 = vcmp.eq.f32.partialorder %v2248, inf
    %v2253 = vsel %vm2252, %v2248, %v2251
    %vm2254 = vcmp.eq.f32.partialorder %v2248, 0.0
    %v2255 = vand.u32 %v2248, 2147483648
    %v2256 = vsel %vm2254, %v2255, %v2253
    %v2257 = vrsqrt.pop %v2249
    %v2258 = vmul.f32 %v2249, %v2257
    %vm2259 = vcmp.eq.f32.partialorder %v2249, inf
    %v2260 = vsel %vm2259, %v2249, %v2258
    %vm2261 = vcmp.eq.f32.partialorder %v2249, 0.0
    %v2262 = vand.u32 %v2249, 2147483648
    %v2263 = vsel %vm2261, %v2262, %v2260
    %v2264 = vadd.f32 %v2256, 1e-06
    %v2265 = vadd.f32 %v2263, 1e-06
    %v2266 = vrcp.pop %v2264
    %v2267 = vmul.f32 %v2240, %v2266
    %v2268 = vrcp.pop %v2265
    %v2269 = vmul.f32 %v2241, %v2268
    %v2270 = vpack.c.bf16 %v2269, %v2267
    %s2271 = scalar_lea.vmem %s8, 128
    %v2272 = vld [vmem:[%s2271] sm:$0xf]
    %v2273 = vld [vmem:[%s2271 + $0x4] sm:$0xf]
    %v2274 = vld [vmem:[%s2271 + $0x8] sm:$0xf]
    %v2275 = vld [vmem:[%s2271 + $0xc] sm:$0xf]
    %v2276 = vld [vmem:[%s2271 + $0x10] sm:$0xf]
    %v2277 = vld [vmem:[%s2271 + $0x14] sm:$0xf]
    %v2278 = vld [vmem:[%s2271 + $0x18] sm:$0xf]
    %v2279 = vld [vmem:[%s2271 + $0x1c] sm:$0xf]
    %v2280 = vld [vmem:[%s2271 + $0x20] sm:$0xf]
    %v2281 = vld [vmem:[%s2271 + $0x24] sm:$0xf]
    %v2282 = vld [vmem:[%s2271 + $0x28] sm:$0xf]
    %v2283 = vld [vmem:[%s2271 + $0x2c] sm:$0xf]
    %v2284 = vld [vmem:[%s2271 + $0x30] sm:$0xf]
    %v2285 = vld [vmem:[%s2271 + $0x34] sm:$0xf]
    %v2286 = vld [vmem:[%s2271 + $0x38] sm:$0xf]
    %v2287 = vld [vmem:[%s2271 + $0x3c] sm:$0xf]
    %s2288 = scalar_lea.vmem %s9, 2
    %v2289 = vld [vmem:[%s2288] sm:$0x1]
    %v2291 = vlaneseq
    %v2292 = vshrl.u32 %v2291, 7
    %v2293 = vsub.s32 0, %v2292
    %v2294 = vrot.slane %v2289, %v2293
    %v2312 = vunpack.c.l.b16 %v2272
    %v2313 = vunpack.c.l.b16 %v2273
    %v2314 = vunpack.c.l.b16 %v2274
    %v2315 = vunpack.c.l.b16 %v2275
    %v2316 = vunpack.c.l.b16 %v2276
    %v2317 = vunpack.c.l.b16 %v2277
    %v2318 = vunpack.c.l.b16 %v2278
    %v2319 = vunpack.c.l.b16 %v2279
    %v2320 = vunpack.c.l.b16 %v2280
    %v2321 = vunpack.c.l.b16 %v2281
    %v2322 = vunpack.c.l.b16 %v2282
    %v2323 = vunpack.c.l.b16 %v2283
    %v2324 = vunpack.c.l.b16 %v2284
    %v2325 = vunpack.c.l.b16 %v2285
    %v2326 = vunpack.c.l.b16 %v2286
    %v2327 = vunpack.c.l.b16 %v2287
    %v2328 = vpack.c.b16 %v2313, %v2312
    %v2329 = vpack.c.b16 %v2315, %v2314
    %v2330 = vpack.c.b16 %v2317, %v2316
    %v2331 = vpack.c.b16 %v2319, %v2318
    %v2332 = vpack.c.b16 %v2321, %v2320
    %v2333 = vpack.c.b16 %v2323, %v2322
    %v2334 = vpack.c.b16 %v2325, %v2324
    %v2335 = vpack.c.b16 %v2327, %v2326
    %2344 = vmatprep.subr.bf16.mxu0 0
    %2345 = vmatpush1.bf16.msra.mxu0 %v2328
    %2346 = vmatprep.subr.bf16.mxu0 0
    %2347 = vmatpush1.bf16.msra.mxu0 %v2329
    %2348 = vmatprep.subr.bf16.mxu0 0
    %2349 = vmatpush1.bf16.msra.mxu0 %v2330
    %2350 = vmatprep.subr.bf16.mxu0 0
    %2351 = vmatpush1.bf16.msra.mxu0 %v2331
    %2352 = vmatprep.subr.bf16.mxu0 0
    %2353 = vmatpush1.bf16.msra.mxu0 %v2332
    %2354 = vmatprep.subr.bf16.mxu0 0
    %2355 = vmatpush1.bf16.msra.mxu0 %v2333
    %2356 = vmatprep.subr.bf16.mxu0 0
    %2357 = vmatpush1.bf16.msra.mxu0 %v2334
    %2358 = vmatprep.subr.bf16.mxu0 0
    %2359 = vmatpush1.bf16.msra.mxu0 %v2335
    %2360 = vmatprep.subr.bf16.mxu0 0
    %2361 = vmatpush1.bf16.msra.mxu0 0
    %2362 = vmatprep.subr.bf16.mxu0 0
    %2363 = vmatpush1.bf16.msra.mxu0 0
    %2364 = vmatprep.subr.bf16.mxu0 0
    %2365 = vmatpush1.bf16.msra.mxu0 0
    %2366 = vmatprep.subr.bf16.mxu0 0
    %2367 = vmatpush1.bf16.msra.mxu0 0
    %2368 = vmatprep.subr.bf16.mxu0 0
    %2369 = vmatpush1.bf16.msra.mxu0 0
    %2370 = vmatprep.subr.bf16.mxu0 0
    %2371 = vmatpush1.bf16.msra.mxu0 0
    %2372 = vmatprep.subr.bf16.mxu0 0
    %2373 = vmatpush1.bf16.msra.mxu0 0
    %2374 = vmatprep.subr.bf16.mxu0 0
    %2375 = vmatpush1.bf16.msra.mxu0 0
    %2376 = vmatprep.mubr.bf16.mxu0 0
    %2377 = vmatmul.mubr.bf16.gmra.mrb[0].mxu0 %v2270
    %v2378 = vpop.f32.mrb[0].mxu0
    %v2379 = vadd.f32 %v2294, %v2378
    %v2380 = vpop.f32.mrb[0].mxu0
    %v2381 = vpop.f32.mrb[0].mxu0
    %v2382 = vadd.f32 %v2294, %v2381
    %v2383 = vpop.f32.mrb[0].mxu0
    %2384 = vdwg.mxu0
    %v2385 = vmax.f32 %v2379, 0.0
    %v2386 = vmax.f32 %v2382, 0.0
    %v2387 = vpack.c.bf16 %v2386, %v2385
    %s2388 = scalar_lea.vmem %s10, 64
    %v2389 = vld [vmem:[%s2388] sm:$0xf]
    %v2390 = vld [vmem:[%s2388 + $0x4] sm:$0xf]
    %v2391 = vld [vmem:[%s2388 + $0x8] sm:$0xf]
    %v2392 = vld [vmem:[%s2388 + $0xc] sm:$0xf]
    %v2393 = vld [vmem:[%s2388 + $0x10] sm:$0xf]
    %v2394 = vld [vmem:[%s2388 + $0x14] sm:$0xf]
    %v2395 = vld [vmem:[%s2388 + $0x18] sm:$0xf]
    %v2396 = vld [vmem:[%s2388 + $0x1c] sm:$0xf]
    %v2405 = vunpack.c.l.b16 %v2389
    %v2406 = vunpack.c.l.b16 %v2390
    %v2407 = vunpack.c.l.b16 %v2391
    %v2408 = vunpack.c.l.b16 %v2392
    %v2409 = vunpack.c.l.b16 %v2393
    %v2410 = vunpack.c.l.b16 %v2394
    %v2411 = vunpack.c.l.b16 %v2395
    %v2412 = vunpack.c.l.b16 %v2396
    %v2413 = vpack.c.b16 %v2406, %v2405
    %v2414 = vpack.c.b16 %v2408, %v2407
    %v2415 = vpack.c.b16 %v2410, %v2409
    %v2416 = vpack.c.b16 %v2412, %v2411
    %v2422 = vsel %vm875, %v2387, 0
    %2424 = vmatprep.subr.bf16.mxu0 0
    %2425 = vmatpush1.bf16.msra.mxu0 %v2413
    %2426 = vmatprep.subr.bf16.mxu0 0
    %2427 = vmatpush1.bf16.msra.mxu0 %v2414
    %2428 = vmatprep.subr.bf16.mxu0 0
    %2429 = vmatpush1.bf16.msra.mxu0 %v2415
    %2430 = vmatprep.subr.bf16.mxu0 0
    %2431 = vmatpush1.bf16.msra.mxu0 %v2416
    %2432 = vmatprep.subr.bf16.mxu0 0
    %2433 = vmatpush1.bf16.msra.mxu0 0
    %2434 = vmatprep.subr.bf16.mxu0 0
    %2435 = vmatpush1.bf16.msra.mxu0 0
    %2436 = vmatprep.subr.bf16.mxu0 0
    %2437 = vmatpush1.bf16.msra.mxu0 0
    %2438 = vmatprep.subr.bf16.mxu0 0
    %2439 = vmatpush1.bf16.msra.mxu0 0
    %2440 = vmatprep.subr.bf16.mxu0 0
    %2441 = vmatpush1.bf16.msra.mxu0 0
    %2442 = vmatprep.subr.bf16.mxu0 0
    %2443 = vmatpush1.bf16.msra.mxu0 0
    %2444 = vmatprep.subr.bf16.mxu0 0
    %2445 = vmatpush1.bf16.msra.mxu0 0
    %2446 = vmatprep.subr.bf16.mxu0 0
    %2447 = vmatpush1.bf16.msra.mxu0 0
    %2448 = vmatprep.subr.bf16.mxu0 0
    %2449 = vmatpush1.bf16.msra.mxu0 0
    %2450 = vmatprep.subr.bf16.mxu0 0
    %2451 = vmatpush1.bf16.msra.mxu0 0
    %2452 = vmatprep.subr.bf16.mxu0 0
    %2453 = vmatpush1.bf16.msra.mxu0 0
    %2454 = vmatprep.subr.bf16.mxu0 0
    %2455 = vmatpush1.bf16.msra.mxu0 0
    %2456 = vmatprep.mubr.bf16.mxu0 0
    %2457 = vmatmul.mubr.bf16.gmra.mrb[0].mxu0 %v2422
    %v2458 = vpop.f32.mrb[0].mxu0
    %v2459 = vadd.f32 0.0, %v2458
    %v2460 = vpop.f32.mrb[0].mxu0
    %v2461 = vpop.f32.mrb[0].mxu0
    %v2462 = vadd.f32 0.0, %v2461
    %v2463 = vpop.f32.mrb[0].mxu0
    %2464 = vdwg.mxu0
    %v2465 = vadd.f32 %v2232, %v2459
    %v2466 = vadd.f32 %v2233, %v2462
    %s2467 = scalar_lea.vmem %s11, 2
    %v2468 = vld [vmem:[%s2467] sm:$0x1]
    %v2470 = vlaneseq
    %v2471 = vshrl.u32 %v2470, 7
    %v2472 = vsub.s32 0, %v2471
    %v2473 = vrot.slane %v2468, %v2472
    %v2475 = vadd.f32 %v2465, %v2473
    %v2476 = vadd.f32 %v2466, %v2473
    %2477 = vadd.xlane.f32.xlu0 %v2475
    %v2478 = vpop.xlane.xlu0 %2477
    %2479 = vadd.xlane.f32.xlu0 %v2476
    %v2480 = vpop.xlane.xlu0 %2479
    %v2481 = vmul.f32 %v2478, %v167
    %v2482 = vmul.f32 %v2480, %v167
    %v2483 = vsub.f32 %v2475, %v2481
    %v2484 = vsub.f32 %v2476, %v2482
    %v2485 = vmul.f32 %v2483, %v2483
    %v2486 = vmul.f32 %v2484, %v2484
    %2487 = vadd.xlane.f32.xlu0 %v2485
    %v2488 = vpop.xlane.xlu0 %2487
    %2489 = vadd.xlane.f32.xlu0 %v2486
    %v2490 = vpop.xlane.xlu0 %2489
    %v2491 = vmul.f32 %v2488, 0.007874016
    %v2492 = vmul.f32 %v2490, 0.007874016
    %v2493 = vrsqrt.pop %v2491
    %v2494 = vmul.f32 %v2491, %v2493
    %vm2495 = vcmp.eq.f32.partialorder %v2491, inf
    %v2496 = vsel %vm2495, %v2491, %v2494
    %vm2497 = vcmp.eq.f32.partialorder %v2491, 0.0
    %v2498 = vand.u32 %v2491, 2147483648
    %v2499 = vsel %vm2497, %v2498, %v2496
    %v2500 = vrsqrt.pop %v2492
    %v2501 = vmul.f32 %v2492, %v2500
    %vm2502 = vcmp.eq.f32.partialorder %v2492, inf
    %v2503 = vsel %vm2502, %v2492, %v2501
    %vm2504 = vcmp.eq.f32.partialorder %v2492, 0.0
    %v2505 = vand.u32 %v2492, 2147483648
    %v2506 = vsel %vm2504, %v2505, %v2503
    %v2507 = vadd.f32 %v2499, 1e-06
    %v2508 = vadd.f32 %v2506, 1e-06
    %v2509 = vrcp.pop %v2507
    %v2510 = vmul.f32 %v2483, %v2509
    %v2511 = vrcp.pop %v2508
    %v2512 = vmul.f32 %v2484, %v2511
    %v2513 = vpack.c.bf16 %v2512, %v2510
    %s2514 = scalar_lea.vmem [#allocation2], 576
    %v2515 = vld [vmem:[%s2514] sm:$0xff]
    %v2516 = vld [vmem:[%s2514 + $0x8] sm:$0xf]
    %v2517 = vld [vmem:[%s2514 + $0xc] sm:$0xff]
    %v2518 = vld [vmem:[%s2514 + $0x14] sm:$0xf]
    %v2519 = vld [vmem:[%s2514 + $0x18] sm:$0xff]
    %v2520 = vld [vmem:[%s2514 + $0x20] sm:$0xf]
    %v2521 = vld [vmem:[%s2514 + $0x24] sm:$0xff]
    %v2522 = vld [vmem:[%s2514 + $0x2c] sm:$0xf]
    %v2523 = vld [vmem:[%s2514 + $0x30] sm:$0xff]
    %v2524 = vld [vmem:[%s2514 + $0x38] sm:$0xf]
    %v2525 = vld [vmem:[%s2514 + $0x3c] sm:$0xff]
    %v2526 = vld [vmem:[%s2514 + $0x44] sm:$0xf]
    %v2527 = vld [vmem:[%s2514 + $0x48] sm:$0xff]
    %v2528 = vld [vmem:[%s2514 + $0x50] sm:$0xf]
    %v2529 = vld [vmem:[%s2514 + $0x54] sm:$0xff]
    %v2530 = vld [vmem:[%s2514 + $0x5c] sm:$0xf]
    %v2531 = vld [vmem:[%s2514 + $0x60] sm:$0xff]
    %v2532 = vld [vmem:[%s2514 + $0x68] sm:$0xf]
    %v2533 = vld [vmem:[%s2514 + $0x6c] sm:$0xff]
    %v2534 = vld [vmem:[%s2514 + $0x74] sm:$0xf]
    %v2535 = vld [vmem:[%s2514 + $0x78] sm:$0xff]
    %v2536 = vld [vmem:[%s2514 + $0x80] sm:$0xf]
    %v2537 = vld [vmem:[%s2514 + $0x84] sm:$0xff]
    %v2538 = vld [vmem:[%s2514 + $0x8c] sm:$0xf]
    %v2539 = vld [vmem:[%s2514 + $0x90] sm:$0xff]
    %v2540 = vld [vmem:[%s2514 + $0x98] sm:$0xf]
    %v2541 = vld [vmem:[%s2514 + $0x9c] sm:$0xff]
    %v2542 = vld [vmem:[%s2514 + $0xa4] sm:$0xf]
    %v2543 = vld [vmem:[%s2514 + $0xa8] sm:$0xff]
    %v2544 = vld [vmem:[%s2514 + $0xb0] sm:$0xf]
    %v2545 = vld [vmem:[%s2514 + $0xb4] sm:$0xff]
    %v2546 = vld [vmem:[%s2514 + $0xbc] sm:$0xf]
    %s2547 = scalar_lea.vmem %s5, 9
    %v2548 = vld [vmem:[%s2547] sm:$0x7]
    %v2550 = vlaneseq
    %v2551 = vshrl.u32 %v2550, 7
    %v2552 = vsub.s32 0, %v2551
    %v2553 = vrot.slane %v2548, %v2552
    %v2554 = vlaneseq
    %v2555 = vshrl.u32 %v2554, 7
    %v2556 = vsub.s32 1, %v2555
    %v2557 = vrot.slane %v2548, %v2556
    %v2558 = vlaneseq
    %v2559 = vshrl.u32 %v2558, 7
    %v2560 = vsub.s32 2, %v2559
    %v2561 = vrot.slane %v2548, %v2560
    %v2597 = vunpack.c.l.b16 %v2515
    %v2598 = vunpack.c.h.b16 %v2515
    %v2599 = vunpack.c.l.b16 %v2516
    %v2600 = vunpack.c.l.b16 %v2517
    %v2601 = vunpack.c.h.b16 %v2517
    %v2602 = vunpack.c.l.b16 %v2518
    %v2603 = vunpack.c.l.b16 %v2519
    %v2604 = vunpack.c.h.b16 %v2519
    %v2605 = vunpack.c.l.b16 %v2520
    %v2606 = vunpack.c.l.b16 %v2521
    %v2607 = vunpack.c.h.b16 %v2521
    %v2608 = vunpack.c.l.b16 %v2522
    %v2609 = vunpack.c.l.b16 %v2523
    %v2610 = vunpack.c.h.b16 %v2523
    %v2611 = vunpack.c.l.b16 %v2524
    %v2612 = vunpack.c.l.b16 %v2525
    %v2613 = vunpack.c.h.b16 %v2525
    %v2614 = vunpack.c.l.b16 %v2526
    %v2615 = vunpack.c.l.b16 %v2527
    %v2616 = vunpack.c.h.b16 %v2527
    %v2617 = vunpack.c.l.b16 %v2528
    %v2618 = vunpack.c.l.b16 %v2529
    %v2619 = vunpack.c.h.b16 %v2529
    %v2620 = vunpack.c.l.b16 %v2530
    %v2621 = vunpack.c.l.b16 %v2531
    %v2622 = vunpack.c.h.b16 %v2531
    %v2623 = vunpack.c.l.b16 %v2532
    %v2624 = vunpack.c.l.b16 %v2533
    %v2625 = vunpack.c.h.b16 %v2533
    %v2626 = vunpack.c.l.b16 %v2534
    %v2627 = vunpack.c.l.b16 %v2535
    %v2628 = vunpack.c.h.b16 %v2535
    %v2629 = vunpack.c.l.b16 %v2536
    %v2630 = vunpack.c.l.b16 %v2537
    %v2631 = vunpack.c.h.b16 %v2537
    %v2632 = vunpack.c.l.b16 %v2538
    %v2633 = vunpack.c.l.b16 %v2539
    %v2634 = vunpack.c.h.b16 %v2539
    %v2635 = vunpack.c.l.b16 %v2540
    %v2636 = vunpack.c.l.b16 %v2541
    %v2637 = vunpack.c.h.b16 %v2541
    %v2638 = vunpack.c.l.b16 %v2542
    %v2639 = vunpack.c.l.b16 %v2543
    %v2640 = vunpack.c.h.b16 %v2543
    %v2641 = vunpack.c.l.b16 %v2544
    %v2642 = vunpack.c.l.b16 %v2545
    %v2643 = vunpack.c.h.b16 %v2545
    %v2644 = vunpack.c.l.b16 %v2546
    %v2645 = vpack.c.b16 %v2600, %v2597
    %v2646 = vpack.c.b16 %v2601, %v2598
    %v2647 = vpack.c.b16 %v2602, %v2599
    %v2648 = vpack.c.b16 %v2606, %v2603
    %v2649 = vpack.c.b16 %v2607, %v2604
    %v2650 = vpack.c.b16 %v2608, %v2605
    %v2651 = vpack.c.b16 %v2612, %v2609
    %v2652 = vpack.c.b16 %v2613, %v2610
    %v2653 = vpack.c.b16 %v2614, %v2611
    %v2654 = vpack.c.b16 %v2618, %v2615
    %v2655 = vpack.c.b16 %v2619, %v2616
    %v2656 = vpack.c.b16 %v2620, %v2617
    %v2657 = vpack.c.b16 %v2624, %v2621
    %v2658 = vpack.c.b16 %v2625, %v2622
    %v2659 = vpack.c.b16 %v2626, %v2623
    %v2660 = vpack.c.b16 %v2630, %v2627
    %v2661 = vpack.c.b16 %v2631, %v2628
    %v2662 = vpack.c.b16 %v2632, %v2629
    %v2663 = vpack.c.b16 %v2636, %v2633
    %v2664 = vpack.c.b16 %v2637, %v2634
    %v2665 = vpack.c.b16 %v2638, %v2635
    %v2666 = vpack.c.b16 %v2642, %v2639
    %v2667 = vpack.c.b16 %v2643, %v2640
    %v2668 = vpack.c.b16 %v2644, %v2641
    %2693 = vmatprep.subr.bf16.mxu0 %v2646
    %2694 = vmatpush1.bf16.msra.mxu0 %v2645
    %2695 = vmatprep.subr.bf16.mxu0 %v2649
    %2696 = vmatpush1.bf16.msra.mxu0 %v2648
    %2697 = vmatprep.subr.bf16.mxu0 %v2652
    %2698 = vmatpush1.bf16.msra.mxu0 %v2651
    %2699 = vmatprep.subr.bf16.mxu0 %v2655
    %2700 = vmatpush1.bf16.msra.mxu0 %v2654
    %2701 = vmatprep.subr.bf16.mxu0 %v2658
    %2702 = vmatpush1.bf16.msra.mxu0 %v2657
    %2703 = vmatprep.subr.bf16.mxu0 %v2661
    %2704 = vmatpush1.bf16.msra.mxu0 %v2660
    %2705 = vmatprep.subr.bf16.mxu0 %v2664
    %2706 = vmatpush1.bf16.msra.mxu0 %v2663
    %2707 = vmatprep.subr.bf16.mxu0 %v2667
    %2708 = vmatpush1.bf16.msra.mxu0 %v2666
    %2709 = vmatprep.subr.bf16.mxu0 0
    %2710 = vmatpush1.bf16.msra.mxu0 0
    %2711 = vmatprep.subr.bf16.mxu0 0
    %2712 = vmatpush1.bf16.msra.mxu0 0
    %2713 = vmatprep.subr.bf16.mxu0 0
    %2714 = vmatpush1.bf16.msra.mxu0 0
    %2715 = vmatprep.subr.bf16.mxu0 0
    %2716 = vmatpush1.bf16.msra.mxu0 0
    %2717 = vmatprep.subr.bf16.mxu0 0
    %2718 = vmatpush1.bf16.msra.mxu0 0
    %2719 = vmatprep.subr.bf16.mxu0 0
    %2720 = vmatpush1.bf16.msra.mxu0 0
    %2721 = vmatprep.subr.bf16.mxu0 0
    %2722 = vmatpush1.bf16.msra.mxu0 0
    %2723 = vmatprep.subr.bf16.mxu0 0
    %2724 = vmatpush1.bf16.msra.mxu0 0
    %2725 = vmatprep.mubr.bf16.mxu0 0
    %2726 = vmatmul.mubr.bf16.gmra.mrb[0].mxu0 %v2513
    %v2727 = vpop.f32.mrb[0].mxu0
    %v2728 = vadd.f32 %v2553, %v2727
    %v2729 = vpop.f32.mrb[0].mxu0
    %v2730 = vadd.f32 %v2557, %v2729
    %v2731 = vpop.f32.mrb[0].mxu0
    %v2732 = vadd.f32 %v2553, %v2731
    %v2733 = vpop.f32.mrb[0].mxu0
    %v2734 = vadd.f32 %v2557, %v2733
    %2735 = vdwg.mxu0
    %2736 = vmatprep.subr.bf16.mxu0 0
    %2737 = vmatpush1.bf16.msra.mxu0 %v2647
    %2738 = vmatprep.subr.bf16.mxu0 0
    %2739 = vmatpush1.bf16.msra.mxu0 %v2650
    %2740 = vmatprep.subr.bf16.mxu0 0
    %2741 = vmatpush1.bf16.msra.mxu0 %v2653
    %2742 = vmatprep.subr.bf16.mxu0 0
    %2743 = vmatpush1.bf16.msra.mxu0 %v2656
    %2744 = vmatprep.subr.bf16.mxu0 0
    %2745 = vmatpush1.bf16.msra.mxu0 %v2659
    %2746 = vmatprep.subr.bf16.mxu0 0
    %2747 = vmatpush1.bf16.msra.mxu0 %v2662
    %2748 = vmatprep.subr.bf16.mxu0 0
    %2749 = vmatpush1.bf16.msra.mxu0 %v2665
    %2750 = vmatprep.subr.bf16.mxu0 0
    %2751 = vmatpush1.bf16.msra.mxu0 %v2668
    %2752 = vmatprep.subr.bf16.mxu0 0
    %2753 = vmatpush1.bf16.msra.mxu0 0
    %2754 = vmatprep.subr.bf16.mxu0 0
    %2755 = vmatpush1.bf16.msra.mxu0 0
    %2756 = vmatprep.subr.bf16.mxu0 0
    %2757 = vmatpush1.bf16.msra.mxu0 0
    %2758 = vmatprep.subr.bf16.mxu0 0
    %2759 = vmatpush1.bf16.msra.mxu0 0
    %2760 = vmatprep.subr.bf16.mxu0 0
    %2761 = vmatpush1.bf16.msra.mxu0 0
    %2762 = vmatprep.subr.bf16.mxu0 0
    %2763 = vmatpush1.bf16.msra.mxu0 0
    %2764 = vmatprep.subr.bf16.mxu0 0
    %2765 = vmatpush1.bf16.msra.mxu0 0
    %2766 = vmatprep.subr.bf16.mxu0 0
    %2767 = vmatpush1.bf16.msra.mxu0 0
    %2768 = vmatprep.mubr.bf16.mxu0 0
    %2769 = vmatmul.mubr.bf16.gmra.mrb[0].mxu0 %v2513
    %v2770 = vpop.f32.mrb[0].mxu0
    %v2771 = vadd.f32 %v2561, %v2770
    %v2772 = vpop.f32.mrb[0].mxu0
    %v2773 = vpop.f32.mrb[0].mxu0
    %v2774 = vadd.f32 %v2561, %v2773
    %v2775 = vpop.f32.mrb[0].mxu0
    %2776 = vdwg.mxu0
    %v2777 = vpack.c.bf16 %v2732, %v2728
    %v2778 = vpack.c.bf16 %v2734, %v2730
    %v2779 = vpack.c.bf16 %v2774, %v2771
    %2780 = vmatprep.subr.bf16.mxu0 0
    %2781 = vmatpush1.bf16.xpose.msra.mxu0 %v2778
    %2782 = vmatprep.subr.bf16.mxu0 0
    %2783 = vmatpush1.bf16.xpose.msra.mxu0 0
    %2784 = vmatprep.subr.bf16.mxu0 0
    %2785 = vmatpush1.bf16.xpose.msra.mxu0 0
    %2786 = vmatprep.subr.bf16.mxu0 0
    %2787 = vmatpush1.bf16.xpose.msra.mxu0 0
    %2788 = vmatprep.subr.bf16.mxu0 0
    %2789 = vmatpush1.bf16.xpose.msra.mxu0 0
    %2790 = vmatprep.subr.bf16.mxu0 0
    %2791 = vmatpush1.bf16.xpose.msra.mxu0 0
    %2792 = vmatprep.subr.bf16.mxu0 0
    %2793 = vmatpush1.bf16.xpose.msra.mxu0 0
    %2794 = vmatprep.subr.bf16.mxu0 0
    %2795 = vmatpush1.bf16.xpose.msra.mxu0 0
    %2796 = vmatprep.subr.bf16.mxu0 0
    %2797 = vmatpush1.bf16.xpose.msra.mxu0 0
    %2798 = vmatprep.subr.bf16.mxu0 0
    %2799 = vmatpush1.bf16.xpose.msra.mxu0 0
    %2800 = vmatprep.subr.bf16.mxu0 0
    %2801 = vmatpush1.bf16.xpose.msra.mxu0 0
    %2802 = vmatprep.subr.bf16.mxu0 0
    %2803 = vmatpush1.bf16.xpose.msra.mxu0 0
    %2804 = vmatprep.subr.bf16.mxu0 0
    %2805 = vmatpush1.bf16.xpose.msra.mxu0 0
    %2806 = vmatprep.subr.bf16.mxu0 0
    %2807 = vmatpush1.bf16.xpose.msra.mxu0 0
    %2808 = vmatprep.subr.bf16.mxu0 0
    %2809 = vmatpush1.bf16.xpose.msra.mxu0 0
    %2810 = vmatprep.subr.bf16.mxu0 0
    %2811 = vmatpush1.bf16.xpose.msra.mxu0 0
    %2812 = vmatprep.mubr.bf16.mxu0 0
    %2813 = vmatmul.mubr.bf16.gmra.mrb[0].mxu0 %v2777
    %v2814 = vpop.f32.mrb[0].mxu0
    %v2815 = vadd.f32 %v161, %v2814
    %v2816 = vpop.f32.mrb[0].mxu0
    %v2817 = vpop.f32.mrb[0].mxu0
    %v2818 = vadd.f32 %v162, %v2817
    %v2819 = vpop.f32.mrb[0].mxu0
    %2820 = vdwg.mxu0
    %v2821 = vsel %vm506, %v2815, -inf
    %2822 = vmax.xlane.f32.xlu0 %v2821
    %v2823 = vpop.xlane.xlu0 %2822
    %v2824 = vsel %vm506, %v2818, -inf
    %2825 = vmax.xlane.f32.xlu0 %v2824
    %v2826 = vpop.xlane.xlu0 %2825
    %v2827 = vsub.f32 %v2815, %v2823
    %v2828 = vsub.f32 %v2818, %v2826
    %v2829 = vmul.f32 %v2827, 1.442695
    %v2830 = vpow.pop %v2829
    %v2831 = vmul.f32 %v2828, 1.442695
    %v2832 = vpow.pop %v2831
    %v2833 = vsel %vm506, %v2830, 0.0
    %2834 = vadd.xlane.f32.xlu0 %v2833
    %v2835 = vpop.xlane.xlu0 %2834
    %v2836 = vsel %vm506, %v2832, 0.0
    %2837 = vadd.xlane.f32.xlu0 %v2836
    %v2838 = vpop.xlane.xlu0 %2837
    %v2839 = vrcp.pop %v2835
    %v2840 = vrcp.pop %v2838
    %v2841 = vmul.f32 %v2830, %v2839
    %v2842 = vmul.f32 %v2832, %v2840
    %v2843 = vpack.c.bf16 %v2842, %v2841
    %v2845 = vsel %vm506, %v2843, 0
    %2847 = vmatprep.subr.bf16.mxu0 0
    %2848 = vmatpush1.bf16.msra.mxu0 %v2779
    %2849 = vmatprep.subr.bf16.mxu0 0
    %2850 = vmatpush1.bf16.msra.mxu0 0
    %2851 = vmatprep.subr.bf16.mxu0 0
    %2852 = vmatpush1.bf16.msra.mxu0 0
    %2853 = vmatprep.subr.bf16.mxu0 0
    %2854 = vmatpush1.bf16.msra.mxu0 0
    %2855 = vmatprep.subr.bf16.mxu0 0
    %2856 = vmatpush1.bf16.msra.mxu0 0
    %2857 = vmatprep.subr.bf16.mxu0 0
    %2858 = vmatpush1.bf16.msra.mxu0 0
    %2859 = vmatprep.subr.bf16.mxu0 0
    %2860 = vmatpush1.bf16.msra.mxu0 0
    %2861 = vmatprep.subr.bf16.mxu0 0
    %2862 = vmatpush1.bf16.msra.mxu0 0
    %2863 = vmatprep.subr.bf16.mxu0 0
    %2864 = vmatpush1.bf16.msra.mxu0 0
    %2865 = vmatprep.subr.bf16.mxu0 0
    %2866 = vmatpush1.bf16.msra.mxu0 0
    %2867 = vmatprep.subr.bf16.mxu0 0
    %2868 = vmatpush1.bf16.msra.mxu0 0
    %2869 = vmatprep.subr.bf16.mxu0 0
    %2870 = vmatpush1.bf16.msra.mxu0 0
    %2871 = vmatprep.subr.bf16.mxu0 0
    %2872 = vmatpush1.bf16.msra.mxu0 0
    %2873 = vmatprep.subr.bf16.mxu0 0
    %2874 = vmatpush1.bf16.msra.mxu0 0
    %2875 = vmatprep.subr.bf16.mxu0 0
    %2876 = vmatpush1.bf16.msra.mxu0 0
    %2877 = vmatprep.subr.bf16.mxu0 0
    %2878 = vmatpush1.bf16.msra.mxu0 0
    %2879 = vmatprep.mubr.bf16.mxu0 0
    %2880 = vmatmul.mubr.bf16.gmra.mrb[0].mxu0 %v2845
    %v2881 = vpop.f32.mrb[0].mxu0
    %v2882 = vadd.f32 0.0, %v2881
    %v2883 = vpop.f32.mrb[0].mxu0
    %v2884 = vpop.f32.mrb[0].mxu0
    %v2885 = vadd.f32 0.0, %v2884
    %v2886 = vpop.f32.mrb[0].mxu0
    %2887 = vdwg.mxu0
    %v2888 = vpack.c.bf16 %v2885, %v2882
    %s2889 = scalar_lea.vmem %s6, 192
    %v2890 = vld [vmem:[%s2889] sm:$0xf]
    %v2891 = vld [vmem:[%s2889 + $0x4] sm:$0xf]
    %v2892 = vld [vmem:[%s2889 + $0x8] sm:$0xf]
    %v2893 = vld [vmem:[%s2889 + $0xc] sm:$0xf]
    %v2894 = vld [vmem:[%s2889 + $0x10] sm:$0xf]
    %v2895 = vld [vmem:[%s2889 + $0x14] sm:$0xf]
    %v2896 = vld [vmem:[%s2889 + $0x18] sm:$0xf]
    %v2897 = vld [vmem:[%s2889 + $0x1c] sm:$0xf]
    %v2898 = vld [vmem:[%s2889 + $0x20] sm:$0xf]
    %v2899 = vld [vmem:[%s2889 + $0x24] sm:$0xf]
    %v2900 = vld [vmem:[%s2889 + $0x28] sm:$0xf]
    %v2901 = vld [vmem:[%s2889 + $0x2c] sm:$0xf]
    %v2902 = vld [vmem:[%s2889 + $0x30] sm:$0xf]
    %v2903 = vld [vmem:[%s2889 + $0x34] sm:$0xf]
    %v2904 = vld [vmem:[%s2889 + $0x38] sm:$0xf]
    %v2905 = vld [vmem:[%s2889 + $0x3c] sm:$0xf]
    %v2922 = vunpack.c.l.b16 %v2890
    %v2923 = vunpack.c.l.b16 %v2891
    %v2924 = vunpack.c.l.b16 %v2892
    %v2925 = vunpack.c.l.b16 %v2893
    %v2926 = vunpack.c.l.b16 %v2894
    %v2927 = vunpack.c.l.b16 %v2895
    %v2928 = vunpack.c.l.b16 %v2896
    %v2929 = vunpack.c.l.b16 %v2897
    %v2930 = vunpack.c.l.b16 %v2898
    %v2931 = vunpack.c.l.b16 %v2899
    %v2932 = vunpack.c.l.b16 %v2900
    %v2933 = vunpack.c.l.b16 %v2901
    %v2934 = vunpack.c.l.b16 %v2902
    %v2935 = vunpack.c.l.b16 %v2903
    %v2936 = vunpack.c.l.b16 %v2904
    %v2937 = vunpack.c.l.b16 %v2905
    %v2938 = vpack.c.b16 %v2923, %v2922
    %v2939 = vpack.c.b16 %v2925, %v2924
    %v2940 = vpack.c.b16 %v2927, %v2926
    %v2941 = vpack.c.b16 %v2929, %v2928
    %v2942 = vpack.c.b16 %v2931, %v2930
    %v2943 = vpack.c.b16 %v2933, %v2932
    %v2944 = vpack.c.b16 %v2935, %v2934
    %v2945 = vpack.c.b16 %v2937, %v2936
    %2954 = vmatprep.subr.bf16.mxu0 0
    %2955 = vmatpush1.bf16.msra.mxu0 %v2938
    %2956 = vmatprep.subr.bf16.mxu0 0
    %2957 = vmatpush1.bf16.msra.mxu0 %v2939
    %2958 = vmatprep.subr.bf16.mxu0 0
    %2959 = vmatpush1.bf16.msra.mxu0 %v2940
    %2960 = vmatprep.subr.bf16.mxu0 0
    %2961 = vmatpush1.bf16.msra.mxu0 %v2941
    %2962 = vmatprep.subr.bf16.mxu0 0
    %2963 = vmatpush1.bf16.msra.mxu0 %v2942
    %2964 = vmatprep.subr.bf16.mxu0 0
    %2965 = vmatpush1.bf16.msra.mxu0 %v2943
    %2966 = vmatprep.subr.bf16.mxu0 0
    %2967 = vmatpush1.bf16.msra.mxu0 %v2944
    %2968 = vmatprep.subr.bf16.mxu0 0
    %2969 = vmatpush1.bf16.msra.mxu0 %v2945
    %2970 = vmatprep.subr.bf16.mxu0 0
    %2971 = vmatpush1.bf16.msra.mxu0 0
    %2972 = vmatprep.subr.bf16.mxu0 0
    %2973 = vmatpush1.bf16.msra.mxu0 0
    %2974 = vmatprep.subr.bf16.mxu0 0
    %2975 = vmatpush1.bf16.msra.mxu0 0
    %2976 = vmatprep.subr.bf16.mxu0 0
    %2977 = vmatpush1.bf16.msra.mxu0 0
    %2978 = vmatprep.subr.bf16.mxu0 0
    %2979 = vmatpush1.bf16.msra.mxu0 0
    %2980 = vmatprep.subr.bf16.mxu0 0
    %2981 = vmatpush1.bf16.msra.mxu0 0
    %2982 = vmatprep.subr.bf16.mxu0 0
    %2983 = vmatpush1.bf16.msra.mxu0 0
    %2984 = vmatprep.subr.bf16.mxu0 0
    %2985 = vmatpush1.bf16.msra.mxu0 0
    %2986 = vmatprep.mubr.bf16.mxu0 0
    %2987 = vmatmul.mubr.bf16.gmra.mrb[0].mxu0 %v2888
    %v2988 = vpop.f32.mrb[0].mxu0
    %v2989 = vadd.f32 0.0, %v2988
    %v2990 = vpop.f32.mrb[0].mxu0
    %v2991 = vpop.f32.mrb[0].mxu0
    %v2992 = vadd.f32 0.0, %v2991
    %v2993 = vpop.f32.mrb[0].mxu0
    %2994 = vdwg.mxu0
    %v2995 = vadd.f32 %v2475, %v2989
    %v2996 = vadd.f32 %v2476, %v2992
    %s2997 = scalar_lea.vmem %s7, 3
    %v2998 = vld [vmem:[%s2997] sm:$0x1]
    %v3000 = vlaneseq
    %v3001 = vshrl.u32 %v3000, 7
    %v3002 = vsub.s32 0, %v3001
    %v3003 = vrot.slane %v2998, %v3002
    %v3005 = vadd.f32 %v2995, %v3003
    %v3006 = vadd.f32 %v2996, %v3003
    %3007 = vadd.xlane.f32.xlu0 %v3005
    %v3008 = vpop.xlane.xlu0 %3007
    %3009 = vadd.xlane.f32.xlu0 %v3006
    %v3010 = vpop.xlane.xlu0 %3009
    %v3011 = vmul.f32 %v3008, %v167
    %v3012 = vmul.f32 %v3010, %v167
    %v3013 = vsub.f32 %v3005, %v3011
    %v3014 = vsub.f32 %v3006, %v3012
    %v3015 = vmul.f32 %v3013, %v3013
    %v3016 = vmul.f32 %v3014, %v3014
    %3017 = vadd.xlane.f32.xlu0 %v3015
    %v3018 = vpop.xlane.xlu0 %3017
    %3019 = vadd.xlane.f32.xlu0 %v3016
    %v3020 = vpop.xlane.xlu0 %3019
    %v3021 = vmul.f32 %v3018, 0.007874016
    %v3022 = vmul.f32 %v3020, 0.007874016
    %v3023 = vrsqrt.pop %v3021
    %v3024 = vmul.f32 %v3021, %v3023
    %vm3025 = vcmp.eq.f32.partialorder %v3021, inf
    %v3026 = vsel %vm3025, %v3021, %v3024
    %vm3027 = vcmp.eq.f32.partialorder %v3021, 0.0
    %v3028 = vand.u32 %v3021, 2147483648
    %v3029 = vsel %vm3027, %v3028, %v3026
    %v3030 = vrsqrt.pop %v3022
    %v3031 = vmul.f32 %v3022, %v3030
    %vm3032 = vcmp.eq.f32.partialorder %v3022, inf
    %v3033 = vsel %vm3032, %v3022, %v3031
    %vm3034 = vcmp.eq.f32.partialorder %v3022, 0.0
    %v3035 = vand.u32 %v3022, 2147483648
    %v3036 = vsel %vm3034, %v3035, %v3033
    %v3037 = vadd.f32 %v3029, 1e-06
    %v3038 = vadd.f32 %v3036, 1e-06
    %v3039 = vrcp.pop %v3037
    %v3040 = vmul.f32 %v3013, %v3039
    %v3041 = vrcp.pop %v3038
    %v3042 = vmul.f32 %v3014, %v3041
    %v3043 = vpack.c.bf16 %v3042, %v3040
    %s3044 = scalar_lea.vmem %s8, 192
    %v3045 = vld [vmem:[%s3044] sm:$0xf]
    %v3046 = vld [vmem:[%s3044 + $0x4] sm:$0xf]
    %v3047 = vld [vmem:[%s3044 + $0x8] sm:$0xf]
    %v3048 = vld [vmem:[%s3044 + $0xc] sm:$0xf]
    %v3049 = vld [vmem:[%s3044 + $0x10] sm:$0xf]
    %v3050 = vld [vmem:[%s3044 + $0x14] sm:$0xf]
    %v3051 = vld [vmem:[%s3044 + $0x18] sm:$0xf]
    %v3052 = vld [vmem:[%s3044 + $0x1c] sm:$0xf]
    %v3053 = vld [vmem:[%s3044 + $0x20] sm:$0xf]
    %v3054 = vld [vmem:[%s3044 + $0x24] sm:$0xf]
    %v3055 = vld [vmem:[%s3044 + $0x28] sm:$0xf]
    %v3056 = vld [vmem:[%s3044 + $0x2c] sm:$0xf]
    %v3057 = vld [vmem:[%s3044 + $0x30] sm:$0xf]
    %v3058 = vld [vmem:[%s3044 + $0x34] sm:$0xf]
    %v3059 = vld [vmem:[%s3044 + $0x38] sm:$0xf]
    %v3060 = vld [vmem:[%s3044 + $0x3c] sm:$0xf]
    %s3061 = scalar_lea.vmem %s9, 3
    %v3062 = vld [vmem:[%s3061] sm:$0x1]
    %v3064 = vlaneseq
    %v3065 = vshrl.u32 %v3064, 7
    %v3066 = vsub.s32 0, %v3065
    %v3067 = vrot.slane %v3062, %v3066
    %v3085 = vunpack.c.l.b16 %v3045
    %v3086 = vunpack.c.l.b16 %v3046
    %v3087 = vunpack.c.l.b16 %v3047
    %v3088 = vunpack.c.l.b16 %v3048
    %v3089 = vunpack.c.l.b16 %v3049
    %v3090 = vunpack.c.l.b16 %v3050
    %v3091 = vunpack.c.l.b16 %v3051
    %v3092 = vunpack.c.l.b16 %v3052
    %v3093 = vunpack.c.l.b16 %v3053
    %v3094 = vunpack.c.l.b16 %v3054
    %v3095 = vunpack.c.l.b16 %v3055
    %v3096 = vunpack.c.l.b16 %v3056
    %v3097 = vunpack.c.l.b16 %v3057
    %v3098 = vunpack.c.l.b16 %v3058
    %v3099 = vunpack.c.l.b16 %v3059
    %v3100 = vunpack.c.l.b16 %v3060
    %v3101 = vpack.c.b16 %v3086, %v3085
    %v3102 = vpack.c.b16 %v3088, %v3087
    %v3103 = vpack.c.b16 %v3090, %v3089
    %v3104 = vpack.c.b16 %v3092, %v3091
    %v3105 = vpack.c.b16 %v3094, %v3093
    %v3106 = vpack.c.b16 %v3096, %v3095
    %v3107 = vpack.c.b16 %v3098, %v3097
    %v3108 = vpack.c.b16 %v3100, %v3099
    %3117 = vmatprep.subr.bf16.mxu0 0
    %3118 = vmatpush1.bf16.msra.mxu0 %v3101
    %3119 = vmatprep.subr.bf16.mxu0 0
    %3120 = vmatpush1.bf16.msra.mxu0 %v3102
    %3121 = vmatprep.subr.bf16.mxu0 0
    %3122 = vmatpush1.bf16.msra.mxu0 %v3103
    %3123 = vmatprep.subr.bf16.mxu0 0
    %3124 = vmatpush1.bf16.msra.mxu0 %v3104
    %3125 = vmatprep.subr.bf16.mxu0 0
    %3126 = vmatpush1.bf16.msra.mxu0 %v3105
    %3127 = vmatprep.subr.bf16.mxu0 0
    %3128 = vmatpush1.bf16.msra.mxu0 %v3106
    %3129 = vmatprep.subr.bf16.mxu0 0
    %3130 = vmatpush1.bf16.msra.mxu0 %v3107
    %3131 = vmatprep.subr.bf16.mxu0 0
    %3132 = vmatpush1.bf16.msra.mxu0 %v3108
    %3133 = vmatprep.subr.bf16.mxu0 0
    %3134 = vmatpush1.bf16.msra.mxu0 0
    %3135 = vmatprep.subr.bf16.mxu0 0
    %3136 = vmatpush1.bf16.msra.mxu0 0
    %3137 = vmatprep.subr.bf16.mxu0 0
    %3138 = vmatpush1.bf16.msra.mxu0 0
    %3139 = vmatprep.subr.bf16.mxu0 0
    %3140 = vmatpush1.bf16.msra.mxu0 0
    %3141 = vmatprep.subr.bf16.mxu0 0
    %3142 = vmatpush1.bf16.msra.mxu0 0
    %3143 = vmatprep.subr.bf16.mxu0 0
    %3144 = vmatpush1.bf16.msra.mxu0 0
    %3145 = vmatprep.subr.bf16.mxu0 0
    %3146 = vmatpush1.bf16.msra.mxu0 0
    %3147 = vmatprep.subr.bf16.mxu0 0
    %3148 = vmatpush1.bf16.msra.mxu0 0
    %3149 = vmatprep.mubr.bf16.mxu0 0
    %3150 = vmatmul.mubr.bf16.gmra.mrb[0].mxu0 %v3043
    %v3151 = vpop.f32.mrb[0].mxu0
    %v3152 = vadd.f32 %v3067, %v3151
    %v3153 = vpop.f32.mrb[0].mxu0
    %v3154 = vpop.f32.mrb[0].mxu0
    %v3155 = vadd.f32 %v3067, %v3154
    %v3156 = vpop.f32.mrb[0].mxu0
    %3157 = vdwg.mxu0
    %v3158 = vmax.f32 %v3152, 0.0
    %v3159 = vmax.f32 %v3155, 0.0
    %v3160 = vpack.c.bf16 %v3159, %v3158
    %s3161 = scalar_lea.vmem %s10, 96
    %v3162 = vld [vmem:[%s3161] sm:$0xf]
    %v3163 = vld [vmem:[%s3161 + $0x4] sm:$0xf]
    %v3164 = vld [vmem:[%s3161 + $0x8] sm:$0xf]
    %v3165 = vld [vmem:[%s3161 + $0xc] sm:$0xf]
    %v3166 = vld [vmem:[%s3161 + $0x10] sm:$0xf]
    %v3167 = vld [vmem:[%s3161 + $0x14] sm:$0xf]
    %v3168 = vld [vmem:[%s3161 + $0x18] sm:$0xf]
    %v3169 = vld [vmem:[%s3161 + $0x1c] sm:$0xf]
    %v3178 = vunpack.c.l.b16 %v3162
    %v3179 = vunpack.c.l.b16 %v3163
    %v3180 = vunpack.c.l.b16 %v3164
    %v3181 = vunpack.c.l.b16 %v3165
    %v3182 = vunpack.c.l.b16 %v3166
    %v3183 = vunpack.c.l.b16 %v3167
    %v3184 = vunpack.c.l.b16 %v3168
    %v3185 = vunpack.c.l.b16 %v3169
    %v3186 = vpack.c.b16 %v3179, %v3178
    %v3187 = vpack.c.b16 %v3181, %v3180
    %v3188 = vpack.c.b16 %v3183, %v3182
    %v3189 = vpack.c.b16 %v3185, %v3184
    %v3195 = vsel %vm875, %v3160, 0
    %3197 = vmatprep.subr.bf16.mxu0 0
    %3198 = vmatpush1.bf16.msra.mxu0 %v3186
    %3199 = vmatprep.subr.bf16.mxu0 0
    %3200 = vmatpush1.bf16.msra.mxu0 %v3187
    %3201 = vmatprep.subr.bf16.mxu0 0
    %3202 = vmatpush1.bf16.msra.mxu0 %v3188
    %3203 = vmatprep.subr.bf16.mxu0 0
    %3204 = vmatpush1.bf16.msra.mxu0 %v3189
    %3205 = vmatprep.subr.bf16.mxu0 0
    %3206 = vmatpush1.bf16.msra.mxu0 0
    %3207 = vmatprep.subr.bf16.mxu0 0
    %3208 = vmatpush1.bf16.msra.mxu0 0
    %3209 = vmatprep.subr.bf16.mxu0 0
    %3210 = vmatpush1.bf16.msra.mxu0 0
    %3211 = vmatprep.subr.bf16.mxu0 0
    %3212 = vmatpush1.bf16.msra.mxu0 0
    %3213 = vmatprep.subr.bf16.mxu0 0
    %3214 = vmatpush1.bf16.msra.mxu0 0
    %3215 = vmatprep.subr.bf16.mxu0 0
    %3216 = vmatpush1.bf16.msra.mxu0 0
    %3217 = vmatprep.subr.bf16.mxu0 0
    %3218 = vmatpush1.bf16.msra.mxu0 0
    %3219 = vmatprep.subr.bf16.mxu0 0
    %3220 = vmatpush1.bf16.msra.mxu0 0
    %3221 = vmatprep.subr.bf16.mxu0 0
    %3222 = vmatpush1.bf16.msra.mxu0 0
    %3223 = vmatprep.subr.bf16.mxu0 0
    %3224 = vmatpush1.bf16.msra.mxu0 0
    %3225 = vmatprep.subr.bf16.mxu0 0
    %3226 = vmatpush1.bf16.msra.mxu0 0
    %3227 = vmatprep.subr.bf16.mxu0 0
    %3228 = vmatpush1.bf16.msra.mxu0 0
    %3229 = vmatprep.mubr.bf16.mxu0 0
    %3230 = vmatmul.mubr.bf16.gmra.mrb[0].mxu0 %v3195
    %v3231 = vpop.f32.mrb[0].mxu0
    %v3232 = vadd.f32 0.0, %v3231
    %v3233 = vpop.f32.mrb[0].mxu0
    %v3234 = vpop.f32.mrb[0].mxu0
    %v3235 = vadd.f32 0.0, %v3234
    %v3236 = vpop.f32.mrb[0].mxu0
    %3237 = vdwg.mxu0
    %v3238 = vadd.f32 %v3005, %v3232
    %v3239 = vadd.f32 %v3006, %v3235
    %s3240 = scalar_lea.vmem %s11, 3
    %v3241 = vld [vmem:[%s3240] sm:$0x1]
    %v3243 = vlaneseq
    %v3244 = vshrl.u32 %v3243, 7
    %v3245 = vsub.s32 0, %v3244
    %v3246 = vrot.slane %v3241, %v3245
    %v3248 = vadd.f32 %v3238, %v3246
    %v3249 = vadd.f32 %v3239, %v3246
    %3250 = vadd.xlane.f32.xlu0 %v3248
    %v3251 = vpop.xlane.xlu0 %3250
    %3252 = vadd.xlane.f32.xlu0 %v3249
    %v3253 = vpop.xlane.xlu0 %3252
    %v3254 = vmul.f32 %v3251, %v167
    %v3255 = vmul.f32 %v3253, %v167
    %v3256 = vsub.f32 %v3248, %v3254
    %v3257 = vsub.f32 %v3249, %v3255
    %v3258 = vmul.f32 %v3256, %v3256
    %v3259 = vmul.f32 %v3257, %v3257
    %3260 = vadd.xlane.f32.xlu0 %v3258
    %v3261 = vpop.xlane.xlu0 %3260
    %3262 = vadd.xlane.f32.xlu0 %v3259
    %v3263 = vpop.xlane.xlu0 %3262
    %v3264 = vmul.f32 %v3261, 0.007874016
    %v3265 = vmul.f32 %v3263, 0.007874016
    %v3266 = vrsqrt.pop %v3264
    %v3267 = vmul.f32 %v3264, %v3266
    %vm3268 = vcmp.eq.f32.partialorder %v3264, inf
    %v3269 = vsel %vm3268, %v3264, %v3267
    %vm3270 = vcmp.eq.f32.partialorder %v3264, 0.0
    %v3271 = vand.u32 %v3264, 2147483648
    %v3272 = vsel %vm3270, %v3271, %v3269
    %v3273 = vrsqrt.pop %v3265
    %v3274 = vmul.f32 %v3265, %v3273
    %vm3275 = vcmp.eq.f32.partialorder %v3265, inf
    %v3276 = vsel %vm3275, %v3265, %v3274
    %vm3277 = vcmp.eq.f32.partialorder %v3265, 0.0
    %v3278 = vand.u32 %v3265, 2147483648
    %v3279 = vsel %vm3277, %v3278, %v3276
    %v3280 = vadd.f32 %v3272, 1e-06
    %v3281 = vadd.f32 %v3279, 1e-06
    %v3282 = vrcp.pop %v3280
    %v3283 = vmul.f32 %v3256, %v3282
    %v3284 = vrcp.pop %v3281
    %v3285 = vmul.f32 %v3257, %v3284
    %v3286 = vpack.c.bf16 %v3285, %v3283
    %v3287 = vld [vmem:[%s12] sm:$0xf]
    %v3288 = vld [vmem:[%s12 + $0x4] sm:$0xf]
    %v3289 = vld [vmem:[%s12 + $0x8] sm:$0xf]
    %v3290 = vld [vmem:[%s12 + $0xc] sm:$0xf]
    %v3291 = vld [vmem:[%s12 + $0x10] sm:$0xf]
    %v3292 = vld [vmem:[%s12 + $0x14] sm:$0xf]
    %v3293 = vld [vmem:[%s12 + $0x18] sm:$0xf]
    %v3294 = vld [vmem:[%s12 + $0x1c] sm:$0xf]
    %v3295 = vld [vmem:[%s12 + $0x20] sm:$0xf]
    %v3296 = vld [vmem:[%s12 + $0x24] sm:$0xf]
    %v3297 = vld [vmem:[%s12 + $0x28] sm:$0xf]
    %v3298 = vld [vmem:[%s12 + $0x2c] sm:$0xf]
    %v3299 = vld [vmem:[%s12 + $0x30] sm:$0xf]
    %v3300 = vld [vmem:[%s12 + $0x34] sm:$0xf]
    %v3301 = vld [vmem:[%s12 + $0x38] sm:$0xf]
    %v3302 = vld [vmem:[%s12 + $0x3c] sm:$0xf]
    %v3303 = vld [vmem:[%s13] sm:$0x1]
    %v3305 = vlaneseq
    %v3306 = vshrl.u32 %v3305, 7
    %v3307 = vsub.s32 0, %v3306
    %v3308 = vrot.slane %v3303, %v3307
    %v3326 = vunpack.c.l.b16 %v3287
    %v3327 = vunpack.c.l.b16 %v3288
    %v3328 = vunpack.c.l.b16 %v3289
    %v3329 = vunpack.c.l.b16 %v3290
    %v3330 = vunpack.c.l.b16 %v3291
    %v3331 = vunpack.c.l.b16 %v3292
    %v3332 = vunpack.c.l.b16 %v3293
    %v3333 = vunpack.c.l.b16 %v3294
    %v3334 = vunpack.c.l.b16 %v3295
    %v3335 = vunpack.c.l.b16 %v3296
    %v3336 = vunpack.c.l.b16 %v3297
    %v3337 = vunpack.c.l.b16 %v3298
    %v3338 = vunpack.c.l.b16 %v3299
    %v3339 = vunpack.c.l.b16 %v3300
    %v3340 = vunpack.c.l.b16 %v3301
    %v3341 = vunpack.c.l.b16 %v3302
    %v3342 = vpack.c.b16 %v3327, %v3326
    %v3343 = vpack.c.b16 %v3329, %v3328
    %v3344 = vpack.c.b16 %v3331, %v3330
    %v3345 = vpack.c.b16 %v3333, %v3332
    %v3346 = vpack.c.b16 %v3335, %v3334
    %v3347 = vpack.c.b16 %v3337, %v3336
    %v3348 = vpack.c.b16 %v3339, %v3338
    %v3349 = vpack.c.b16 %v3341, %v3340
    %3358 = vmatprep.subr.bf16.mxu0 0
    %3359 = vmatpush1.bf16.msra.mxu0 %v3342
    %3360 = vmatprep.subr.bf16.mxu0 0
    %3361 = vmatpush1.bf16.msra.mxu0 %v3343
    %3362 = vmatprep.subr.bf16.mxu0 0
    %3363 = vmatpush1.bf16.msra.mxu0 %v3344
    %3364 = vmatprep.subr.bf16.mxu0 0
    %3365 = vmatpush1.bf16.msra.mxu0 %v3345
    %3366 = vmatprep.subr.bf16.mxu0 0
    %3367 = vmatpush1.bf16.msra.mxu0 %v3346
    %3368 = vmatprep.subr.bf16.mxu0 0
    %3369 = vmatpush1.bf16.msra.mxu0 %v3347
    %3370 = vmatprep.subr.bf16.mxu0 0
    %3371 = vmatpush1.bf16.msra.mxu0 %v3348
    %3372 = vmatprep.subr.bf16.mxu0 0
    %3373 = vmatpush1.bf16.msra.mxu0 %v3349
    %3374 = vmatprep.subr.bf16.mxu0 0
    %3375 = vmatpush1.bf16.msra.mxu0 0
    %3376 = vmatprep.subr.bf16.mxu0 0
    %3377 = vmatpush1.bf16.msra.mxu0 0
    %3378 = vmatprep.subr.bf16.mxu0 0
    %3379 = vmatpush1.bf16.msra.mxu0 0
    %3380 = vmatprep.subr.bf16.mxu0 0
    %3381 = vmatpush1.bf16.msra.mxu0 0
    %3382 = vmatprep.subr.bf16.mxu0 0
    %3383 = vmatpush1.bf16.msra.mxu0 0
    %3384 = vmatprep.subr.bf16.mxu0 0
    %3385 = vmatpush1.bf16.msra.mxu0 0
    %3386 = vmatprep.subr.bf16.mxu0 0
    %3387 = vmatpush1.bf16.msra.mxu0 0
    %3388 = vmatprep.subr.bf16.mxu0 0
    %3389 = vmatpush1.bf16.msra.mxu0 0
    %3390 = vmatprep.mubr.bf16.mxu0 0
    %3391 = vmatmul.mubr.bf16.gmra.mrb[0].mxu0 %v3286
    %v3392 = vpop.f32.mrb[0].mxu0
    %v3393 = vadd.f32 %v3308, %v3392
    %v3394 = vpop.f32.mrb[0].mxu0
    %v3395 = vpop.f32.mrb[0].mxu0
    %v3396 = vadd.f32 %v3308, %v3395
    %v3397 = vpop.f32.mrb[0].mxu0
    %3398 = vdwg.mxu0
    %v3399 = vmax.f32 %v3393, 0.0
    %v3400 = vmax.f32 %v3396, 0.0
    %v3401 = vpack.c.bf16 %v3400, %v3399
    %v3402 = vld [vmem:[#allocation4] sm:$0xf]
    %v3403 = vld [vmem:[#allocation4 + $0x4] sm:$0xf]
    %v3404 = vld [vmem:[#allocation4 + $0x8] sm:$0xf]
    %v3405 = vld [vmem:[#allocation4 + $0xc] sm:$0xf]
    %v3406 = vld [vmem:[#allocation4 + $0x10] sm:$0xf]
    %v3407 = vld [vmem:[#allocation4 + $0x14] sm:$0xf]
    %v3408 = vld [vmem:[#allocation4 + $0x18] sm:$0xf]
    %v3409 = vld [vmem:[#allocation4 + $0x1c] sm:$0xf]
    %v3410 = vld [vmem:[#allocation4 + $0x20] sm:$0xf]
    %v3411 = vld [vmem:[#allocation4 + $0x24] sm:$0xf]
    %v3412 = vld [vmem:[#allocation4 + $0x28] sm:$0xf]
    %v3413 = vld [vmem:[#allocation4 + $0x2c] sm:$0xf]
    %v3414 = vld [vmem:[#allocation4 + $0x30] sm:$0xf]
    %v3415 = vld [vmem:[#allocation4 + $0x34] sm:$0xf]
    %v3416 = vld [vmem:[#allocation4 + $0x38] sm:$0xf]
    %v3417 = vld [vmem:[#allocation4 + $0x3c] sm:$0xf]
    %v3418 = vld [vmem:[%s15] sm:$0x1]
    %v3420 = vlaneseq
    %v3421 = vshrl.u32 %v3420, 7
    %v3422 = vsub.s32 0, %v3421
    %v3423 = vrot.slane %v3418, %v3422
    %v3441 = vunpack.c.l.b16 %v3402
    %v3442 = vunpack.c.l.b16 %v3403
    %v3443 = vunpack.c.l.b16 %v3404
    %v3444 = vunpack.c.l.b16 %v3405
    %v3445 = vunpack.c.l.b16 %v3406
    %v3446 = vunpack.c.l.b16 %v3407
    %v3447 = vunpack.c.l.b16 %v3408
    %v3448 = vunpack.c.l.b16 %v3409
    %v3449 = vunpack.c.l.b16 %v3410
    %v3450 = vunpack.c.l.b16 %v3411
    %v3451 = vunpack.c.l.b16 %v3412
    %v3452 = vunpack.c.l.b16 %v3413
    %v3453 = vunpack.c.l.b16 %v3414
    %v3454 = vunpack.c.l.b16 %v3415
    %v3455 = vunpack.c.l.b16 %v3416
    %v3456 = vunpack.c.l.b16 %v3417
    %v3457 = vpack.c.b16 %v3442, %v3441
    %v3458 = vpack.c.b16 %v3444, %v3443
    %v3459 = vpack.c.b16 %v3446, %v3445
    %v3460 = vpack.c.b16 %v3448, %v3447
    %v3461 = vpack.c.b16 %v3450, %v3449
    %v3462 = vpack.c.b16 %v3452, %v3451
    %v3463 = vpack.c.b16 %v3454, %v3453
    %v3464 = vpack.c.b16 %v3456, %v3455
    %3473 = vmatprep.subr.bf16.mxu0 0
    %3474 = vmatpush1.bf16.msra.mxu0 %v3457
    %3475 = vmatprep.subr.bf16.mxu0 0
    %3476 = vmatpush1.bf16.msra.mxu0 %v3458
    %3477 = vmatprep.subr.bf16.mxu0 0
    %3478 = vmatpush1.bf16.msra.mxu0 %v3459
    %3479 = vmatprep.subr.bf16.mxu0 0
    %3480 = vmatpush1.bf16.msra.mxu0 %v3460
    %3481 = vmatprep.subr.bf16.mxu0 0
    %3482 = vmatpush1.bf16.msra.mxu0 %v3461
    %3483 = vmatprep.subr.bf16.mxu0 0
    %3484 = vmatpush1.bf16.msra.mxu0 %v3462
    %3485 = vmatprep.subr.bf16.mxu0 0
    %3486 = vmatpush1.bf16.msra.mxu0 %v3463
    %3487 = vmatprep.subr.bf16.mxu0 0
    %3488 = vmatpush1.bf16.msra.mxu0 %v3464
    %3489 = vmatprep.subr.bf16.mxu0 0
    %3490 = vmatpush1.bf16.msra.mxu0 0
    %3491 = vmatprep.subr.bf16.mxu0 0
    %3492 = vmatpush1.bf16.msra.mxu0 0
    %3493 = vmatprep.subr.bf16.mxu0 0
    %3494 = vmatpush1.bf16.msra.mxu0 0
    %3495 = vmatprep.subr.bf16.mxu0 0
    %3496 = vmatpush1.bf16.msra.mxu0 0
    %3497 = vmatprep.subr.bf16.mxu0 0
    %3498 = vmatpush1.bf16.msra.mxu0 0
    %3499 = vmatprep.subr.bf16.mxu0 0
    %3500 = vmatpush1.bf16.msra.mxu0 0
    %3501 = vmatprep.subr.bf16.mxu0 0
    %3502 = vmatpush1.bf16.msra.mxu0 0
    %3503 = vmatprep.subr.bf16.mxu0 0
    %3504 = vmatpush1.bf16.msra.mxu0 0
    %3505 = vmatprep.mubr.bf16.mxu0 0
    %3506 = vmatmul.mubr.bf16.gmra.mrb[0].mxu0 %v3401
    %v3507 = vpop.f32.mrb[0].mxu0
    %v3508 = vadd.f32 %v3423, %v3507
    %v3509 = vpop.f32.mrb[0].mxu0
    %v3510 = vpop.f32.mrb[0].mxu0
    %v3511 = vadd.f32 %v3423, %v3510
    %v3512 = vpop.f32.mrb[0].mxu0
    %3513 = vdwg.mxu0
    %3514 = vst [vmem:[%s16] sm:$0xff] %v3508
    %3515 = vst [vmem:[%s16 + $0x8] sm:$0xff] %v3511
    // Predicated region
    $region74: #{transformer_seg_forward.1} parent=1 // pred_check
      _
    $region75: #{transformer_seg_forward.1} parent=1 // pred_check_branch
      %3517 = sbr.rel (0) target = $region77
    $region76: #{transformer_seg_forward.1} parent=1 // pred_region
      _
    $region77: #{transformer_seg_forward.1} parent=1 // pred_fallthru
      _
    // Predicated region
    $region78: #{transformer_seg_forward.1} parent=1 // pred_check
      _
    $region79: #{transformer_seg_forward.1} parent=1 // pred_check_branch
      %3519 = sbr.rel (0) target = $region81
    $region80: #{transformer_seg_forward.1} parent=1 // pred_region
      _
    $region81: #{transformer_seg_forward.1} parent=1 // pred_fallthru
      _
    %3520 = vsyncpa [#allocation3], 1
    %3521 = vsyncpa [#allocation5], 1

</llo_original>
